<compile_context>
chip_gen: v6e
topology: v6e:2x2x1
jax: 0.10.0
libtpu: 0.0.40
codegen_flags: <defaults>
</compile_context>

<pallas_src>
import functools
import math

import jax
import jax.numpy as jnp
from jax.experimental import pallas as pl
from jax.experimental.pallas import tpu as pltpu

WINDOW_SIZE = 11
SIGMA = 1.5
PAD = WINDOW_SIZE // 2          # 5
C1 = 0.01 ** 2
C2 = 0.03 ** 2


# ---------------------------------------------------------------------------
# Gaussian window helpers (host-side constants).
# ---------------------------------------------------------------------------
def _gaussian_taps(window_size=WINDOW_SIZE, sigma=SIGMA):
    vals = [math.exp(-((x - window_size // 2) ** 2) / (2.0 * sigma ** 2))
            for x in range(window_size)]
    s = sum(vals)
    return tuple(v / s for v in vals)


def _band_matrix(n_out, n_in, row_offset, taps):
    """T[a, b] = g[(b + row_offset) - a + PAD] inside the 11-tap band, else 0.

    Output row a accumulates input row (b + row_offset) with the Gaussian tap
    for displacement d = (b + row_offset) - a.  Zeros outside the band realise
    the conv2d zero padding.
    """
    g = jnp.asarray(taps, dtype=jnp.float32)
    a = jnp.arange(n_out, dtype=jnp.int32)[:, None]
    b = jnp.arange(n_in, dtype=jnp.int32)[None, :]
    idx = (b + row_offset) - a + PAD
    valid = (idx >= 0) & (idx < WINDOW_SIZE)
    return jnp.where(valid, g[jnp.clip(idx, 0, WINDOW_SIZE - 1)], 0.0)


# ---------------------------------------------------------------------------
# Pallas kernel: accumulates the four scalar statistics of the loss.
# ---------------------------------------------------------------------------
def _loss_stats_kernel(cc_ref, ct_ref, cb_ref,        # color: cur / top / bottom halo
                       gc_ref, gt_ref, gb_ref,        # gt color: cur / top / bottom halo
                       rn_ref, sn_ref, rd_ref,        # normals + dist (cur tile)
                       tband_ref,                     # fused (TH, TH+16) banded Toeplitz
                       out_ref, acc_ref,              # (1,1,8) per-core output + (1,8) acc
                       *, n_ch, width, g_taps, use_bf16):
    i = pl.program_id(1)                       # inner (reduction) grid index
    nin = pl.num_programs(1)
    gb = pl.program_id(0) * nin + i            # global H-tile index
    ngb = pl.num_programs(0) * nin
    f32 = jnp.float32

    @pl.when(i == 0)
    def _init():
        acc_ref[...] = jnp.zeros_like(acc_ref)

    x1 = cc_ref[...].astype(f32)               # (C, TH, W)
    x2 = gc_ref[...].astype(f32)

    # Halo rows outside the image must contribute zero (conv2d zero padding):
    # mask the clamped 8-row neighbour blocks on the first / last H tile.
    m_top = (gb > 0).astype(f32)
    m_bot = (gb < ngb - 1).astype(f32)
    x1t = ct_ref[...].astype(f32) * m_top      # (C, 8, W)
    x2t = gt_ref[...].astype(f32) * m_top
    x1b = cb_ref[...].astype(f32) * m_bot
    x2b = gb_ref[...].astype(f32) * m_bot

    # Stack halos above / below along sublanes: (C, TH+16, W).
    xc1 = jnp.concatenate([x1t, x1, x1b], axis=1)
    xc2 = jnp.concatenate([x2t, x2, x2b], axis=1)

    mm_dtype = jnp.bfloat16 if use_bf16 else f32
    tband = tband_ref[...].astype(mm_dtype)    # (TH, TH+16)

    def blur2d(m):
        # ---- H blur: ONE fused banded matmul per channel on the MXU ----
        bh = jnp.stack(
            [jnp.dot(tband, m[ch].astype(mm_dtype), preferred_element_type=f32)
             for ch in range(n_ch)], axis=0)                       # (C, TH, W)
        # ---- W blur: zero-fill lane shifts + Gaussian tap symmetry ----
        # (slice/concat is XLU work that overlaps the MXU; no masks needed,
        #  the zero fill IS the conv2d zero padding.)
        out = g_taps[PAD] * bh
        for d in range(1, PAD + 1):
            z = jnp.zeros_like(bh[..., :d])
            left = jnp.concatenate([bh[..., d:], z], axis=-1)          # in[w+d]
            right = jnp.concatenate([z, bh[..., :width - d]], axis=-1)  # in[w-d]
            out = out + g_taps[PAD + d] * (left + right)
        return out

    mu1 = blur2d(xc1)
    mu2 = blur2d(xc2)
    e11 = blur2d(xc1 * xc1)
    e22 = blur2d(xc2 * xc2)
    e12 = blur2d(xc1 * xc2)

    mu1_sq = mu1 * mu1
    mu2_sq = mu2 * mu2
    mu1_mu2 = mu1 * mu2
    sigma1_sq = e11 - mu1_sq
    sigma2_sq = e22 - mu2_sq
    sigma12 = e12 - mu1_mu2
    num = (2.0 * mu1_mu2 + C1) * (2.0 * sigma12 + C2)
    den = (mu1_sq + mu2_sq + C1) * (sigma1_sq + sigma2_sq + C2)
    ssim_sum = jnp.sum(num * pl.reciprocal(den, approx=True))  # EUP slot

    l1_sum = jnp.sum(jnp.abs(x1 - x2))
    nrm_sum = jnp.sum(rn_ref[...].astype(f32) * sn_ref[...].astype(f32))
    dist_sum = jnp.sum(rd_ref[...].astype(f32))

    # Pack the four per-tile partial sums into one lane-dense (1, 8) vector.
    lane = jax.lax.broadcasted_iota(jnp.int32, (1, 8), 1)
    partial = (jnp.where(lane == 0, l1_sum, 0.0)
               + jnp.where(lane == 1, ssim_sum, 0.0)
               + jnp.where(lane == 2, nrm_sum, 0.0)
               + jnp.where(lane == 3, dist_sum, 0.0))
    acc_ref[...] += partial

    @pl.when(i == nin - 1)
    def _finalize():
        out_ref[...] = acc_ref[...].reshape(1, 1, 8)


# ---------------------------------------------------------------------------
# Host wrapper: tiling choice, BlockSpecs, pallas_call.
# ---------------------------------------------------------------------------
def _vmem_capacity_bytes():
    try:
        return int(pltpu.get_tpu_info().vmem_capacity_bytes)
    except Exception:
        return 64 << 20            # conservative (v7x per-core)


def _tile_footprint_bytes(th, c_ch, w, n_ch_normal=3, d_ch=1):
    """Rough per-tile VMEM footprint: double-buffered inputs + live intermediates."""
    f = 4
    per_tile_in = ((2 * c_ch * (th + 16) + (2 * n_ch_normal + d_ch) * th) * w
                   + th * (th + 16))
    intermediates = (3 * (th + 16) + 8 * th) * c_ch * w
    return (2 * per_tile_in + intermediates) * f


def _pick_tile_h(h, c_ch, w, cap=256, vmem_budget=None):
    """Largest multiple-of-8 divisor of H whose footprint fits the VMEM budget,
    preferring an even tile count so the megacore 'parallel' axis is balanced."""
    if vmem_budget is None:
        vmem_budget = _vmem_capacity_bytes() // 2
    cands = [d for d in range(8, min(h, cap) + 1, 8) if h % d == 0]
    if not cands:
        cands = [d for d in range(8, h + 1, 8) if h % d == 0] or [h]
    fit = [d for d in cands if _tile_footprint_bytes(d, c_ch, w) <= vmem_budget]
    pool = fit or cands[:1]
    even = [d for d in pool if (h // d) % 2 == 0]
    if even:
        return max(even)
    multi = [d for d in pool if h // d >= 2]
    return max(multi) if multi else max(pool)


@functools.partial(jax.jit, static_argnames=("tile_h", "use_bf16_blur"))
def loss_stats_pallas(color, gcolor, rnormal, snormal, rdist,
                      tile_h=None, use_bf16_blur=False):
    """Returns (l1, ssim_mean, normal_error, dist_mean) as f32 scalars."""
    c_ch, h, w = color.shape
    n_ch_normal = rnormal.shape[0]
    d_ch = rdist.shape[0]
    # TODO(synk): pad H to a multiple of 8 (and mask the padded rows out of the
    # reductions) to support arbitrary image heights.
    assert h % 8 == 0, "H must be a multiple of 8"

    th = tile_h if tile_h is not None else _pick_tile_h(h, c_ch, w)
    assert h % th == 0 and th % 8 == 0
    nblk = h // th
    thb = th // 8              # tile height in 8-row blocks (halo index maps)
    hb = h // 8
    ncore = 2 if (nblk % 2 == 0 and nblk >= 2) else 1   # megacore split (v7x)
    nin = nblk // ncore

    taps = _gaussian_taps()
    # Fused banded Toeplitz: input rows = [8-row top halo ; tile ; 8-row bottom halo].
    t_band = _band_matrix(th, th + 16, -8, taps)

    def cur_spec(ch):
        return pl.BlockSpec((ch, th, w), lambda c, i: (0, c * nin + i, 0))

    def halo_top_spec(ch):
        return pl.BlockSpec(
            (ch, 8, w),
            lambda c, i: (0, jnp.maximum((c * nin + i) * thb - 1, 0), 0))

    def halo_bot_spec(ch):
        return pl.BlockSpec(
            (ch, 8, w),
            lambda c, i: (0, jnp.minimum((c * nin + i + 1) * thb, hb - 1), 0))

    band_spec = pl.BlockSpec((th, th + 16), lambda c, i: (0, 0))

    kernel = functools.partial(
        _loss_stats_kernel, n_ch=c_ch, width=w, g_taps=taps,
        use_bf16=use_bf16_blur)

    # Generation-aware VMEM limit (v7x has 64 MiB physical vs 128 MiB on v5e/v6e).
    fp = _tile_footprint_bytes(th, c_ch, w, n_ch_normal, d_ch)
    vmem_cap = _vmem_capacity_bytes()
    vmem_limit = int(min(max(2 * fp, 32 << 20), max(vmem_cap - (8 << 20), 32 << 20)))

    # Advisory cost estimate for XLA's scheduler.
    flops = int(2 * (th + 16) * th * w * 5 * c_ch * nblk + 60 * c_ch * h * w)
    bytes_acc = int(4 * ((2 * c_ch * (1.0 + 16.0 / th) + 2 * n_ch_normal + d_ch)
                         * h * w) + 4 * th * (th + 16) + 64)
    cost = pl.CostEstimate(flops=flops, transcendentals=int(c_ch * h * w),
                           bytes_accessed=bytes_acc)

    out = pl.pallas_call(
        kernel,
        out_shape=jax.ShapeDtypeStruct((ncore, 1, 8), jnp.float32),
        grid=(ncore, nin),
        in_specs=[
            cur_spec(c_ch), halo_top_spec(c_ch), halo_bot_spec(c_ch),   # color
            cur_spec(c_ch), halo_top_spec(c_ch), halo_bot_spec(c_ch),   # gcolor
            cur_spec(n_ch_normal),                                      # rnormal
            cur_spec(n_ch_normal),                                      # snormal
            cur_spec(d_ch),                                             # rdist
            band_spec,                                                  # T (banded)
        ],
        out_specs=pl.BlockSpec((1, 1, 8), lambda c, i: (c, 0, 0)),
        scratch_shapes=[pltpu.VMEM((1, 8), jnp.float32)],
        compiler_params=pltpu.CompilerParams(
            # Outer axis: independent per-core accumulators (megacore on v7x).
            # Inner axis: H reduction into the resident accumulator.
            dimension_semantics=("parallel", "arbitrary"),
            vmem_limit_bytes=vmem_limit,
        ),
        cost_estimate=cost,
    )(color, color, color, gcolor, gcolor, gcolor,
      rnormal, snormal, rdist, t_band)

    stats = jnp.sum(out[:, 0, :], axis=0)      # combine per-core partial rows
    npix = float(h * w)
    l1 = stats[0] / (c_ch * npix)
    ssim_mean = stats[1] / (c_ch * npix)
    normal_err = 1.0 - stats[2] / npix
    dist_mean = stats[3] / (d_ch * npix)
    return l1, ssim_mean, normal_err, dist_mean


# ---------------------------------------------------------------------------
# Pure-JAX reference (full-image banded separable blur) for a sanity check.
# ---------------------------------------------------------------------------
def _reference_stats(color, gcolor, rnormal, snormal, rdist):
    _, h, w = color.shape
    taps = _gaussian_taps()
    t_h = _band_matrix(h, h, 0, taps)
    t_w = _band_matrix(w, w, 0, taps)

    def blur(x):  # (C, H, W) zero-padded separable 11x11 Gaussian blur
        y = jnp.einsum('ab,cbw->caw', t_h, x.astype(jnp.float32))
        return jnp.einsum('caw,xw->cax', y, t_w)

    i1 = color.astype(jnp.float32)
    i2 = gcolor.astype(jnp.float32)
    mu1, mu2 = blur(i1), blur(i2)
    s11 = blur(i1 * i1) - mu1 * mu1
    s22 = blur(i2 * i2) - mu2 * mu2
    s12 = blur(i1 * i2) - mu1 * mu2
    ssim_map = ((2.0 * mu1 * mu2 + C1) * (2.0 * s12 + C2)) / \
               ((mu1 * mu1 + mu2 * mu2 + C1) * (s11 + s22 + C2))
    l1 = jnp.mean(jnp.abs(i1 - i2))
    ssim_mean = jnp.mean(ssim_map)
    normal_err = jnp.mean(1.0 - jnp.sum(rnormal * snormal, axis=0))
    dist_mean = jnp.mean(rdist)
    return l1, ssim_mean, normal_err, dist_mean


# ---------------------------------------------------------------------------
# Synthetic config + forward glue (mirrors the PyTorch module).
# ---------------------------------------------------------------------------
class _OptimConfig:
    lambda_dssim = 0.2
    lambda_normal = 0.05
    lambda_dist = 1000.0


class _Config:
    optim = _OptimConfig()
    iter = 8000  # > 7000 and > 3000: both regularizers active


def loss_forward(config, _input, _renderout):
    """JAX equivalent of Loss.forward; the heavy math runs in the Pallas kernel."""
    color = _renderout["color"]
    gcolor = _input["colorTensor"]
    rdist = _renderout["rdist"]
    rnormal = _renderout["rnormal"]
    snormal = _renderout["snormal"]

    l1, ssim_mean, normal_err, dist_mean = loss_stats_pallas(
        color, gcolor, rnormal, snormal, rdist)

    ssim_loss = 1.0 - ssim_mean
    lam = config.optim
    loss = (1.0 - lam.lambda_dssim) * l1 + lam.lambda_dssim * ssim_loss

    it = getattr(config, "iter", 0)
    lambda_normal = lam.lambda_normal if it > 7000 else 0.0
    lambda_dist = lam.lambda_dist if it > 3000 else 0.0
    if lambda_normal != 0:
        loss = loss + lambda_normal * normal_err
    if lambda_dist != 0:
        loss = loss + lambda_dist * dist_mean

    return loss, {"l1": l1, "ssim": ssim_loss, "normal": normal_err,
                  "dist": dist_mean}


# ---------------------------------------------------------------------------
# Test harness.
# ---------------------------------------------------------------------------
def _make_inputs(key, c, h, w):
    k1, k2, k3, k4, k5 = jax.random.split(key, 5)
    color = jax.random.uniform(k1, (c, h, w), dtype=jnp.float32)
    gcolor = jax.random.uniform(k2, (c, h, w), dtype=jnp.float32)

    def _unit_normals(k, shape):
        v = jax.random.normal(k, shape, dtype=jnp.float32)
        return v / jnp.linalg.norm(v, axis=0, keepdims=True)

    rnormal = _unit_normals(k3, (3, h, w))
    snormal = _unit_normals(k4, (3, h, w))
    rdist = jax.random.uniform(k5, (1, h, w), dtype=jnp.float32) * 0.01
    return color, gcolor, rnormal, snormal, rdist


def _check(tag, got, ref, atol=5e-3, rtol=5e-3):
    for name, a, b in zip(("l1", "ssim", "normal", "dist"), got, ref):
        a_f, b_f = float(a), float(b)
        if abs(a_f - b_f) > atol + rtol * abs(b_f):
            raise AssertionError(f"[{tag}] {name}: pallas={a_f} ref={b_f}")


if __name__ == "__main__":
    key = jax.random.PRNGKey(0)
    k_a, k_b = jax.random.split(key, 2)

    # Case 1: H=16 -> TH=8, grid (2, 1): exercises both halo seams and the
    # megacore 'parallel' axis with per-core accumulator rows.
    C, H, W = 3, 16, 16
    color, gcolor, rnormal, snormal, rdist = _make_inputs(k_a, C, H, W)
    _input = {"colorTensor": gcolor}
    _renderout = {"color": color, "rdist": rdist,
                  "rnormal": rnormal, "snormal": snormal}

    loss, stats = loss_forward(_Config(), _input, _renderout)
    jax.block_until_ready((loss, stats))

    ref = _reference_stats(color, gcolor, rnormal, snormal, rdist)
    got = (stats["l1"], 1.0 - stats["ssim"], stats["normal"], stats["dist"])
    _check("H16", got, ref)

    # Case 2: H=32 with TH=8 -> grid (2, 2): exercises accumulation across the
    # inner 'arbitrary' axis on each core plus interior halo tiles.
    C2_, H2, W2 = 3, 32, 16
    color2, gcolor2, rnormal2, snormal2, rdist2 = _make_inputs(k_b, C2_, H2, W2)
    got2 = loss_stats_pallas(color2, gcolor2, rnormal2, snormal2, rdist2, tile_h=8)
    jax.block_until_ready(got2)
    ref2 = _reference_stats(color2, gcolor2, rnormal2, snormal2, rdist2)
    _check("H32", got2, ref2)

    print("KERNEL_OK")
</pallas_src>

<mosaic_0001>
module attributes {stable_mosaic.version = 11 : i64} {
  func.func @_loss_stats_kernel(%arg0: i32, %arg1: i32, %arg2: memref<3x8x16xf32, #tpu.memory_space<vmem>>, %arg3: memref<3x8x16xf32, #tpu.memory_space<vmem>>, %arg4: memref<3x8x16xf32, #tpu.memory_space<vmem>>, %arg5: memref<3x8x16xf32, #tpu.memory_space<vmem>>, %arg6: memref<3x8x16xf32, #tpu.memory_space<vmem>>, %arg7: memref<3x8x16xf32, #tpu.memory_space<vmem>>, %arg8: memref<3x8x16xf32, #tpu.memory_space<vmem>>, %arg9: memref<3x8x16xf32, #tpu.memory_space<vmem>>, %arg10: memref<1x8x16xf32, #tpu.memory_space<vmem>>, %arg11: memref<8x24xf32, #tpu.memory_space<vmem>>, %arg12: memref<1x1x8xf32, #tpu.memory_space<vmem>>, %arg13: memref<1x8xf32, #tpu.memory_space<vmem>>) attributes {dimension_semantics = [#tpu.dimension_semantics<parallel>, #tpu.dimension_semantics<arbitrary>], iteration_bounds = array<i64: 2, 1>, scalar_prefetch = 0 : i64, scratch_operands = 1 : i64, tpu.core_type = #tpu.core_type<tc>, window_params = [{transform_indices = @transform_0, window_bounds = array<i64: 3, 8, 16>}, {transform_indices = @transform_1, window_bounds = array<i64: 3, 8, 16>}, {transform_indices = @transform_2, window_bounds = array<i64: 3, 8, 16>}, {transform_indices = @transform_3, window_bounds = array<i64: 3, 8, 16>}, {transform_indices = @transform_4, window_bounds = array<i64: 3, 8, 16>}, {transform_indices = @transform_5, window_bounds = array<i64: 3, 8, 16>}, {transform_indices = @transform_6, window_bounds = array<i64: 3, 8, 16>}, {transform_indices = @transform_7, window_bounds = array<i64: 3, 8, 16>}, {transform_indices = @transform_8, window_bounds = array<i64: 1, 8, 16>}, {pipeline_mode = #tpu.pipeline_mode<synchronous>, transform_indices = @transform_9, window_bounds = array<i64: 8, 24>}, {transform_indices = @transform_10, window_bounds = array<i64: 1, 1, 8>}]} {
    %c1_i32 = arith.constant 1 : i32
    %0 = arith.muli %arg0, %c1_i32 : i32
    %1 = arith.addi %0, %arg1 : i32
    %c0_i32 = arith.constant 0 : i32
    %2 = arith.cmpi eq, %arg1, %c0_i32 : i32
    %3 = arith.extui %2 : i1 to i32
    %c0_i32_0 = arith.constant 0 : i32
    %4 = arith.cmpi ne, %3, %c0_i32_0 : i32
    scf.if %4 {
      %cst_122 = arith.constant 0.000000e+00 : f32
      %407 = vector.broadcast %cst_122 : f32 to vector<1x8xf32>
      %c0_123 = arith.constant 0 : index
      %c0_124 = arith.constant 0 : index
      %408 = vector.load %arg13[%c0_123, %c0_124] : memref<1x8xf32, #tpu.memory_space<vmem>>, vector<1x8xf32>
      tpu.vector_store %arg13[%c0_123, %c0_124], %407 {strides = array<i32>} : memref<1x8xf32, #tpu.memory_space<vmem>>, vector<1x8xf32>,
    } else {
    }
    %c0 = arith.constant 0 : index
    %c0_1 = arith.constant 0 : index
    %c0_2 = arith.constant 0 : index
    %5 = vector.load %arg2[%c0, %c0_1, %c0_2] : memref<3x8x16xf32, #tpu.memory_space<vmem>>, vector<3x8x16xf32>
    %c0_3 = arith.constant 0 : index
    %c0_4 = arith.constant 0 : index
    %c0_5 = arith.constant 0 : index
    %6 = vector.load %arg5[%c0_3, %c0_4, %c0_5] : memref<3x8x16xf32, #tpu.memory_space<vmem>>, vector<3x8x16xf32>
    %c0_i32_6 = arith.constant 0 : i32
    %7 = arith.cmpi sgt, %1, %c0_i32_6 : i32
    %8 = arith.extui %7 : i1 to i32
    %9 = arith.sitofp %8 : i32 to f32
    %c1_i32_7 = arith.constant 1 : i32
    %10 = arith.cmpi slt, %1, %c1_i32_7 : i32
    %11 = arith.extui %10 : i1 to i32
    %12 = arith.sitofp %11 : i32 to f32
    %c0_8 = arith.constant 0 : index
    %c0_9 = arith.constant 0 : index
    %c0_10 = arith.constant 0 : index
    %13 = vector.load %arg3[%c0_8, %c0_9, %c0_10] : memref<3x8x16xf32, #tpu.memory_space<vmem>>, vector<3x8x16xf32>
    %14 = vector.broadcast %9 : f32 to vector<3x8x16xf32>
    %15 = arith.mulf %13, %14 : vector<3x8x16xf32>
    %c0_11 = arith.constant 0 : index
    %c0_12 = arith.constant 0 : index
    %c0_13 = arith.constant 0 : index
    %16 = vector.load %arg6[%c0_11, %c0_12, %c0_13] : memref<3x8x16xf32, #tpu.memory_space<vmem>>, vector<3x8x16xf32>
    %17 = vector.broadcast %9 : f32 to vector<3x8x16xf32>
    %18 = arith.mulf %16, %17 : vector<3x8x16xf32>
    %c0_14 = arith.constant 0 : index
    %c0_15 = arith.constant 0 : index
    %c0_16 = arith.constant 0 : index
    %19 = vector.load %arg4[%c0_14, %c0_15, %c0_16] : memref<3x8x16xf32, #tpu.memory_space<vmem>>, vector<3x8x16xf32>
    %20 = vector.broadcast %12 : f32 to vector<3x8x16xf32>
    %21 = arith.mulf %19, %20 : vector<3x8x16xf32>
    %c0_17 = arith.constant 0 : index
    %c0_18 = arith.constant 0 : index
    %c0_19 = arith.constant 0 : index
    %22 = vector.load %arg7[%c0_17, %c0_18, %c0_19] : memref<3x8x16xf32, #tpu.memory_space<vmem>>, vector<3x8x16xf32>
    %23 = vector.broadcast %12 : f32 to vector<3x8x16xf32>
    %24 = arith.mulf %22, %23 : vector<3x8x16xf32>
    %25 = tpu.concatenate %15, %5, %21 in 1 : vector<3x8x16xf32>, vector<3x8x16xf32>, vector<3x8x16xf32> -> vector<3x24x16xf32>
    %26 = tpu.concatenate %18, %6, %24 in 1 : vector<3x8x16xf32>, vector<3x8x16xf32>, vector<3x8x16xf32> -> vector<3x24x16xf32>
    %c0_20 = arith.constant 0 : index
    %c0_21 = arith.constant 0 : index
    %27 = vector.load %arg11[%c0_20, %c0_21] : memref<8x24xf32, #tpu.memory_space<vmem>>, vector<8x24xf32>
    %28 = vector.extract_strided_slice %25 {offsets = [0, 0, 0], sizes = [1, 24, 16], strides = [1, 1, 1]} : vector<3x24x16xf32> to vector<1x24x16xf32>
    %29 = vector.shape_cast %28 : vector<1x24x16xf32> to vector<24x16xf32>
    %cst = arith.constant dense<0.000000e+00> : vector<8x16xf32>
    %30 = tpu.matmul %27, %29, %cst {dimension_numbers = #tpu.dot_dimension_numbers<[1], [0], [0], [1], [0, 0, 1, 1], [], []>} : vector<8x24xf32>, vector<24x16xf32>, vector<8x16xf32> -> vector<8x16xf32>
    %31 = vector.extract_strided_slice %25 {offsets = [1, 0, 0], sizes = [1, 24, 16], strides = [1, 1, 1]} : vector<3x24x16xf32> to vector<1x24x16xf32>
    %32 = vector.shape_cast %31 : vector<1x24x16xf32> to vector<24x16xf32>
    %cst_22 = arith.constant dense<0.000000e+00> : vector<8x16xf32>
    %33 = tpu.matmul %27, %32, %cst_22 {dimension_numbers = #tpu.dot_dimension_numbers<[1], [0], [0], [1], [0, 0, 1, 1], [], []>} : vector<8x24xf32>, vector<24x16xf32>, vector<8x16xf32> -> vector<8x16xf32>
    %34 = vector.extract_strided_slice %25 {offsets = [2, 0, 0], sizes = [1, 24, 16], strides = [1, 1, 1]} : vector<3x24x16xf32> to vector<1x24x16xf32>
    %35 = vector.shape_cast %34 : vector<1x24x16xf32> to vector<24x16xf32>
    %cst_23 = arith.constant dense<0.000000e+00> : vector<8x16xf32>
    %36 = tpu.matmul %27, %35, %cst_23 {dimension_numbers = #tpu.dot_dimension_numbers<[1], [0], [0], [1], [0, 0, 1, 1], [], []>} : vector<8x24xf32>, vector<24x16xf32>, vector<8x16xf32> -> vector<8x16xf32>
    %37 = vector.shape_cast %30 : vector<8x16xf32> to vector<1x8x16xf32>
    %38 = vector.shape_cast %33 : vector<8x16xf32> to vector<1x8x16xf32>
    %39 = vector.shape_cast %36 : vector<8x16xf32> to vector<1x8x16xf32>
    %40 = tpu.concatenate %37, %38, %39 in 0 : vector<1x8x16xf32>, vector<1x8x16xf32>, vector<1x8x16xf32> -> vector<3x8x16xf32>
    %cst_24 = arith.constant 0.266011715 : f32
    %41 = vector.broadcast %cst_24 : f32 to vector<3x8x16xf32>
    %42 = arith.mulf %41, %40 : vector<3x8x16xf32>
    %cst_25 = arith.constant 0.000000e+00 : f32
    %43 = vector.broadcast %cst_25 : f32 to vector<3x8x1xf32>
    %44 = vector.extract_strided_slice %40 {offsets = [0, 0, 1], sizes = [3, 8, 15], strides = [1, 1, 1]} : vector<3x8x16xf32> to vector<3x8x15xf32>
    %45 = tpu.concatenate %44, %43 in 2 : vector<3x8x15xf32>, vector<3x8x1xf32> -> vector<3x8x16xf32>
    %46 = vector.extract_strided_slice %40 {offsets = [0, 0, 0], sizes = [3, 8, 15], strides = [1, 1, 1]} : vector<3x8x16xf32> to vector<3x8x15xf32>
    %47 = tpu.concatenate %43, %46 in 2 : vector<3x8x1xf32>, vector<3x8x15xf32> -> vector<3x8x16xf32>
    %48 = arith.addf %45, %47 : vector<3x8x16xf32>
    %cst_26 = arith.constant 0.213005543 : f32
    %49 = vector.broadcast %cst_26 : f32 to vector<3x8x16xf32>
    %50 = arith.mulf %49, %48 : vector<3x8x16xf32>
    %51 = arith.addf %42, %50 : vector<3x8x16xf32>
    %cst_27 = arith.constant 0.000000e+00 : f32
    %52 = vector.broadcast %cst_27 : f32 to vector<3x8x2xf32>
    %53 = vector.extract_strided_slice %40 {offsets = [0, 0, 2], sizes = [3, 8, 14], strides = [1, 1, 1]} : vector<3x8x16xf32> to vector<3x8x14xf32>
    %54 = tpu.concatenate %53, %52 in 2 : vector<3x8x14xf32>, vector<3x8x2xf32> -> vector<3x8x16xf32>
    %55 = vector.extract_strided_slice %40 {offsets = [0, 0, 0], sizes = [3, 8, 14], strides = [1, 1, 1]} : vector<3x8x16xf32> to vector<3x8x14xf32>
    %56 = tpu.concatenate %52, %55 in 2 : vector<3x8x2xf32>, vector<3x8x14xf32> -> vector<3x8x16xf32>
    %57 = arith.addf %54, %56 : vector<3x8x16xf32>
    %cst_28 = arith.constant 0.109360687 : f32
    %58 = vector.broadcast %cst_28 : f32 to vector<3x8x16xf32>
    %59 = arith.mulf %58, %57 : vector<3x8x16xf32>
    %60 = arith.addf %51, %59 : vector<3x8x16xf32>
    %cst_29 = arith.constant 0.000000e+00 : f32
    %61 = vector.broadcast %cst_29 : f32 to vector<3x8x3xf32>
    %62 = vector.extract_strided_slice %40 {offsets = [0, 0, 3], sizes = [3, 8, 13], strides = [1, 1, 1]} : vector<3x8x16xf32> to vector<3x8x13xf32>
    %63 = tpu.concatenate %62, %61 in 2 : vector<3x8x13xf32>, vector<3x8x3xf32> -> vector<3x8x16xf32>
    %64 = vector.extract_strided_slice %40 {offsets = [0, 0, 0], sizes = [3, 8, 13], strides = [1, 1, 1]} : vector<3x8x16xf32> to vector<3x8x13xf32>
    %65 = tpu.concatenate %61, %64 in 2 : vector<3x8x3xf32>, vector<3x8x13xf32> -> vector<3x8x16xf32>
    %66 = arith.addf %63, %65 : vector<3x8x16xf32>
    %cst_30 = arith.constant 0.0360007733 : f32
    %67 = vector.broadcast %cst_30 : f32 to vector<3x8x16xf32>
    %68 = arith.mulf %67, %66 : vector<3x8x16xf32>
    %69 = arith.addf %60, %68 : vector<3x8x16xf32>
    %cst_31 = arith.constant 0.000000e+00 : f32
    %70 = vector.broadcast %cst_31 : f32 to vector<3x8x4xf32>
    %71 = vector.extract_strided_slice %40 {offsets = [0, 0, 4], sizes = [3, 8, 12], strides = [1, 1, 1]} : vector<3x8x16xf32> to vector<3x8x12xf32>
    %72 = tpu.concatenate %71, %70 in 2 : vector<3x8x12xf32>, vector<3x8x4xf32> -> vector<3x8x16xf32>
    %73 = vector.extract_strided_slice %40 {offsets = [0, 0, 0], sizes = [3, 8, 12], strides = [1, 1, 1]} : vector<3x8x16xf32> to vector<3x8x12xf32>
    %74 = tpu.concatenate %70, %73 in 2 : vector<3x8x4xf32>, vector<3x8x12xf32> -> vector<3x8x16xf32>
    %75 = arith.addf %72, %74 : vector<3x8x16xf32>
    %cst_32 = arith.constant 0.00759875821 : f32
    %76 = vector.broadcast %cst_32 : f32 to vector<3x8x16xf32>
    %77 = arith.mulf %76, %75 : vector<3x8x16xf32>
    %78 = arith.addf %69, %77 : vector<3x8x16xf32>
    %cst_33 = arith.constant 0.000000e+00 : f32
    %79 = vector.broadcast %cst_33 : f32 to vector<3x8x5xf32>
    %80 = vector.extract_strided_slice %40 {offsets = [0, 0, 5], sizes = [3, 8, 11], strides = [1, 1, 1]} : vector<3x8x16xf32> to vector<3x8x11xf32>
    %81 = tpu.concatenate %80, %79 in 2 : vector<3x8x11xf32>, vector<3x8x5xf32> -> vector<3x8x16xf32>
    %82 = vector.extract_strided_slice %40 {offsets = [0, 0, 0], sizes = [3, 8, 11], strides = [1, 1, 1]} : vector<3x8x16xf32> to vector<3x8x11xf32>
    %83 = tpu.concatenate %79, %82 in 2 : vector<3x8x5xf32>, vector<3x8x11xf32> -> vector<3x8x16xf32>
    %84 = arith.addf %81, %83 : vector<3x8x16xf32>
    %cst_34 = arith.constant 0.00102838012 : f32
    %85 = vector.broadcast %cst_34 : f32 to vector<3x8x16xf32>
    %86 = arith.mulf %85, %84 : vector<3x8x16xf32>
    %87 = arith.addf %78, %86 : vector<3x8x16xf32>
    %88 = vector.extract_strided_slice %26 {offsets = [0, 0, 0], sizes = [1, 24, 16], strides = [1, 1, 1]} : vector<3x24x16xf32> to vector<1x24x16xf32>
    %89 = vector.shape_cast %88 : vector<1x24x16xf32> to vector<24x16xf32>
    %cst_35 = arith.constant dense<0.000000e+00> : vector<8x16xf32>
    %90 = tpu.matmul %27, %89, %cst_35 {dimension_numbers = #tpu.dot_dimension_numbers<[1], [0], [0], [1], [0, 0, 1, 1], [], []>} : vector<8x24xf32>, vector<24x16xf32>, vector<8x16xf32> -> vector<8x16xf32>
    %91 = vector.extract_strided_slice %26 {offsets = [1, 0, 0], sizes = [1, 24, 16], strides = [1, 1, 1]} : vector<3x24x16xf32> to vector<1x24x16xf32>
    %92 = vector.shape_cast %91 : vector<1x24x16xf32> to vector<24x16xf32>
    %cst_36 = arith.constant dense<0.000000e+00> : vector<8x16xf32>
    %93 = tpu.matmul %27, %92, %cst_36 {dimension_numbers = #tpu.dot_dimension_numbers<[1], [0], [0], [1], [0, 0, 1, 1], [], []>} : vector<8x24xf32>, vector<24x16xf32>, vector<8x16xf32> -> vector<8x16xf32>
    %94 = vector.extract_strided_slice %26 {offsets = [2, 0, 0], sizes = [1, 24, 16], strides = [1, 1, 1]} : vector<3x24x16xf32> to vector<1x24x16xf32>
    %95 = vector.shape_cast %94 : vector<1x24x16xf32> to vector<24x16xf32>
    %cst_37 = arith.constant dense<0.000000e+00> : vector<8x16xf32>
    %96 = tpu.matmul %27, %95, %cst_37 {dimension_numbers = #tpu.dot_dimension_numbers<[1], [0], [0], [1], [0, 0, 1, 1], [], []>} : vector<8x24xf32>, vector<24x16xf32>, vector<8x16xf32> -> vector<8x16xf32>
    %97 = vector.shape_cast %90 : vector<8x16xf32> to vector<1x8x16xf32>
    %98 = vector.shape_cast %93 : vector<8x16xf32> to vector<1x8x16xf32>
    %99 = vector.shape_cast %96 : vector<8x16xf32> to vector<1x8x16xf32>
    %100 = tpu.concatenate %97, %98, %99 in 0 : vector<1x8x16xf32>, vector<1x8x16xf32>, vector<1x8x16xf32> -> vector<3x8x16xf32>
    %cst_38 = arith.constant 0.266011715 : f32
    %101 = vector.broadcast %cst_38 : f32 to vector<3x8x16xf32>
    %102 = arith.mulf %101, %100 : vector<3x8x16xf32>
    %cst_39 = arith.constant 0.000000e+00 : f32
    %103 = vector.broadcast %cst_39 : f32 to vector<3x8x1xf32>
    %104 = vector.extract_strided_slice %100 {offsets = [0, 0, 1], sizes = [3, 8, 15], strides = [1, 1, 1]} : vector<3x8x16xf32> to vector<3x8x15xf32>
    %105 = tpu.concatenate %104, %103 in 2 : vector<3x8x15xf32>, vector<3x8x1xf32> -> vector<3x8x16xf32>
    %106 = vector.extract_strided_slice %100 {offsets = [0, 0, 0], sizes = [3, 8, 15], strides = [1, 1, 1]} : vector<3x8x16xf32> to vector<3x8x15xf32>
    %107 = tpu.concatenate %103, %106 in 2 : vector<3x8x1xf32>, vector<3x8x15xf32> -> vector<3x8x16xf32>
    %108 = arith.addf %105, %107 : vector<3x8x16xf32>
    %cst_40 = arith.constant 0.213005543 : f32
    %109 = vector.broadcast %cst_40 : f32 to vector<3x8x16xf32>
    %110 = arith.mulf %109, %108 : vector<3x8x16xf32>
    %111 = arith.addf %102, %110 : vector<3x8x16xf32>
    %cst_41 = arith.constant 0.000000e+00 : f32
    %112 = vector.broadcast %cst_41 : f32 to vector<3x8x2xf32>
    %113 = vector.extract_strided_slice %100 {offsets = [0, 0, 2], sizes = [3, 8, 14], strides = [1, 1, 1]} : vector<3x8x16xf32> to vector<3x8x14xf32>
    %114 = tpu.concatenate %113, %112 in 2 : vector<3x8x14xf32>, vector<3x8x2xf32> -> vector<3x8x16xf32>
    %115 = vector.extract_strided_slice %100 {offsets = [0, 0, 0], sizes = [3, 8, 14], strides = [1, 1, 1]} : vector<3x8x16xf32> to vector<3x8x14xf32>
    %116 = tpu.concatenate %112, %115 in 2 : vector<3x8x2xf32>, vector<3x8x14xf32> -> vector<3x8x16xf32>
    %117 = arith.addf %114, %116 : vector<3x8x16xf32>
    %cst_42 = arith.constant 0.109360687 : f32
    %118 = vector.broadcast %cst_42 : f32 to vector<3x8x16xf32>
    %119 = arith.mulf %118, %117 : vector<3x8x16xf32>
    %120 = arith.addf %111, %119 : vector<3x8x16xf32>
    %cst_43 = arith.constant 0.000000e+00 : f32
    %121 = vector.broadcast %cst_43 : f32 to vector<3x8x3xf32>
    %122 = vector.extract_strided_slice %100 {offsets = [0, 0, 3], sizes = [3, 8, 13], strides = [1, 1, 1]} : vector<3x8x16xf32> to vector<3x8x13xf32>
    %123 = tpu.concatenate %122, %121 in 2 : vector<3x8x13xf32>, vector<3x8x3xf32> -> vector<3x8x16xf32>
    %124 = vector.extract_strided_slice %100 {offsets = [0, 0, 0], sizes = [3, 8, 13], strides = [1, 1, 1]} : vector<3x8x16xf32> to vector<3x8x13xf32>
    %125 = tpu.concatenate %121, %124 in 2 : vector<3x8x3xf32>, vector<3x8x13xf32> -> vector<3x8x16xf32>
    %126 = arith.addf %123, %125 : vector<3x8x16xf32>
    %cst_44 = arith.constant 0.0360007733 : f32
    %127 = vector.broadcast %cst_44 : f32 to vector<3x8x16xf32>
    %128 = arith.mulf %127, %126 : vector<3x8x16xf32>
    %129 = arith.addf %120, %128 : vector<3x8x16xf32>
    %cst_45 = arith.constant 0.000000e+00 : f32
    %130 = vector.broadcast %cst_45 : f32 to vector<3x8x4xf32>
    %131 = vector.extract_strided_slice %100 {offsets = [0, 0, 4], sizes = [3, 8, 12], strides = [1, 1, 1]} : vector<3x8x16xf32> to vector<3x8x12xf32>
    %132 = tpu.concatenate %131, %130 in 2 : vector<3x8x12xf32>, vector<3x8x4xf32> -> vector<3x8x16xf32>
    %133 = vector.extract_strided_slice %100 {offsets = [0, 0, 0], sizes = [3, 8, 12], strides = [1, 1, 1]} : vector<3x8x16xf32> to vector<3x8x12xf32>
    %134 = tpu.concatenate %130, %133 in 2 : vector<3x8x4xf32>, vector<3x8x12xf32> -> vector<3x8x16xf32>
    %135 = arith.addf %132, %134 : vector<3x8x16xf32>
    %cst_46 = arith.constant 0.00759875821 : f32
    %136 = vector.broadcast %cst_46 : f32 to vector<3x8x16xf32>
    %137 = arith.mulf %136, %135 : vector<3x8x16xf32>
    %138 = arith.addf %129, %137 : vector<3x8x16xf32>
    %cst_47 = arith.constant 0.000000e+00 : f32
    %139 = vector.broadcast %cst_47 : f32 to vector<3x8x5xf32>
    %140 = vector.extract_strided_slice %100 {offsets = [0, 0, 5], sizes = [3, 8, 11], strides = [1, 1, 1]} : vector<3x8x16xf32> to vector<3x8x11xf32>
    %141 = tpu.concatenate %140, %139 in 2 : vector<3x8x11xf32>, vector<3x8x5xf32> -> vector<3x8x16xf32>
    %142 = vector.extract_strided_slice %100 {offsets = [0, 0, 0], sizes = [3, 8, 11], strides = [1, 1, 1]} : vector<3x8x16xf32> to vector<3x8x11xf32>
    %143 = tpu.concatenate %139, %142 in 2 : vector<3x8x5xf32>, vector<3x8x11xf32> -> vector<3x8x16xf32>
    %144 = arith.addf %141, %143 : vector<3x8x16xf32>
    %cst_48 = arith.constant 0.00102838012 : f32
    %145 = vector.broadcast %cst_48 : f32 to vector<3x8x16xf32>
    %146 = arith.mulf %145, %144 : vector<3x8x16xf32>
    %147 = arith.addf %138, %146 : vector<3x8x16xf32>
    %148 = arith.mulf %25, %25 : vector<3x24x16xf32>
    %149 = vector.extract_strided_slice %148 {offsets = [0, 0, 0], sizes = [1, 24, 16], strides = [1, 1, 1]} : vector<3x24x16xf32> to vector<1x24x16xf32>
    %150 = vector.shape_cast %149 : vector<1x24x16xf32> to vector<24x16xf32>
    %cst_49 = arith.constant dense<0.000000e+00> : vector<8x16xf32>
    %151 = tpu.matmul %27, %150, %cst_49 {dimension_numbers = #tpu.dot_dimension_numbers<[1], [0], [0], [1], [0, 0, 1, 1], [], []>} : vector<8x24xf32>, vector<24x16xf32>, vector<8x16xf32> -> vector<8x16xf32>
    %152 = vector.extract_strided_slice %148 {offsets = [1, 0, 0], sizes = [1, 24, 16], strides = [1, 1, 1]} : vector<3x24x16xf32> to vector<1x24x16xf32>
    %153 = vector.shape_cast %152 : vector<1x24x16xf32> to vector<24x16xf32>
    %cst_50 = arith.constant dense<0.000000e+00> : vector<8x16xf32>
    %154 = tpu.matmul %27, %153, %cst_50 {dimension_numbers = #tpu.dot_dimension_numbers<[1], [0], [0], [1], [0, 0, 1, 1], [], []>} : vector<8x24xf32>, vector<24x16xf32>, vector<8x16xf32> -> vector<8x16xf32>
    %155 = vector.extract_strided_slice %148 {offsets = [2, 0, 0], sizes = [1, 24, 16], strides = [1, 1, 1]} : vector<3x24x16xf32> to vector<1x24x16xf32>
    %156 = vector.shape_cast %155 : vector<1x24x16xf32> to vector<24x16xf32>
    %cst_51 = arith.constant dense<0.000000e+00> : vector<8x16xf32>
    %157 = tpu.matmul %27, %156, %cst_51 {dimension_numbers = #tpu.dot_dimension_numbers<[1], [0], [0], [1], [0, 0, 1, 1], [], []>} : vector<8x24xf32>, vector<24x16xf32>, vector<8x16xf32> -> vector<8x16xf32>
    %158 = vector.shape_cast %151 : vector<8x16xf32> to vector<1x8x16xf32>
    %159 = vector.shape_cast %154 : vector<8x16xf32> to vector<1x8x16xf32>
    %160 = vector.shape_cast %157 : vector<8x16xf32> to vector<1x8x16xf32>
    %161 = tpu.concatenate %158, %159, %160 in 0 : vector<1x8x16xf32>, vector<1x8x16xf32>, vector<1x8x16xf32> -> vector<3x8x16xf32>
    %cst_52 = arith.constant 0.266011715 : f32
    %162 = vector.broadcast %cst_52 : f32 to vector<3x8x16xf32>
    %163 = arith.mulf %162, %161 : vector<3x8x16xf32>
    %cst_53 = arith.constant 0.000000e+00 : f32
    %164 = vector.broadcast %cst_53 : f32 to vector<3x8x1xf32>
    %165 = vector.extract_strided_slice %161 {offsets = [0, 0, 1], sizes = [3, 8, 15], strides = [1, 1, 1]} : vector<3x8x16xf32> to vector<3x8x15xf32>
    %166 = tpu.concatenate %165, %164 in 2 : vector<3x8x15xf32>, vector<3x8x1xf32> -> vector<3x8x16xf32>
    %167 = vector.extract_strided_slice %161 {offsets = [0, 0, 0], sizes = [3, 8, 15], strides = [1, 1, 1]} : vector<3x8x16xf32> to vector<3x8x15xf32>
    %168 = tpu.concatenate %164, %167 in 2 : vector<3x8x1xf32>, vector<3x8x15xf32> -> vector<3x8x16xf32>
    %169 = arith.addf %166, %168 : vector<3x8x16xf32>
    %cst_54 = arith.constant 0.213005543 : f32
    %170 = vector.broadcast %cst_54 : f32 to vector<3x8x16xf32>
    %171 = arith.mulf %170, %169 : vector<3x8x16xf32>
    %172 = arith.addf %163, %171 : vector<3x8x16xf32>
    %cst_55 = arith.constant 0.000000e+00 : f32
    %173 = vector.broadcast %cst_55 : f32 to vector<3x8x2xf32>
    %174 = vector.extract_strided_slice %161 {offsets = [0, 0, 2], sizes = [3, 8, 14], strides = [1, 1, 1]} : vector<3x8x16xf32> to vector<3x8x14xf32>
    %175 = tpu.concatenate %174, %173 in 2 : vector<3x8x14xf32>, vector<3x8x2xf32> -> vector<3x8x16xf32>
    %176 = vector.extract_strided_slice %161 {offsets = [0, 0, 0], sizes = [3, 8, 14], strides = [1, 1, 1]} : vector<3x8x16xf32> to vector<3x8x14xf32>
    %177 = tpu.concatenate %173, %176 in 2 : vector<3x8x2xf32>, vector<3x8x14xf32> -> vector<3x8x16xf32>
    %178 = arith.addf %175, %177 : vector<3x8x16xf32>
    %cst_56 = arith.constant 0.109360687 : f32
    %179 = vector.broadcast %cst_56 : f32 to vector<3x8x16xf32>
    %180 = arith.mulf %179, %178 : vector<3x8x16xf32>
    %181 = arith.addf %172, %180 : vector<3x8x16xf32>
    %cst_57 = arith.constant 0.000000e+00 : f32
    %182 = vector.broadcast %cst_57 : f32 to vector<3x8x3xf32>
    %183 = vector.extract_strided_slice %161 {offsets = [0, 0, 3], sizes = [3, 8, 13], strides = [1, 1, 1]} : vector<3x8x16xf32> to vector<3x8x13xf32>
    %184 = tpu.concatenate %183, %182 in 2 : vector<3x8x13xf32>, vector<3x8x3xf32> -> vector<3x8x16xf32>
    %185 = vector.extract_strided_slice %161 {offsets = [0, 0, 0], sizes = [3, 8, 13], strides = [1, 1, 1]} : vector<3x8x16xf32> to vector<3x8x13xf32>
    %186 = tpu.concatenate %182, %185 in 2 : vector<3x8x3xf32>, vector<3x8x13xf32> -> vector<3x8x16xf32>
    %187 = arith.addf %184, %186 : vector<3x8x16xf32>
    %cst_58 = arith.constant 0.0360007733 : f32
    %188 = vector.broadcast %cst_58 : f32 to vector<3x8x16xf32>
    %189 = arith.mulf %188, %187 : vector<3x8x16xf32>
    %190 = arith.addf %181, %189 : vector<3x8x16xf32>
    %cst_59 = arith.constant 0.000000e+00 : f32
    %191 = vector.broadcast %cst_59 : f32 to vector<3x8x4xf32>
    %192 = vector.extract_strided_slice %161 {offsets = [0, 0, 4], sizes = [3, 8, 12], strides = [1, 1, 1]} : vector<3x8x16xf32> to vector<3x8x12xf32>
    %193 = tpu.concatenate %192, %191 in 2 : vector<3x8x12xf32>, vector<3x8x4xf32> -> vector<3x8x16xf32>
    %194 = vector.extract_strided_slice %161 {offsets = [0, 0, 0], sizes = [3, 8, 12], strides = [1, 1, 1]} : vector<3x8x16xf32> to vector<3x8x12xf32>
    %195 = tpu.concatenate %191, %194 in 2 : vector<3x8x4xf32>, vector<3x8x12xf32> -> vector<3x8x16xf32>
    %196 = arith.addf %193, %195 : vector<3x8x16xf32>
    %cst_60 = arith.constant 0.00759875821 : f32
    %197 = vector.broadcast %cst_60 : f32 to vector<3x8x16xf32>
    %198 = arith.mulf %197, %196 : vector<3x8x16xf32>
    %199 = arith.addf %190, %198 : vector<3x8x16xf32>
    %cst_61 = arith.constant 0.000000e+00 : f32
    %200 = vector.broadcast %cst_61 : f32 to vector<3x8x5xf32>
    %201 = vector.extract_strided_slice %161 {offsets = [0, 0, 5], sizes = [3, 8, 11], strides = [1, 1, 1]} : vector<3x8x16xf32> to vector<3x8x11xf32>
    %202 = tpu.concatenate %201, %200 in 2 : vector<3x8x11xf32>, vector<3x8x5xf32> -> vector<3x8x16xf32>
    %203 = vector.extract_strided_slice %161 {offsets = [0, 0, 0], sizes = [3, 8, 11], strides = [1, 1, 1]} : vector<3x8x16xf32> to vector<3x8x11xf32>
    %204 = tpu.concatenate %200, %203 in 2 : vector<3x8x5xf32>, vector<3x8x11xf32> -> vector<3x8x16xf32>
    %205 = arith.addf %202, %204 : vector<3x8x16xf32>
    %cst_62 = arith.constant 0.00102838012 : f32
    %206 = vector.broadcast %cst_62 : f32 to vector<3x8x16xf32>
    %207 = arith.mulf %206, %205 : vector<3x8x16xf32>
    %208 = arith.addf %199, %207 : vector<3x8x16xf32>
    %209 = arith.mulf %26, %26 : vector<3x24x16xf32>
    %210 = vector.extract_strided_slice %209 {offsets = [0, 0, 0], sizes = [1, 24, 16], strides = [1, 1, 1]} : vector<3x24x16xf32> to vector<1x24x16xf32>
    %211 = vector.shape_cast %210 : vector<1x24x16xf32> to vector<24x16xf32>
    %cst_63 = arith.constant dense<0.000000e+00> : vector<8x16xf32>
    %212 = tpu.matmul %27, %211, %cst_63 {dimension_numbers = #tpu.dot_dimension_numbers<[1], [0], [0], [1], [0, 0, 1, 1], [], []>} : vector<8x24xf32>, vector<24x16xf32>, vector<8x16xf32> -> vector<8x16xf32>
    %213 = vector.extract_strided_slice %209 {offsets = [1, 0, 0], sizes = [1, 24, 16], strides = [1, 1, 1]} : vector<3x24x16xf32> to vector<1x24x16xf32>
    %214 = vector.shape_cast %213 : vector<1x24x16xf32> to vector<24x16xf32>
    %cst_64 = arith.constant dense<0.000000e+00> : vector<8x16xf32>
    %215 = tpu.matmul %27, %214, %cst_64 {dimension_numbers = #tpu.dot_dimension_numbers<[1], [0], [0], [1], [0, 0, 1, 1], [], []>} : vector<8x24xf32>, vector<24x16xf32>, vector<8x16xf32> -> vector<8x16xf32>
    %216 = vector.extract_strided_slice %209 {offsets = [2, 0, 0], sizes = [1, 24, 16], strides = [1, 1, 1]} : vector<3x24x16xf32> to vector<1x24x16xf32>
    %217 = vector.shape_cast %216 : vector<1x24x16xf32> to vector<24x16xf32>
    %cst_65 = arith.constant dense<0.000000e+00> : vector<8x16xf32>
    %218 = tpu.matmul %27, %217, %cst_65 {dimension_numbers = #tpu.dot_dimension_numbers<[1], [0], [0], [1], [0, 0, 1, 1], [], []>} : vector<8x24xf32>, vector<24x16xf32>, vector<8x16xf32> -> vector<8x16xf32>
    %219 = vector.shape_cast %212 : vector<8x16xf32> to vector<1x8x16xf32>
    %220 = vector.shape_cast %215 : vector<8x16xf32> to vector<1x8x16xf32>
    %221 = vector.shape_cast %218 : vector<8x16xf32> to vector<1x8x16xf32>
    %222 = tpu.concatenate %219, %220, %221 in 0 : vector<1x8x16xf32>, vector<1x8x16xf32>, vector<1x8x16xf32> -> vector<3x8x16xf32>
    %cst_66 = arith.constant 0.266011715 : f32
    %223 = vector.broadcast %cst_66 : f32 to vector<3x8x16xf32>
    %224 = arith.mulf %223, %222 : vector<3x8x16xf32>
    %cst_67 = arith.constant 0.000000e+00 : f32
    %225 = vector.broadcast %cst_67 : f32 to vector<3x8x1xf32>
    %226 = vector.extract_strided_slice %222 {offsets = [0, 0, 1], sizes = [3, 8, 15], strides = [1, 1, 1]} : vector<3x8x16xf32> to vector<3x8x15xf32>
    %227 = tpu.concatenate %226, %225 in 2 : vector<3x8x15xf32>, vector<3x8x1xf32> -> vector<3x8x16xf32>
    %228 = vector.extract_strided_slice %222 {offsets = [0, 0, 0], sizes = [3, 8, 15], strides = [1, 1, 1]} : vector<3x8x16xf32> to vector<3x8x15xf32>
    %229 = tpu.concatenate %225, %228 in 2 : vector<3x8x1xf32>, vector<3x8x15xf32> -> vector<3x8x16xf32>
    %230 = arith.addf %227, %229 : vector<3x8x16xf32>
    %cst_68 = arith.constant 0.213005543 : f32
    %231 = vector.broadcast %cst_68 : f32 to vector<3x8x16xf32>
    %232 = arith.mulf %231, %230 : vector<3x8x16xf32>
    %233 = arith.addf %224, %232 : vector<3x8x16xf32>
    %cst_69 = arith.constant 0.000000e+00 : f32
    %234 = vector.broadcast %cst_69 : f32 to vector<3x8x2xf32>
    %235 = vector.extract_strided_slice %222 {offsets = [0, 0, 2], sizes = [3, 8, 14], strides = [1, 1, 1]} : vector<3x8x16xf32> to vector<3x8x14xf32>
    %236 = tpu.concatenate %235, %234 in 2 : vector<3x8x14xf32>, vector<3x8x2xf32> -> vector<3x8x16xf32>
    %237 = vector.extract_strided_slice %222 {offsets = [0, 0, 0], sizes = [3, 8, 14], strides = [1, 1, 1]} : vector<3x8x16xf32> to vector<3x8x14xf32>
    %238 = tpu.concatenate %234, %237 in 2 : vector<3x8x2xf32>, vector<3x8x14xf32> -> vector<3x8x16xf32>
    %239 = arith.addf %236, %238 : vector<3x8x16xf32>
    %cst_70 = arith.constant 0.109360687 : f32
    %240 = vector.broadcast %cst_70 : f32 to vector<3x8x16xf32>
    %241 = arith.mulf %240, %239 : vector<3x8x16xf32>
    %242 = arith.addf %233, %241 : vector<3x8x16xf32>
    %cst_71 = arith.constant 0.000000e+00 : f32
    %243 = vector.broadcast %cst_71 : f32 to vector<3x8x3xf32>
    %244 = vector.extract_strided_slice %222 {offsets = [0, 0, 3], sizes = [3, 8, 13], strides = [1, 1, 1]} : vector<3x8x16xf32> to vector<3x8x13xf32>
    %245 = tpu.concatenate %244, %243 in 2 : vector<3x8x13xf32>, vector<3x8x3xf32> -> vector<3x8x16xf32>
    %246 = vector.extract_strided_slice %222 {offsets = [0, 0, 0], sizes = [3, 8, 13], strides = [1, 1, 1]} : vector<3x8x16xf32> to vector<3x8x13xf32>
    %247 = tpu.concatenate %243, %246 in 2 : vector<3x8x3xf32>, vector<3x8x13xf32> -> vector<3x8x16xf32>
    %248 = arith.addf %245, %247 : vector<3x8x16xf32>
    %cst_72 = arith.constant 0.0360007733 : f32
    %249 = vector.broadcast %cst_72 : f32 to vector<3x8x16xf32>
    %250 = arith.mulf %249, %248 : vector<3x8x16xf32>
    %251 = arith.addf %242, %250 : vector<3x8x16xf32>
    %cst_73 = arith.constant 0.000000e+00 : f32
    %252 = vector.broadcast %cst_73 : f32 to vector<3x8x4xf32>
    %253 = vector.extract_strided_slice %222 {offsets = [0, 0, 4], sizes = [3, 8, 12], strides = [1, 1, 1]} : vector<3x8x16xf32> to vector<3x8x12xf32>
    %254 = tpu.concatenate %253, %252 in 2 : vector<3x8x12xf32>, vector<3x8x4xf32> -> vector<3x8x16xf32>
    %255 = vector.extract_strided_slice %222 {offsets = [0, 0, 0], sizes = [3, 8, 12], strides = [1, 1, 1]} : vector<3x8x16xf32> to vector<3x8x12xf32>
    %256 = tpu.concatenate %252, %255 in 2 : vector<3x8x4xf32>, vector<3x8x12xf32> -> vector<3x8x16xf32>
    %257 = arith.addf %254, %256 : vector<3x8x16xf32>
    %cst_74 = arith.constant 0.00759875821 : f32
    %258 = vector.broadcast %cst_74 : f32 to vector<3x8x16xf32>
    %259 = arith.mulf %258, %257 : vector<3x8x16xf32>
    %260 = arith.addf %251, %259 : vector<3x8x16xf32>
    %cst_75 = arith.constant 0.000000e+00 : f32
    %261 = vector.broadcast %cst_75 : f32 to vector<3x8x5xf32>
    %262 = vector.extract_strided_slice %222 {offsets = [0, 0, 5], sizes = [3, 8, 11], strides = [1, 1, 1]} : vector<3x8x16xf32> to vector<3x8x11xf32>
    %263 = tpu.concatenate %262, %261 in 2 : vector<3x8x11xf32>, vector<3x8x5xf32> -> vector<3x8x16xf32>
    %264 = vector.extract_strided_slice %222 {offsets = [0, 0, 0], sizes = [3, 8, 11], strides = [1, 1, 1]} : vector<3x8x16xf32> to vector<3x8x11xf32>
    %265 = tpu.concatenate %261, %264 in 2 : vector<3x8x5xf32>, vector<3x8x11xf32> -> vector<3x8x16xf32>
    %266 = arith.addf %263, %265 : vector<3x8x16xf32>
    %cst_76 = arith.constant 0.00102838012 : f32
    %267 = vector.broadcast %cst_76 : f32 to vector<3x8x16xf32>
    %268 = arith.mulf %267, %266 : vector<3x8x16xf32>
    %269 = arith.addf %260, %268 : vector<3x8x16xf32>
    %270 = arith.mulf %25, %26 : vector<3x24x16xf32>
    %271 = vector.extract_strided_slice %270 {offsets = [0, 0, 0], sizes = [1, 24, 16], strides = [1, 1, 1]} : vector<3x24x16xf32> to vector<1x24x16xf32>
    %272 = vector.shape_cast %271 : vector<1x24x16xf32> to vector<24x16xf32>
    %cst_77 = arith.constant dense<0.000000e+00> : vector<8x16xf32>
    %273 = tpu.matmul %27, %272, %cst_77 {dimension_numbers = #tpu.dot_dimension_numbers<[1], [0], [0], [1], [0, 0, 1, 1], [], []>} : vector<8x24xf32>, vector<24x16xf32>, vector<8x16xf32> -> vector<8x16xf32>
    %274 = vector.extract_strided_slice %270 {offsets = [1, 0, 0], sizes = [1, 24, 16], strides = [1, 1, 1]} : vector<3x24x16xf32> to vector<1x24x16xf32>
    %275 = vector.shape_cast %274 : vector<1x24x16xf32> to vector<24x16xf32>
    %cst_78 = arith.constant dense<0.000000e+00> : vector<8x16xf32>
    %276 = tpu.matmul %27, %275, %cst_78 {dimension_numbers = #tpu.dot_dimension_numbers<[1], [0], [0], [1], [0, 0, 1, 1], [], []>} : vector<8x24xf32>, vector<24x16xf32>, vector<8x16xf32> -> vector<8x16xf32>
    %277 = vector.extract_strided_slice %270 {offsets = [2, 0, 0], sizes = [1, 24, 16], strides = [1, 1, 1]} : vector<3x24x16xf32> to vector<1x24x16xf32>
    %278 = vector.shape_cast %277 : vector<1x24x16xf32> to vector<24x16xf32>
    %cst_79 = arith.constant dense<0.000000e+00> : vector<8x16xf32>
    %279 = tpu.matmul %27, %278, %cst_79 {dimension_numbers = #tpu.dot_dimension_numbers<[1], [0], [0], [1], [0, 0, 1, 1], [], []>} : vector<8x24xf32>, vector<24x16xf32>, vector<8x16xf32> -> vector<8x16xf32>
    %280 = vector.shape_cast %273 : vector<8x16xf32> to vector<1x8x16xf32>
    %281 = vector.shape_cast %276 : vector<8x16xf32> to vector<1x8x16xf32>
    %282 = vector.shape_cast %279 : vector<8x16xf32> to vector<1x8x16xf32>
    %283 = tpu.concatenate %280, %281, %282 in 0 : vector<1x8x16xf32>, vector<1x8x16xf32>, vector<1x8x16xf32> -> vector<3x8x16xf32>
    %cst_80 = arith.constant 0.266011715 : f32
    %284 = vector.broadcast %cst_80 : f32 to vector<3x8x16xf32>
    %285 = arith.mulf %284, %283 : vector<3x8x16xf32>
    %cst_81 = arith.constant 0.000000e+00 : f32
    %286 = vector.broadcast %cst_81 : f32 to vector<3x8x1xf32>
    %287 = vector.extract_strided_slice %283 {offsets = [0, 0, 1], sizes = [3, 8, 15], strides = [1, 1, 1]} : vector<3x8x16xf32> to vector<3x8x15xf32>
    %288 = tpu.concatenate %287, %286 in 2 : vector<3x8x15xf32>, vector<3x8x1xf32> -> vector<3x8x16xf32>
    %289 = vector.extract_strided_slice %283 {offsets = [0, 0, 0], sizes = [3, 8, 15], strides = [1, 1, 1]} : vector<3x8x16xf32> to vector<3x8x15xf32>
    %290 = tpu.concatenate %286, %289 in 2 : vector<3x8x1xf32>, vector<3x8x15xf32> -> vector<3x8x16xf32>
    %291 = arith.addf %288, %290 : vector<3x8x16xf32>
    %cst_82 = arith.constant 0.213005543 : f32
    %292 = vector.broadcast %cst_82 : f32 to vector<3x8x16xf32>
    %293 = arith.mulf %292, %291 : vector<3x8x16xf32>
    %294 = arith.addf %285, %293 : vector<3x8x16xf32>
    %cst_83 = arith.constant 0.000000e+00 : f32
    %295 = vector.broadcast %cst_83 : f32 to vector<3x8x2xf32>
    %296 = vector.extract_strided_slice %283 {offsets = [0, 0, 2], sizes = [3, 8, 14], strides = [1, 1, 1]} : vector<3x8x16xf32> to vector<3x8x14xf32>
    %297 = tpu.concatenate %296, %295 in 2 : vector<3x8x14xf32>, vector<3x8x2xf32> -> vector<3x8x16xf32>
    %298 = vector.extract_strided_slice %283 {offsets = [0, 0, 0], sizes = [3, 8, 14], strides = [1, 1, 1]} : vector<3x8x16xf32> to vector<3x8x14xf32>
    %299 = tpu.concatenate %295, %298 in 2 : vector<3x8x2xf32>, vector<3x8x14xf32> -> vector<3x8x16xf32>
    %300 = arith.addf %297, %299 : vector<3x8x16xf32>
    %cst_84 = arith.constant 0.109360687 : f32
    %301 = vector.broadcast %cst_84 : f32 to vector<3x8x16xf32>
    %302 = arith.mulf %301, %300 : vector<3x8x16xf32>
    %303 = arith.addf %294, %302 : vector<3x8x16xf32>
    %cst_85 = arith.constant 0.000000e+00 : f32
    %304 = vector.broadcast %cst_85 : f32 to vector<3x8x3xf32>
    %305 = vector.extract_strided_slice %283 {offsets = [0, 0, 3], sizes = [3, 8, 13], strides = [1, 1, 1]} : vector<3x8x16xf32> to vector<3x8x13xf32>
    %306 = tpu.concatenate %305, %304 in 2 : vector<3x8x13xf32>, vector<3x8x3xf32> -> vector<3x8x16xf32>
    %307 = vector.extract_strided_slice %283 {offsets = [0, 0, 0], sizes = [3, 8, 13], strides = [1, 1, 1]} : vector<3x8x16xf32> to vector<3x8x13xf32>
    %308 = tpu.concatenate %304, %307 in 2 : vector<3x8x3xf32>, vector<3x8x13xf32> -> vector<3x8x16xf32>
    %309 = arith.addf %306, %308 : vector<3x8x16xf32>
    %cst_86 = arith.constant 0.0360007733 : f32
    %310 = vector.broadcast %cst_86 : f32 to vector<3x8x16xf32>
    %311 = arith.mulf %310, %309 : vector<3x8x16xf32>
    %312 = arith.addf %303, %311 : vector<3x8x16xf32>
    %cst_87 = arith.constant 0.000000e+00 : f32
    %313 = vector.broadcast %cst_87 : f32 to vector<3x8x4xf32>
    %314 = vector.extract_strided_slice %283 {offsets = [0, 0, 4], sizes = [3, 8, 12], strides = [1, 1, 1]} : vector<3x8x16xf32> to vector<3x8x12xf32>
    %315 = tpu.concatenate %314, %313 in 2 : vector<3x8x12xf32>, vector<3x8x4xf32> -> vector<3x8x16xf32>
    %316 = vector.extract_strided_slice %283 {offsets = [0, 0, 0], sizes = [3, 8, 12], strides = [1, 1, 1]} : vector<3x8x16xf32> to vector<3x8x12xf32>
    %317 = tpu.concatenate %313, %316 in 2 : vector<3x8x4xf32>, vector<3x8x12xf32> -> vector<3x8x16xf32>
    %318 = arith.addf %315, %317 : vector<3x8x16xf32>
    %cst_88 = arith.constant 0.00759875821 : f32
    %319 = vector.broadcast %cst_88 : f32 to vector<3x8x16xf32>
    %320 = arith.mulf %319, %318 : vector<3x8x16xf32>
    %321 = arith.addf %312, %320 : vector<3x8x16xf32>
    %cst_89 = arith.constant 0.000000e+00 : f32
    %322 = vector.broadcast %cst_89 : f32 to vector<3x8x5xf32>
    %323 = vector.extract_strided_slice %283 {offsets = [0, 0, 5], sizes = [3, 8, 11], strides = [1, 1, 1]} : vector<3x8x16xf32> to vector<3x8x11xf32>
    %324 = tpu.concatenate %323, %322 in 2 : vector<3x8x11xf32>, vector<3x8x5xf32> -> vector<3x8x16xf32>
    %325 = vector.extract_strided_slice %283 {offsets = [0, 0, 0], sizes = [3, 8, 11], strides = [1, 1, 1]} : vector<3x8x16xf32> to vector<3x8x11xf32>
    %326 = tpu.concatenate %322, %325 in 2 : vector<3x8x5xf32>, vector<3x8x11xf32> -> vector<3x8x16xf32>
    %327 = arith.addf %324, %326 : vector<3x8x16xf32>
    %cst_90 = arith.constant 0.00102838012 : f32
    %328 = vector.broadcast %cst_90 : f32 to vector<3x8x16xf32>
    %329 = arith.mulf %328, %327 : vector<3x8x16xf32>
    %330 = arith.addf %321, %329 : vector<3x8x16xf32>
    %331 = arith.mulf %87, %87 : vector<3x8x16xf32>
    %332 = arith.mulf %147, %147 : vector<3x8x16xf32>
    %333 = arith.mulf %87, %147 : vector<3x8x16xf32>
    %334 = arith.subf %208, %331 : vector<3x8x16xf32>
    %335 = arith.subf %269, %332 : vector<3x8x16xf32>
    %336 = arith.subf %330, %333 : vector<3x8x16xf32>
    %cst_91 = arith.constant 2.000000e+00 : f32
    %337 = vector.broadcast %cst_91 : f32 to vector<3x8x16xf32>
    %338 = arith.mulf %337, %333 : vector<3x8x16xf32>
    %cst_92 = arith.constant 9.99999974E-5 : f32
    %339 = vector.broadcast %cst_92 : f32 to vector<3x8x16xf32>
    %340 = arith.addf %338, %339 : vector<3x8x16xf32>
    %cst_93 = arith.constant 2.000000e+00 : f32
    %341 = vector.broadcast %cst_93 : f32 to vector<3x8x16xf32>
    %342 = arith.mulf %341, %336 : vector<3x8x16xf32>
    %cst_94 = arith.constant 8.99999984E-4 : f32
    %343 = vector.broadcast %cst_94 : f32 to vector<3x8x16xf32>
    %344 = arith.addf %342, %343 : vector<3x8x16xf32>
    %345 = arith.mulf %340, %344 : vector<3x8x16xf32>
    %346 = arith.addf %331, %332 : vector<3x8x16xf32>
    %cst_95 = arith.constant 9.99999974E-5 : f32
    %347 = vector.broadcast %cst_95 : f32 to vector<3x8x16xf32>
    %348 = arith.addf %346, %347 : vector<3x8x16xf32>
    %349 = arith.addf %334, %335 : vector<3x8x16xf32>
    %cst_96 = arith.constant 8.99999984E-4 : f32
    %350 = vector.broadcast %cst_96 : f32 to vector<3x8x16xf32>
    %351 = arith.addf %349, %350 : vector<3x8x16xf32>
    %352 = arith.mulf %348, %351 : vector<3x8x16xf32>
    %353 = tpu.reciprocal %352 {approx = true} : vector<3x8x16xf32> -> vector<3x8x16xf32>
    %354 = arith.mulf %345, %353 : vector<3x8x16xf32>
    %355 = vector.shape_cast %354 : vector<3x8x16xf32> to vector<1x3x8x16xf32>
    %cst_97 = arith.constant dense<0.000000e+00> : vector<1xf32>
    %356 = vector.multi_reduction <add>, %355, %cst_97 [1, 2, 3] : vector<1x3x8x16xf32> to vector<1xf32>
    %357 = vector.shape_cast %356 : vector<1xf32> to vector<1x1x1x1xf32>
    %358 = vector.extract %357[0, 0, 0, 0] : f32 from vector<1x1x1x1xf32>
    %359 = arith.subf %5, %6 : vector<3x8x16xf32>
    %360 = math.absf %359 : vector<3x8x16xf32>
    %361 = vector.shape_cast %360 : vector<3x8x16xf32> to vector<1x3x8x16xf32>
    %cst_98 = arith.constant dense<0.000000e+00> : vector<1xf32>
    %362 = vector.multi_reduction <add>, %361, %cst_98 [1, 2, 3] : vector<1x3x8x16xf32> to vector<1xf32>
    %363 = vector.shape_cast %362 : vector<1xf32> to vector<1x1x1x1xf32>
    %364 = vector.extract %363[0, 0, 0, 0] : f32 from vector<1x1x1x1xf32>
    %c0_99 = arith.constant 0 : index
    %c0_100 = arith.constant 0 : index
    %c0_101 = arith.constant 0 : index
    %365 = vector.load %arg8[%c0_99, %c0_100, %c0_101] : memref<3x8x16xf32, #tpu.memory_space<vmem>>, vector<3x8x16xf32>
    %c0_102 = arith.constant 0 : index
    %c0_103 = arith.constant 0 : index
    %c0_104 = arith.constant 0 : index
    %366 = vector.load %arg9[%c0_102, %c0_103, %c0_104] : memref<3x8x16xf32, #tpu.memory_space<vmem>>, vector<3x8x16xf32>
    %367 = arith.mulf %365, %366 : vector<3x8x16xf32>
    %368 = vector.shape_cast %367 : vector<3x8x16xf32> to vector<1x3x8x16xf32>
    %cst_105 = arith.constant dense<0.000000e+00> : vector<1xf32>
    %369 = vector.multi_reduction <add>, %368, %cst_105 [1, 2, 3] : vector<1x3x8x16xf32> to vector<1xf32>
    %370 = vector.shape_cast %369 : vector<1xf32> to vector<1x1x1x1xf32>
    %371 = vector.extract %370[0, 0, 0, 0] : f32 from vector<1x1x1x1xf32>
    %c0_106 = arith.constant 0 : index
    %c0_107 = arith.constant 0 : index
    %c0_108 = arith.constant 0 : index
    %372 = vector.load %arg10[%c0_106, %c0_107, %c0_108] : memref<1x8x16xf32, #tpu.memory_space<vmem>>, vector<1x8x16xf32>
    %373 = vector.shape_cast %372 : vector<1x8x16xf32> to vector<1x1x8x16xf32>
    %cst_109 = arith.constant dense<0.000000e+00> : vector<1xf32>
    %374 = vector.multi_reduction <add>, %373, %cst_109 [1, 2, 3] : vector<1x1x8x16xf32> to vector<1xf32>
    %375 = vector.shape_cast %374 : vector<1xf32> to vector<1x1x1x1xf32>
    %376 = vector.extract %375[0, 0, 0, 0] : f32 from vector<1x1x1x1xf32>
    %377 = tpu.iota {dimensions = array<i32: 1>} : vector<1x8xi32>
    %c0_i32_110 = arith.constant 0 : i32
    %378 = vector.broadcast %c0_i32_110 : i32 to vector<1x8xi32>
    %379 = arith.cmpi eq, %377, %378 : vector<1x8xi32>
    %cst_111 = arith.constant 0.000000e+00 : f32
    %380 = vector.broadcast %364 : f32 to vector<1x8xf32>
    %381 = vector.broadcast %cst_111 : f32 to vector<1x8xf32>
    %382 = arith.select %379, %380, %381 : vector<1x8xi1>, vector<1x8xf32>
    %c1_i32_112 = arith.constant 1 : i32
    %383 = vector.broadcast %c1_i32_112 : i32 to vector<1x8xi32>
    %384 = arith.cmpi eq, %377, %383 : vector<1x8xi32>
    %cst_113 = arith.constant 0.000000e+00 : f32
    %385 = vector.broadcast %358 : f32 to vector<1x8xf32>
    %386 = vector.broadcast %cst_113 : f32 to vector<1x8xf32>
    %387 = arith.select %384, %385, %386 : vector<1x8xi1>, vector<1x8xf32>
    %388 = arith.addf %382, %387 : vector<1x8xf32>
    %c2_i32 = arith.constant 2 : i32
    %389 = vector.broadcast %c2_i32 : i32 to vector<1x8xi32>
    %390 = arith.cmpi eq, %377, %389 : vector<1x8xi32>
    %cst_114 = arith.constant 0.000000e+00 : f32
    %391 = vector.broadcast %371 : f32 to vector<1x8xf32>
    %392 = vector.broadcast %cst_114 : f32 to vector<1x8xf32>
    %393 = arith.select %390, %391, %392 : vector<1x8xi1>, vector<1x8xf32>
    %394 = arith.addf %388, %393 : vector<1x8xf32>
    %c3_i32 = arith.constant 3 : i32
    %395 = vector.broadcast %c3_i32 : i32 to vector<1x8xi32>
    %396 = arith.cmpi eq, %377, %395 : vector<1x8xi32>
    %cst_115 = arith.constant 0.000000e+00 : f32
    %397 = vector.broadcast %376 : f32 to vector<1x8xf32>
    %398 = vector.broadcast %cst_115 : f32 to vector<1x8xf32>
    %399 = arith.select %396, %397, %398 : vector<1x8xi1>, vector<1x8xf32>
    %400 = arith.addf %394, %399 : vector<1x8xf32>
    %c0_116 = arith.constant 0 : index
    %c0_117 = arith.constant 0 : index
    %401 = vector.load %arg13[%c0_116, %c0_117] : memref<1x8xf32, #tpu.memory_space<vmem>>, vector<1x8xf32>
    %402 = arith.addf %401, %400 : vector<1x8xf32>
    %c0_118 = arith.constant 0 : index
    %c0_119 = arith.constant 0 : index
    %403 = vector.load %arg13[%c0_118, %c0_119] : memref<1x8xf32, #tpu.memory_space<vmem>>, vector<1x8xf32>
    tpu.vector_store %arg13[%c0_118, %c0_119], %402 {strides = array<i32>} : memref<1x8xf32, #tpu.memory_space<vmem>>, vector<1x8xf32>,
    %c0_i32_120 = arith.constant 0 : i32
    %404 = arith.cmpi eq, %arg1, %c0_i32_120 : i32
    %405 = arith.extui %404 : i1 to i32
    %c0_i32_121 = arith.constant 0 : i32
    %406 = arith.cmpi ne, %405, %c0_i32_121 : i32
    scf.if %406 {
      %c0_122 = arith.constant 0 : index
      %c0_123 = arith.constant 0 : index
      %407 = vector.load %arg13[%c0_122, %c0_123] : memref<1x8xf32, #tpu.memory_space<vmem>>, vector<1x8xf32>
      %408 = vector.shape_cast %407 : vector<1x8xf32> to vector<1x1x8xf32>
      %c0_124 = arith.constant 0 : index
      %c0_125 = arith.constant 0 : index
      %c0_126 = arith.constant 0 : index
      %409 = vector.load %arg12[%c0_124, %c0_125, %c0_126] : memref<1x1x8xf32, #tpu.memory_space<vmem>>, vector<1x1x8xf32>
      tpu.vector_store %arg12[%c0_124, %c0_125, %c0_126], %408 {strides = array<i32>} : memref<1x1x8xf32, #tpu.memory_space<vmem>>, vector<1x1x8xf32>,
    } else {
    }
    return
  }
  func.func @transform_0(%arg0: i32, %arg1: i32) -> (i32, i32, i32) {
    %c1_i32 = arith.constant 1 : i32
    %0 = arith.muli %arg0, %c1_i32 : i32
    %1 = arith.addi %0, %arg1 : i32
    %c0_i32 = arith.constant 0 : i32
    %c0_i32_0 = arith.constant 0 : i32
    %c0_i32_1 = arith.constant 0 : i32
    return %c0_i32, %1, %c0_i32_0 : i32, i32, i32
  }
  func.func @transform_1(%arg0: i32, %arg1: i32) -> (i32, i32, i32) {
    %c1_i32 = arith.constant 1 : i32
    %0 = arith.muli %arg0, %c1_i32 : i32
    %1 = arith.addi %0, %arg1 : i32
    %c1_i32_0 = arith.constant 1 : i32
    %2 = arith.muli %1, %c1_i32_0 : i32
    %c1_i32_1 = arith.constant 1 : i32
    %3 = arith.subi %2, %c1_i32_1 : i32
    %c0_i32 = arith.constant 0 : i32
    %4 = arith.maxsi %3, %c0_i32 : i32
    %c0_i32_2 = arith.constant 0 : i32
    %c0_i32_3 = arith.constant 0 : i32
    %c0_i32_4 = arith.constant 0 : i32
    return %c0_i32_2, %4, %c0_i32_3 : i32, i32, i32
  }
  func.func @transform_2(%arg0: i32, %arg1: i32) -> (i32, i32, i32) {
    %c1_i32 = arith.constant 1 : i32
    %0 = arith.muli %arg0, %c1_i32 : i32
    %1 = arith.addi %0, %arg1 : i32
    %c1_i32_0 = arith.constant 1 : i32
    %2 = arith.addi %1, %c1_i32_0 : i32
    %c1_i32_1 = arith.constant 1 : i32
    %3 = arith.muli %2, %c1_i32_1 : i32
    %c1_i32_2 = arith.constant 1 : i32
    %4 = arith.minsi %3, %c1_i32_2 : i32
    %c0_i32 = arith.constant 0 : i32
    %c0_i32_3 = arith.constant 0 : i32
    %c0_i32_4 = arith.constant 0 : i32
    return %c0_i32, %4, %c0_i32_3 : i32, i32, i32
  }
  func.func @transform_3(%arg0: i32, %arg1: i32) -> (i32, i32, i32) {
    %c1_i32 = arith.constant 1 : i32
    %0 = arith.muli %arg0, %c1_i32 : i32
    %1 = arith.addi %0, %arg1 : i32
    %c0_i32 = arith.constant 0 : i32
    %c0_i32_0 = arith.constant 0 : i32
    %c0_i32_1 = arith.constant 0 : i32
    return %c0_i32, %1, %c0_i32_0 : i32, i32, i32
  }
  func.func @transform_4(%arg0: i32, %arg1: i32) -> (i32, i32, i32) {
    %c1_i32 = arith.constant 1 : i32
    %0 = arith.muli %arg0, %c1_i32 : i32
    %1 = arith.addi %0, %arg1 : i32
    %c1_i32_0 = arith.constant 1 : i32
    %2 = arith.muli %1, %c1_i32_0 : i32
    %c1_i32_1 = arith.constant 1 : i32
    %3 = arith.subi %2, %c1_i32_1 : i32
    %c0_i32 = arith.constant 0 : i32
    %4 = arith.maxsi %3, %c0_i32 : i32
    %c0_i32_2 = arith.constant 0 : i32
    %c0_i32_3 = arith.constant 0 : i32
    %c0_i32_4 = arith.constant 0 : i32
    return %c0_i32_2, %4, %c0_i32_3 : i32, i32, i32
  }
  func.func @transform_5(%arg0: i32, %arg1: i32) -> (i32, i32, i32) {
    %c1_i32 = arith.constant 1 : i32
    %0 = arith.muli %arg0, %c1_i32 : i32
    %1 = arith.addi %0, %arg1 : i32
    %c1_i32_0 = arith.constant 1 : i32
    %2 = arith.addi %1, %c1_i32_0 : i32
    %c1_i32_1 = arith.constant 1 : i32
    %3 = arith.muli %2, %c1_i32_1 : i32
    %c1_i32_2 = arith.constant 1 : i32
    %4 = arith.minsi %3, %c1_i32_2 : i32
    %c0_i32 = arith.constant 0 : i32
    %c0_i32_3 = arith.constant 0 : i32
    %c0_i32_4 = arith.constant 0 : i32
    return %c0_i32, %4, %c0_i32_3 : i32, i32, i32
  }
  func.func @transform_6(%arg0: i32, %arg1: i32) -> (i32, i32, i32) {
    %c1_i32 = arith.constant 1 : i32
    %0 = arith.muli %arg0, %c1_i32 : i32
    %1 = arith.addi %0, %arg1 : i32
    %c0_i32 = arith.constant 0 : i32
    %c0_i32_0 = arith.constant 0 : i32
    %c0_i32_1 = arith.constant 0 : i32
    return %c0_i32, %1, %c0_i32_0 : i32, i32, i32
  }
  func.func @transform_7(%arg0: i32, %arg1: i32) -> (i32, i32, i32) {
    %c1_i32 = arith.constant 1 : i32
    %0 = arith.muli %arg0, %c1_i32 : i32
    %1 = arith.addi %0, %arg1 : i32
    %c0_i32 = arith.constant 0 : i32
    %c0_i32_0 = arith.constant 0 : i32
    %c0_i32_1 = arith.constant 0 : i32
    return %c0_i32, %1, %c0_i32_0 : i32, i32, i32
  }
  func.func @transform_8(%arg0: i32, %arg1: i32) -> (i32, i32, i32) {
    %c1_i32 = arith.constant 1 : i32
    %0 = arith.muli %arg0, %c1_i32 : i32
    %1 = arith.addi %0, %arg1 : i32
    %c0_i32 = arith.constant 0 : i32
    %c0_i32_0 = arith.constant 0 : i32
    %c0_i32_1 = arith.constant 0 : i32
    return %c0_i32, %1, %c0_i32_0 : i32, i32, i32
  }
  func.func @transform_9(%arg0: i32, %arg1: i32) -> (i32, i32) {
    %c0_i32 = arith.constant 0 : i32
    %c0_i32_0 = arith.constant 0 : i32
    %c0_i32_1 = arith.constant 0 : i32
    return %c0_i32, %c0_i32_0 : i32, i32
  }
  func.func @transform_10(%arg0: i32, %arg1: i32) -> (i32, i32, i32) {
    %c0_i32 = arith.constant 0 : i32
    %c0_i32_0 = arith.constant 0 : i32
    %c0_i32_1 = arith.constant 0 : i32
    return %arg0, %c0_i32, %c0_i32_0 : i32, i32, i32
  }
}

</mosaic_0001>

<llo_original>
// kernel: loss_stats_pallas.1
$region0: #{loss_stats_pallas.1}
  #allocation0 [shape = 'u32[]', space=smem, size = 0x4, offset = 0x4, fixed_abs, tag = 'smem constant byte address 0x4 - core index']
  #allocation1 [shape = 'u32[144,128]{1,0:T(1,128)}', space=vmem, size = 0x12000, scoped, tag = 'internal scratch']
  #allocation2 [shape = 'f32[1,8]{1,0:T(1,128)}', space=vmem, size = 0x200, scoped, tag = 'scratch operand']
  %s0 = inlined_call_operand.vmem [shape: f32[3,16,16], index: 0, kind: input, shape index: {}, may-alias: {0,1,2}]
  %s1 = inlined_call_operand.vmem [shape: f32[3,16,16], index: 1, kind: input, shape index: {}, may-alias: {0,1,2}]
  %s2 = inlined_call_operand.vmem [shape: f32[3,16,16], index: 2, kind: input, shape index: {}, may-alias: {0,1,2}]
  %s3 = inlined_call_operand.vmem [shape: f32[3,16,16], index: 3, kind: input, shape index: {}, may-alias: {3,4,5}]
  %s4 = inlined_call_operand.vmem [shape: f32[3,16,16], index: 4, kind: input, shape index: {}, may-alias: {3,4,5}]
  %s5 = inlined_call_operand.vmem [shape: f32[3,16,16], index: 5, kind: input, shape index: {}, may-alias: {3,4,5}]
  %s6 = inlined_call_operand.vmem [shape: f32[3,16,16], index: 6, kind: input, shape index: {}]
  %s7 = inlined_call_operand.vmem [shape: f32[3,16,16], index: 7, kind: input, shape index: {}]
  %s8 = inlined_call_operand.vmem [shape: f32[1,16,16], index: 8, kind: input, shape index: {}]
  %s9 = inlined_call_operand.vmem [shape: f32[8,24], index: 9, kind: input, shape index: {}]
  %s10 = inlined_call_operand.vmem [shape: f32[2,1,8], index: 10, kind: output, shape index: {}]
  %s11 = sld [smem:[#allocation0]]
  $region385: #{loss_stats_pallas.1} parent=0
    _
  %s13 = ssub.s32 1, %s11
  %s14 = scalar_select 0, %s13, %s11
  $region1: #{loss_stats_pallas.1} parent=0
    #allocation3 [shape = 'u8[24576]{0}', space=vmem, size = 0x6000, scoped, tag = 'input window, operand 0']
    #allocation4 [shape = 'u8[24576]{0}', space=vmem, size = 0x6000, scoped, tag = 'input window, operand 1']
    #allocation5 [shape = 'u8[24576]{0}', space=vmem, size = 0x6000, scoped, tag = 'input window, operand 2']
    #allocation6 [shape = 'u8[24576]{0}', space=vmem, size = 0x6000, scoped, tag = 'input window, operand 3']
    #allocation7 [shape = 'u8[24576]{0}', space=vmem, size = 0x6000, scoped, tag = 'input window, operand 4']
    #allocation8 [shape = 'u8[24576]{0}', space=vmem, size = 0x6000, scoped, tag = 'input window, operand 5']
    #allocation9 [shape = 'u8[24576]{0}', space=vmem, size = 0x6000, scoped, tag = 'input window, operand 6']
    #allocation10 [shape = 'u8[24576]{0}', space=vmem, size = 0x6000, scoped, tag = 'input window, operand 7']
    loop: start=0, step=1, limit=4
    $region2: #{loss_stats_pallas.1} parent=1 // loop_pre_header
      _
    $region3: #{loss_stats_pallas.1} parent=1 // loop_header
      %s16 = sphi 0, %s20
      %p17 = scmp.ge.s32.totalorder %s16, 4
      %s23 = sphi 0, %s35
      %s24 = sphi 0, %s31
      %s25 = sphi 0, %s23
      %s26 = sphi 0, %s24
      %s27 = sphi 0, %s25
      %s28 = sphi 0, %s26
      %s40 = sphi 0, %s42
      %s43 = sphi 0, %s40
      %s44 = sphi 0, %s43
      %s60 = sphi 0, %s44
      %s74 = sphi 0, %s76
      %s77 = sphi 0, %s74
      %s78 = sphi 0, %s77
      %s94 = sphi 0, %s78
      %s108 = sphi 0, %s110
      %s111 = sphi 0, %s108
      %s112 = sphi 0, %s111
      %s128 = sphi 0, %s112
      %s136 = sphi 0, %s138
      %s139 = sphi 0, %s136
      %s140 = sphi 0, %s139
      %s156 = sphi 0, %s140
      %s170 = sphi 0, %s172
      %s173 = sphi 0, %s170
      %s174 = sphi 0, %s173
      %s190 = sphi 0, %s174
      %s204 = sphi 0, %s206
      %s207 = sphi 0, %s204
      %s208 = sphi 0, %s207
      %s224 = sphi 0, %s208
      %s232 = sphi 0, %s234
      %s235 = sphi 0, %s232
      %s236 = sphi 0, %s235
      %s252 = sphi 0, %s236
      %s260 = sphi 0, %s262
      %s263 = sphi 0, %s260
      %s264 = sphi 0, %s263
      %s280 = sphi 0, %s264
      %s288 = sphi 0, %s290
      %s291 = sphi 0, %s288
      %s292 = sphi 0, %s291
      %s308 = sphi 0, %s292
      %s312 = sphi 0, %s312
      %s314 = sphi 0, %s312
      %s315 = sphi 0, %s314
      %s329 = sphi 0, %s315
      %s335 = sphi 0, %s337
      %s338 = sphi 0, %s335
      %s339 = sphi 0, %s338
      %s355 = sphi 0, %s339
    $region4: #{loss_stats_pallas.1} parent=1 // loop_header_branch
      %19 = sbr.rel (%p17) target = $region8
    $region5: #{loss_stats_pallas.1} parent=1 // loop_body
      %s21 = ssub.s32 %s16, 1
      %s22 = ssub.s32 %s16, 2
      %s29 = sadd.s32 1, %s24
      %p30 = scmp.ge.s32.totalorder %s29, 1
      %s31 = scalar_select %p30, 0, %s29
      %s32 = sadd.s32 1, %s23
      %s33 = scalar_select %p30, %s32, %s23
      %p34 = scmp.ge.s32.totalorder %s33, 2
      %s35 = scalar_select %p34, 0, %s33
      %s36 = sadd.s32 %s23, %s24
      %s37 = sadd.s32 %s35, %s31
      %s38 = ssub.s32 %s36, %s37
      %p39 = scmp.eq.s32.totalorder %s38, 0
      %s41 = sadd.s32 %s40, 1
      %s42 = scalar_select %p39, %s40, %s41
      %p45 = pneg %p39
      %p46 = scmp.eq.s32.totalorder %s16, 1
      %p47 = por %p45, %p46
      %p48 = scmp.ne.s32.totalorder %s40, %s43
      %p49 = scmp.eq.s32.totalorder %s16, 0
      %p50 = por %p48, %p49
      %p51 = scmp.ne.s32.totalorder %s40, %s43
      %p52 = scmp.eq.s32.totalorder %s21, 1
      %p53 = por %p51, %p52
      %p54 = scmp.ne.s32.totalorder %s43, %s44
      %p55 = scmp.eq.s32.totalorder %s21, 0
      %p56 = por %p54, %p55
      %p57 = scmp.ne.s32.totalorder %s43, %s44
      %p58 = scmp.eq.s32.totalorder %s22, 1
      %p59 = por %p57, %p58
      %p61 = scmp.ne.s32.totalorder %s44, %s60
      %p62 = scmp.eq.s32.totalorder %s22, 0
      %p63 = por %p61, %p62
      %s64 = sadd.s32 %s23, %s24
      %s65 = ssub.s32 %s64, 1
      %p66 = scmp.gt.s32.totalorder %s65, 0
      %s67 = scalar_select %p66, %s65, 0
      %s68 = sadd.s32 %s35, %s31
      %s69 = ssub.s32 %s68, 1
      %p70 = scmp.gt.s32.totalorder %s69, 0
      %s71 = scalar_select %p70, %s69, 0
      %s72 = ssub.s32 %s67, %s71
      %p73 = scmp.eq.s32.totalorder %s72, 0
      %s75 = sadd.s32 %s74, 1
      %s76 = scalar_select %p73, %s74, %s75
      %p79 = pneg %p73
      %p80 = scmp.eq.s32.totalorder %s16, 1
      %p81 = por %p79, %p80
      %p82 = scmp.ne.s32.totalorder %s74, %s77
      %p83 = scmp.eq.s32.totalorder %s16, 0
      %p84 = por %p82, %p83
      %p85 = scmp.ne.s32.totalorder %s74, %s77
      %p86 = scmp.eq.s32.totalorder %s21, 1
      %p87 = por %p85, %p86
      %p88 = scmp.ne.s32.totalorder %s77, %s78
      %p89 = scmp.eq.s32.totalorder %s21, 0
      %p90 = por %p88, %p89
      %p91 = scmp.ne.s32.totalorder %s77, %s78
      %p92 = scmp.eq.s32.totalorder %s22, 1
      %p93 = por %p91, %p92
      %p95 = scmp.ne.s32.totalorder %s78, %s94
      %p96 = scmp.eq.s32.totalorder %s22, 0
      %p97 = por %p95, %p96
      %s98 = sadd.s32 %s23, %s24
      %s99 = sadd.s32 %s98, 1
      %p100 = scmp.lt.s32.totalorder %s99, 1
      %s101 = scalar_select %p100, %s99, 1
      %s102 = sadd.s32 %s35, %s31
      %s103 = sadd.s32 %s102, 1
      %p104 = scmp.lt.s32.totalorder %s103, 1
      %s105 = scalar_select %p104, %s103, 1
      %s106 = ssub.s32 %s101, %s105
      %p107 = scmp.eq.s32.totalorder %s106, 0
      %s109 = sadd.s32 %s108, 1
      %s110 = scalar_select %p107, %s108, %s109
      %p113 = pneg %p107
      %p114 = scmp.eq.s32.totalorder %s16, 1
      %p115 = por %p113, %p114
      %p116 = scmp.ne.s32.totalorder %s108, %s111
      %p117 = scmp.eq.s32.totalorder %s16, 0
      %p118 = por %p116, %p117
      %p119 = scmp.ne.s32.totalorder %s108, %s111
      %p120 = scmp.eq.s32.totalorder %s21, 1
      %p121 = por %p119, %p120
      %p122 = scmp.ne.s32.totalorder %s111, %s112
      %p123 = scmp.eq.s32.totalorder %s21, 0
      %p124 = por %p122, %p123
      %p125 = scmp.ne.s32.totalorder %s111, %s112
      %p126 = scmp.eq.s32.totalorder %s22, 1
      %p127 = por %p125, %p126
      %p129 = scmp.ne.s32.totalorder %s112, %s128
      %p130 = scmp.eq.s32.totalorder %s22, 0
      %p131 = por %p129, %p130
      %s132 = sadd.s32 %s23, %s24
      %s133 = sadd.s32 %s35, %s31
      %s134 = ssub.s32 %s132, %s133
      %p135 = scmp.eq.s32.totalorder %s134, 0
      %s137 = sadd.s32 %s136, 1
      %s138 = scalar_select %p135, %s136, %s137
      %p141 = pneg %p135
      %p142 = scmp.eq.s32.totalorder %s16, 1
      %p143 = por %p141, %p142
      %p144 = scmp.ne.s32.totalorder %s136, %s139
      %p145 = scmp.eq.s32.totalorder %s16, 0
      %p146 = por %p144, %p145
      %p147 = scmp.ne.s32.totalorder %s136, %s139
      %p148 = scmp.eq.s32.totalorder %s21, 1
      %p149 = por %p147, %p148
      %p150 = scmp.ne.s32.totalorder %s139, %s140
      %p151 = scmp.eq.s32.totalorder %s21, 0
      %p152 = por %p150, %p151
      %p153 = scmp.ne.s32.totalorder %s139, %s140
      %p154 = scmp.eq.s32.totalorder %s22, 1
      %p155 = por %p153, %p154
      %p157 = scmp.ne.s32.totalorder %s140, %s156
      %p158 = scmp.eq.s32.totalorder %s22, 0
      %p159 = por %p157, %p158
      %s160 = sadd.s32 %s23, %s24
      %s161 = ssub.s32 %s160, 1
      %p162 = scmp.gt.s32.totalorder %s161, 0
      %s163 = scalar_select %p162, %s161, 0
      %s164 = sadd.s32 %s35, %s31
      %s165 = ssub.s32 %s164, 1
      %p166 = scmp.gt.s32.totalorder %s165, 0
      %s167 = scalar_select %p166, %s165, 0
      %s168 = ssub.s32 %s163, %s167
      %p169 = scmp.eq.s32.totalorder %s168, 0
      %s171 = sadd.s32 %s170, 1
      %s172 = scalar_select %p169, %s170, %s171
      %p175 = pneg %p169
      %p176 = scmp.eq.s32.totalorder %s16, 1
      %p177 = por %p175, %p176
      %p178 = scmp.ne.s32.totalorder %s170, %s173
      %p179 = scmp.eq.s32.totalorder %s16, 0
      %p180 = por %p178, %p179
      %p181 = scmp.ne.s32.totalorder %s170, %s173
      %p182 = scmp.eq.s32.totalorder %s21, 1
      %p183 = por %p181, %p182
      %p184 = scmp.ne.s32.totalorder %s173, %s174
      %p185 = scmp.eq.s32.totalorder %s21, 0
      %p186 = por %p184, %p185
      %p187 = scmp.ne.s32.totalorder %s173, %s174
      %p188 = scmp.eq.s32.totalorder %s22, 1
      %p189 = por %p187, %p188
      %p191 = scmp.ne.s32.totalorder %s174, %s190
      %p192 = scmp.eq.s32.totalorder %s22, 0
      %p193 = por %p191, %p192
      %s194 = sadd.s32 %s23, %s24
      %s195 = sadd.s32 %s194, 1
      %p196 = scmp.lt.s32.totalorder %s195, 1
      %s197 = scalar_select %p196, %s195, 1
      %s198 = sadd.s32 %s35, %s31
      %s199 = sadd.s32 %s198, 1
      %p200 = scmp.lt.s32.totalorder %s199, 1
      %s201 = scalar_select %p200, %s199, 1
      %s202 = ssub.s32 %s197, %s201
      %p203 = scmp.eq.s32.totalorder %s202, 0
      %s205 = sadd.s32 %s204, 1
      %s206 = scalar_select %p203, %s204, %s205
      %p209 = pneg %p203
      %p210 = scmp.eq.s32.totalorder %s16, 1
      %p211 = por %p209, %p210
      %p212 = scmp.ne.s32.totalorder %s204, %s207
      %p213 = scmp.eq.s32.totalorder %s16, 0
      %p214 = por %p212, %p213
      %p215 = scmp.ne.s32.totalorder %s204, %s207
      %p216 = scmp.eq.s32.totalorder %s21, 1
      %p217 = por %p215, %p216
      %p218 = scmp.ne.s32.totalorder %s207, %s208
      %p219 = scmp.eq.s32.totalorder %s21, 0
      %p220 = por %p218, %p219
      %p221 = scmp.ne.s32.totalorder %s207, %s208
      %p222 = scmp.eq.s32.totalorder %s22, 1
      %p223 = por %p221, %p222
      %p225 = scmp.ne.s32.totalorder %s208, %s224
      %p226 = scmp.eq.s32.totalorder %s22, 0
      %p227 = por %p225, %p226
      %s228 = sadd.s32 %s23, %s24
      %s229 = sadd.s32 %s35, %s31
      %s230 = ssub.s32 %s228, %s229
      %p231 = scmp.eq.s32.totalorder %s230, 0
      %s233 = sadd.s32 %s232, 1
      %s234 = scalar_select %p231, %s232, %s233
      %p237 = pneg %p231
      %p238 = scmp.eq.s32.totalorder %s16, 1
      %p239 = por %p237, %p238
      %p240 = scmp.ne.s32.totalorder %s232, %s235
      %p241 = scmp.eq.s32.totalorder %s16, 0
      %p242 = por %p240, %p241
      %p243 = scmp.ne.s32.totalorder %s232, %s235
      %p244 = scmp.eq.s32.totalorder %s21, 1
      %p245 = por %p243, %p244
      %p246 = scmp.ne.s32.totalorder %s235, %s236
      %p247 = scmp.eq.s32.totalorder %s21, 0
      %p248 = por %p246, %p247
      %p249 = scmp.ne.s32.totalorder %s235, %s236
      %p250 = scmp.eq.s32.totalorder %s22, 1
      %p251 = por %p249, %p250
      %p253 = scmp.ne.s32.totalorder %s236, %s252
      %p254 = scmp.eq.s32.totalorder %s22, 0
      %p255 = por %p253, %p254
      %s256 = sadd.s32 %s23, %s24
      %s257 = sadd.s32 %s35, %s31
      %s258 = ssub.s32 %s256, %s257
      %p259 = scmp.eq.s32.totalorder %s258, 0
      %s261 = sadd.s32 %s260, 1
      %s262 = scalar_select %p259, %s260, %s261
      %p265 = pneg %p259
      %p266 = scmp.eq.s32.totalorder %s16, 1
      %p267 = por %p265, %p266
      %p268 = scmp.ne.s32.totalorder %s260, %s263
      %p269 = scmp.eq.s32.totalorder %s16, 0
      %p270 = por %p268, %p269
      %p271 = scmp.ne.s32.totalorder %s260, %s263
      %p272 = scmp.eq.s32.totalorder %s21, 1
      %p273 = por %p271, %p272
      %p274 = scmp.ne.s32.totalorder %s263, %s264
      %p275 = scmp.eq.s32.totalorder %s21, 0
      %p276 = por %p274, %p275
      %p277 = scmp.ne.s32.totalorder %s263, %s264
      %p278 = scmp.eq.s32.totalorder %s22, 1
      %p279 = por %p277, %p278
      %p281 = scmp.ne.s32.totalorder %s264, %s280
      %p282 = scmp.eq.s32.totalorder %s22, 0
      %p283 = por %p281, %p282
      %s284 = sadd.s32 %s23, %s24
      %s285 = sadd.s32 %s35, %s31
      %s286 = ssub.s32 %s284, %s285
      %p287 = scmp.eq.s32.totalorder %s286, 0
      %s289 = sadd.s32 %s288, 1
      %s290 = scalar_select %p287, %s288, %s289
      %p293 = pneg %p287
      %p294 = scmp.eq.s32.totalorder %s16, 1
      %p295 = por %p293, %p294
      %p296 = scmp.ne.s32.totalorder %s288, %s291
      %p297 = scmp.eq.s32.totalorder %s16, 0
      %p298 = por %p296, %p297
      %p299 = scmp.ne.s32.totalorder %s288, %s291
      %p300 = scmp.eq.s32.totalorder %s21, 1
      %p301 = por %p299, %p300
      %p302 = scmp.ne.s32.totalorder %s291, %s292
      %p303 = scmp.eq.s32.totalorder %s21, 0
      %p304 = por %p302, %p303
      %p305 = scmp.ne.s32.totalorder %s291, %s292
      %p306 = scmp.eq.s32.totalorder %s22, 1
      %p307 = por %p305, %p306
      %p309 = scmp.ne.s32.totalorder %s292, %s308
      %p310 = scmp.eq.s32.totalorder %s22, 0
      %p311 = por %p309, %p310
      %s313 = sadd.s32 %s312, 1
      %p316 = scmp.eq.s32.totalorder %s16, 1
      %p317 = scmp.ne.s32.totalorder %s312, %s314
      %p318 = scmp.eq.s32.totalorder %s16, 0
      %p319 = por %p317, %p318
      %p320 = scmp.ne.s32.totalorder %s312, %s314
      %p321 = scmp.eq.s32.totalorder %s21, 1
      %p322 = por %p320, %p321
      %p323 = scmp.ne.s32.totalorder %s314, %s315
      %p324 = scmp.eq.s32.totalorder %s21, 0
      %p325 = por %p323, %p324
      %p326 = scmp.ne.s32.totalorder %s314, %s315
      %p327 = scmp.eq.s32.totalorder %s22, 1
      %p328 = por %p326, %p327
      %p330 = scmp.ne.s32.totalorder %s315, %s329
      %p331 = scmp.eq.s32.totalorder %s22, 0
      %p332 = por %p330, %p331
      %s333 = ssub.s32 %s23, %s35
      %p334 = scmp.eq.s32.totalorder %s333, 0
      %s336 = sadd.s32 %s335, 1
      %s337 = scalar_select %p334, %s335, %s336
      %p340 = pneg %p334
      %p341 = scmp.eq.s32.totalorder %s16, 1
      %p342 = por %p340, %p341
      %p343 = scmp.ne.s32.totalorder %s335, %s338
      %p344 = scmp.eq.s32.totalorder %s16, 0
      %p345 = por %p343, %p344
      %p346 = scmp.ne.s32.totalorder %s335, %s338
      %p347 = scmp.eq.s32.totalorder %s21, 1
      %p348 = por %p346, %p347
      %p349 = scmp.ne.s32.totalorder %s338, %s339
      %p350 = scmp.eq.s32.totalorder %s21, 0
      %p351 = por %p349, %p350
      %p352 = scmp.ne.s32.totalorder %s338, %s339
      %p353 = scmp.eq.s32.totalorder %s22, 1
      %p354 = por %p352, %p353
      %p356 = scmp.ne.s32.totalorder %s339, %s355
      %p357 = scmp.eq.s32.totalorder %s22, 0
      %p358 = por %p356, %p357
      %p359 = scmp.le.s32.totalorder 1, %s16
      %p360 = scmp.lt.s32.totalorder %s16, 3
      %p361 = pnand %p359, %p360
      %p362 = pneg %p361
      // Predicated region
      $region9: #{loss_stats_pallas.1} parent=5 // pred_check
        _
      $region10: #{loss_stats_pallas.1} parent=5 // pred_check_branch
        %364 = sbr.rel (%p361) target = $region12
      $region11: #{loss_stats_pallas.1} parent=5 // pred_region
        %s365 = ssub.s32 %s16, 1
        // Predicated region
        $region13: #{loss_stats_pallas.1} parent=11 // pred_check
          %p366 = pneg %p325
        $region14: #{loss_stats_pallas.1} parent=11 // pred_check_branch
          %368 = sbr.rel (%p366) target = $region16
        $region15: #{loss_stats_pallas.1} parent=11 // pred_region
          _
        $region16: #{loss_stats_pallas.1} parent=11 // pred_fallthru
          _
      $region12: #{loss_stats_pallas.1} parent=5 // pred_fallthru
        _
      %p369 = scmp.lt.s32.totalorder %s16, 2
      // Predicated region
      $region17: #{loss_stats_pallas.1} parent=5 // pred_check
        %p370 = pneg %p369
      $region18: #{loss_stats_pallas.1} parent=5 // pred_check_branch
        %372 = sbr.rel (%p370) target = $region20
      $region19: #{loss_stats_pallas.1} parent=5 // pred_region
        // Predicated region
        $region21: #{loss_stats_pallas.1} parent=19 // pred_check
          %p373 = pneg %p50
        $region22: #{loss_stats_pallas.1} parent=19 // pred_check_branch
          %375 = sbr.rel (%p373) target = $region24
        $region23: #{loss_stats_pallas.1} parent=19 // pred_region
          %s376 = sand.u32 %s40, 1
          %s377 = sand.u32 %s40, 1
          %s378 = smul.addr %s377, 24
          %s379 = scalar_lea.vmem [#allocation3], %s378
          %s380 = sadd.s32 %s23, %s24
          %s381 = smul.addr %s380, 8
          %s382 = scalar_lea.vmem %s0, %s381
          // Predicated region
          $region25: #{loss_stats_pallas.1} parent=23 // pred_check
            _
          $region26: #{loss_stats_pallas.1} parent=23 // pred_check_branch
            %384 = sbr.rel (0) target = $region28
          $region27: #{loss_stats_pallas.1} parent=23 // pred_region
            // Predicated region
            $region29: #{loss_stats_pallas.1} parent=27 // pred_check
              _
            $region30: #{loss_stats_pallas.1} parent=27 // pred_check_branch
              %386 = sbr.rel (0) target = $region32
            $region31: #{loss_stats_pallas.1} parent=27 // pred_region
              // Predicated region
              $region44: #{loss_stats_pallas.1} parent=31 // pred_check
                _
              $region45: #{loss_stats_pallas.1} parent=31 // pred_check_branch
                %406 = sbr.rel (0) target = $region47
              $region46: #{loss_stats_pallas.1} parent=31 // pred_region
                loop: start=0, step=1, limit=1
                $region48: #{loss_stats_pallas.1} parent=46 // loop_pre_header
                  _
                $region49: #{loss_stats_pallas.1} parent=46 // loop_header
                  %s408 = sphi 0, %s412
                  %p409 = scmp.ge.s32.totalorder %s408, 1
                  %s413 = sphi %s382, %s382
                  %s414 = sphi %s379, %s379
                $region50: #{loss_stats_pallas.1} parent=46 // loop_header_branch
                  %411 = sbr.rel (%p409) target = $region54
                $region51: #{loss_stats_pallas.1} parent=46 // loop_body
                  %v415 = vld [vmem:[%s413] sm:$0xff]
                  %416 = vst [vmem:[%s414] sm:$0xff] %v415
                  %v417 = vld [vmem:[%s413 + $0x10] sm:$0xff]
                  %418 = vst [vmem:[%s414 + $0x8] sm:$0xff] %v417
                  %v419 = vld [vmem:[%s413 + $0x20] sm:$0xff]
                  %420 = vst [vmem:[%s414 + $0x10] sm:$0xff] %v419
                $region52: #{loss_stats_pallas.1} parent=46 // loop_footer
                  %s412 = sadd.s32 1, %s408
                $region53: #{loss_stats_pallas.1} parent=46 // loop_footer_branch
                  %407 = sbr.rel target = $region49
                $region54: #{loss_stats_pallas.1} parent=46 // loop_exit
                  _
              $region47: #{loss_stats_pallas.1} parent=31 // pred_fallthru
                _
              // Predicated region
              $region55: #{loss_stats_pallas.1} parent=31 // pred_check
                _
              $region56: #{loss_stats_pallas.1} parent=31 // pred_check_branch
                %422 = sbr.rel target = $region58
              $region57: #{loss_stats_pallas.1} parent=31 // pred_region
                _
              $region58: #{loss_stats_pallas.1} parent=31 // pred_fallthru
                _
            $region32: #{loss_stats_pallas.1} parent=27 // pred_fallthru
              _
            // Predicated region
            $region33: #{loss_stats_pallas.1} parent=27 // pred_check
              _
            $region34: #{loss_stats_pallas.1} parent=27 // pred_check_branch
              %388 = sbr.rel target = $region36
            $region35: #{loss_stats_pallas.1} parent=27 // pred_region
              %s390 = ssub.s32 256, 1
              loop: start=0, step=1, limit=1
              $region37: #{loss_stats_pallas.1} parent=35 // loop_pre_header
                _
              $region38: #{loss_stats_pallas.1} parent=35 // loop_header
                %s392 = sphi 0, %s396
                %p393 = scmp.ge.s32.totalorder %s392, 1
                %s397 = sphi %s382, %s382
                %s398 = sphi %s379, %s379
              $region39: #{loss_stats_pallas.1} parent=35 // loop_header_branch
                %395 = sbr.rel (%p393) target = $region43
              $region40: #{loss_stats_pallas.1} parent=35 // loop_body
                %v399 = vld [vmem:[%s397] sm:%s390]
                %400 = vst [vmem:[%s398] sm:%s390] %v399
                %v401 = vld [vmem:[%s397 + $0x10] sm:%s390]
                %402 = vst [vmem:[%s398 + $0x8] sm:%s390] %v401
                %v403 = vld [vmem:[%s397 + $0x20] sm:%s390]
                %404 = vst [vmem:[%s398 + $0x10] sm:%s390] %v403
              $region41: #{loss_stats_pallas.1} parent=35 // loop_footer
                %s396 = sadd.s32 1, %s392
              $region42: #{loss_stats_pallas.1} parent=35 // loop_footer_branch
                %391 = sbr.rel target = $region38
              $region43: #{loss_stats_pallas.1} parent=35 // loop_exit
                _
            $region36: #{loss_stats_pallas.1} parent=27 // pred_fallthru
              _
          $region28: #{loss_stats_pallas.1} parent=23 // pred_fallthru
            _
          %423 = vnop
        $region24: #{loss_stats_pallas.1} parent=19 // pred_fallthru
          _
        // Predicated region
        $region59: #{loss_stats_pallas.1} parent=19 // pred_check
          %p424 = pneg %p84
        $region60: #{loss_stats_pallas.1} parent=19 // pred_check_branch
          %426 = sbr.rel (%p424) target = $region62
        $region61: #{loss_stats_pallas.1} parent=19 // pred_region
          %s427 = sand.u32 %s74, 1
          %s428 = sand.u32 %s74, 1
          %s429 = smul.addr %s428, 24
          %s430 = scalar_lea.vmem [#allocation4], %s429
          %s431 = sadd.s32 %s23, %s24
          %s432 = ssub.s32 %s431, 1
          %p433 = scmp.gt.s32.totalorder %s432, 0
          %s434 = scalar_select %p433, %s432, 0
          %s435 = smul.addr %s434, 8
          %s436 = scalar_lea.vmem %s1, %s435
          // Predicated region
          $region63: #{loss_stats_pallas.1} parent=61 // pred_check
            _
          $region64: #{loss_stats_pallas.1} parent=61 // pred_check_branch
            %438 = sbr.rel (0) target = $region66
          $region65: #{loss_stats_pallas.1} parent=61 // pred_region
            // Predicated region
            $region67: #{loss_stats_pallas.1} parent=65 // pred_check
              _
            $region68: #{loss_stats_pallas.1} parent=65 // pred_check_branch
              %440 = sbr.rel (0) target = $region70
            $region69: #{loss_stats_pallas.1} parent=65 // pred_region
              // Predicated region
              $region82: #{loss_stats_pallas.1} parent=69 // pred_check
                _
              $region83: #{loss_stats_pallas.1} parent=69 // pred_check_branch
                %460 = sbr.rel (0) target = $region85
              $region84: #{loss_stats_pallas.1} parent=69 // pred_region
                loop: start=0, step=1, limit=1
                $region86: #{loss_stats_pallas.1} parent=84 // loop_pre_header
                  _
                $region87: #{loss_stats_pallas.1} parent=84 // loop_header
                  %s462 = sphi 0, %s466
                  %p463 = scmp.ge.s32.totalorder %s462, 1
                  %s467 = sphi %s436, %s436
                  %s468 = sphi %s430, %s430
                $region88: #{loss_stats_pallas.1} parent=84 // loop_header_branch
                  %465 = sbr.rel (%p463) target = $region92
                $region89: #{loss_stats_pallas.1} parent=84 // loop_body
                  %v469 = vld [vmem:[%s467] sm:$0xff]
                  %470 = vst [vmem:[%s468] sm:$0xff] %v469
                  %v471 = vld [vmem:[%s467 + $0x10] sm:$0xff]
                  %472 = vst [vmem:[%s468 + $0x8] sm:$0xff] %v471
                  %v473 = vld [vmem:[%s467 + $0x20] sm:$0xff]
                  %474 = vst [vmem:[%s468 + $0x10] sm:$0xff] %v473
                $region90: #{loss_stats_pallas.1} parent=84 // loop_footer
                  %s466 = sadd.s32 1, %s462
                $region91: #{loss_stats_pallas.1} parent=84 // loop_footer_branch
                  %461 = sbr.rel target = $region87
                $region92: #{loss_stats_pallas.1} parent=84 // loop_exit
                  _
              $region85: #{loss_stats_pallas.1} parent=69 // pred_fallthru
                _
              // Predicated region
              $region93: #{loss_stats_pallas.1} parent=69 // pred_check
                _
              $region94: #{loss_stats_pallas.1} parent=69 // pred_check_branch
                %476 = sbr.rel target = $region96
              $region95: #{loss_stats_pallas.1} parent=69 // pred_region
                _
              $region96: #{loss_stats_pallas.1} parent=69 // pred_fallthru
                _
            $region70: #{loss_stats_pallas.1} parent=65 // pred_fallthru
              _
            // Predicated region
            $region71: #{loss_stats_pallas.1} parent=65 // pred_check
              _
            $region72: #{loss_stats_pallas.1} parent=65 // pred_check_branch
              %442 = sbr.rel target = $region74
            $region73: #{loss_stats_pallas.1} parent=65 // pred_region
              %s444 = ssub.s32 256, 1
              loop: start=0, step=1, limit=1
              $region75: #{loss_stats_pallas.1} parent=73 // loop_pre_header
                _
              $region76: #{loss_stats_pallas.1} parent=73 // loop_header
                %s446 = sphi 0, %s450
                %p447 = scmp.ge.s32.totalorder %s446, 1
                %s451 = sphi %s436, %s436
                %s452 = sphi %s430, %s430
              $region77: #{loss_stats_pallas.1} parent=73 // loop_header_branch
                %449 = sbr.rel (%p447) target = $region81
              $region78: #{loss_stats_pallas.1} parent=73 // loop_body
                %v453 = vld [vmem:[%s451] sm:%s444]
                %454 = vst [vmem:[%s452] sm:%s444] %v453
                %v455 = vld [vmem:[%s451 + $0x10] sm:%s444]
                %456 = vst [vmem:[%s452 + $0x8] sm:%s444] %v455
                %v457 = vld [vmem:[%s451 + $0x20] sm:%s444]
                %458 = vst [vmem:[%s452 + $0x10] sm:%s444] %v457
              $region79: #{loss_stats_pallas.1} parent=73 // loop_footer
                %s450 = sadd.s32 1, %s446
              $region80: #{loss_stats_pallas.1} parent=73 // loop_footer_branch
                %445 = sbr.rel target = $region76
              $region81: #{loss_stats_pallas.1} parent=73 // loop_exit
                _
            $region74: #{loss_stats_pallas.1} parent=65 // pred_fallthru
              _
          $region66: #{loss_stats_pallas.1} parent=61 // pred_fallthru
            _
          %477 = vnop
        $region62: #{loss_stats_pallas.1} parent=19 // pred_fallthru
          _
        // Predicated region
        $region97: #{loss_stats_pallas.1} parent=19 // pred_check
          %p478 = pneg %p118
        $region98: #{loss_stats_pallas.1} parent=19 // pred_check_branch
          %480 = sbr.rel (%p478) target = $region100
        $region99: #{loss_stats_pallas.1} parent=19 // pred_region
          %s481 = sand.u32 %s108, 1
          %s482 = sand.u32 %s108, 1
          %s483 = smul.addr %s482, 24
          %s484 = scalar_lea.vmem [#allocation5], %s483
          %s485 = sadd.s32 %s23, %s24
          %s486 = sadd.s32 %s485, 1
          %p487 = scmp.lt.s32.totalorder %s486, 1
          %s488 = scalar_select %p487, %s486, 1
          %s489 = smul.addr %s488, 8
          %s490 = scalar_lea.vmem %s2, %s489
          // Predicated region
          $region101: #{loss_stats_pallas.1} parent=99 // pred_check
            _
          $region102: #{loss_stats_pallas.1} parent=99 // pred_check_branch
            %492 = sbr.rel (0) target = $region104
          $region103: #{loss_stats_pallas.1} parent=99 // pred_region
            // Predicated region
            $region105: #{loss_stats_pallas.1} parent=103 // pred_check
              _
            $region106: #{loss_stats_pallas.1} parent=103 // pred_check_branch
              %494 = sbr.rel (0) target = $region108
            $region107: #{loss_stats_pallas.1} parent=103 // pred_region
              // Predicated region
              $region120: #{loss_stats_pallas.1} parent=107 // pred_check
                _
              $region121: #{loss_stats_pallas.1} parent=107 // pred_check_branch
                %514 = sbr.rel (0) target = $region123
              $region122: #{loss_stats_pallas.1} parent=107 // pred_region
                loop: start=0, step=1, limit=1
                $region124: #{loss_stats_pallas.1} parent=122 // loop_pre_header
                  _
                $region125: #{loss_stats_pallas.1} parent=122 // loop_header
                  %s516 = sphi 0, %s520
                  %p517 = scmp.ge.s32.totalorder %s516, 1
                  %s521 = sphi %s490, %s490
                  %s522 = sphi %s484, %s484
                $region126: #{loss_stats_pallas.1} parent=122 // loop_header_branch
                  %519 = sbr.rel (%p517) target = $region130
                $region127: #{loss_stats_pallas.1} parent=122 // loop_body
                  %v523 = vld [vmem:[%s521] sm:$0xff]
                  %524 = vst [vmem:[%s522] sm:$0xff] %v523
                  %v525 = vld [vmem:[%s521 + $0x10] sm:$0xff]
                  %526 = vst [vmem:[%s522 + $0x8] sm:$0xff] %v525
                  %v527 = vld [vmem:[%s521 + $0x20] sm:$0xff]
                  %528 = vst [vmem:[%s522 + $0x10] sm:$0xff] %v527
                $region128: #{loss_stats_pallas.1} parent=122 // loop_footer
                  %s520 = sadd.s32 1, %s516
                $region129: #{loss_stats_pallas.1} parent=122 // loop_footer_branch
                  %515 = sbr.rel target = $region125
                $region130: #{loss_stats_pallas.1} parent=122 // loop_exit
                  _
              $region123: #{loss_stats_pallas.1} parent=107 // pred_fallthru
                _
              // Predicated region
              $region131: #{loss_stats_pallas.1} parent=107 // pred_check
                _
              $region132: #{loss_stats_pallas.1} parent=107 // pred_check_branch
                %530 = sbr.rel target = $region134
              $region133: #{loss_stats_pallas.1} parent=107 // pred_region
                _
              $region134: #{loss_stats_pallas.1} parent=107 // pred_fallthru
                _
            $region108: #{loss_stats_pallas.1} parent=103 // pred_fallthru
              _
            // Predicated region
            $region109: #{loss_stats_pallas.1} parent=103 // pred_check
              _
            $region110: #{loss_stats_pallas.1} parent=103 // pred_check_branch
              %496 = sbr.rel target = $region112
            $region111: #{loss_stats_pallas.1} parent=103 // pred_region
              %s498 = ssub.s32 256, 1
              loop: start=0, step=1, limit=1
              $region113: #{loss_stats_pallas.1} parent=111 // loop_pre_header
                _
              $region114: #{loss_stats_pallas.1} parent=111 // loop_header
                %s500 = sphi 0, %s504
                %p501 = scmp.ge.s32.totalorder %s500, 1
                %s505 = sphi %s490, %s490
                %s506 = sphi %s484, %s484
              $region115: #{loss_stats_pallas.1} parent=111 // loop_header_branch
                %503 = sbr.rel (%p501) target = $region119
              $region116: #{loss_stats_pallas.1} parent=111 // loop_body
                %v507 = vld [vmem:[%s505] sm:%s498]
                %508 = vst [vmem:[%s506] sm:%s498] %v507
                %v509 = vld [vmem:[%s505 + $0x10] sm:%s498]
                %510 = vst [vmem:[%s506 + $0x8] sm:%s498] %v509
                %v511 = vld [vmem:[%s505 + $0x20] sm:%s498]
                %512 = vst [vmem:[%s506 + $0x10] sm:%s498] %v511
              $region117: #{loss_stats_pallas.1} parent=111 // loop_footer
                %s504 = sadd.s32 1, %s500
              $region118: #{loss_stats_pallas.1} parent=111 // loop_footer_branch
                %499 = sbr.rel target = $region114
              $region119: #{loss_stats_pallas.1} parent=111 // loop_exit
                _
            $region112: #{loss_stats_pallas.1} parent=103 // pred_fallthru
              _
          $region104: #{loss_stats_pallas.1} parent=99 // pred_fallthru
            _
          %531 = vnop
        $region100: #{loss_stats_pallas.1} parent=19 // pred_fallthru
          _
        // Predicated region
        $region135: #{loss_stats_pallas.1} parent=19 // pred_check
          %p532 = pneg %p146
        $region136: #{loss_stats_pallas.1} parent=19 // pred_check_branch
          %534 = sbr.rel (%p532) target = $region138
        $region137: #{loss_stats_pallas.1} parent=19 // pred_region
          %s535 = sand.u32 %s136, 1
          %s536 = sand.u32 %s136, 1
          %s537 = smul.addr %s536, 24
          %s538 = scalar_lea.vmem [#allocation6], %s537
          %s539 = sadd.s32 %s23, %s24
          %s540 = smul.addr %s539, 8
          %s541 = scalar_lea.vmem %s3, %s540
          // Predicated region
          $region139: #{loss_stats_pallas.1} parent=137 // pred_check
            _
          $region140: #{loss_stats_pallas.1} parent=137 // pred_check_branch
            %543 = sbr.rel (0) target = $region142
          $region141: #{loss_stats_pallas.1} parent=137 // pred_region
            // Predicated region
            $region143: #{loss_stats_pallas.1} parent=141 // pred_check
              _
            $region144: #{loss_stats_pallas.1} parent=141 // pred_check_branch
              %545 = sbr.rel (0) target = $region146
            $region145: #{loss_stats_pallas.1} parent=141 // pred_region
              // Predicated region
              $region158: #{loss_stats_pallas.1} parent=145 // pred_check
                _
              $region159: #{loss_stats_pallas.1} parent=145 // pred_check_branch
                %565 = sbr.rel (0) target = $region161
              $region160: #{loss_stats_pallas.1} parent=145 // pred_region
                loop: start=0, step=1, limit=1
                $region162: #{loss_stats_pallas.1} parent=160 // loop_pre_header
                  _
                $region163: #{loss_stats_pallas.1} parent=160 // loop_header
                  %s567 = sphi 0, %s571
                  %p568 = scmp.ge.s32.totalorder %s567, 1
                  %s572 = sphi %s541, %s541
                  %s573 = sphi %s538, %s538
                $region164: #{loss_stats_pallas.1} parent=160 // loop_header_branch
                  %570 = sbr.rel (%p568) target = $region168
                $region165: #{loss_stats_pallas.1} parent=160 // loop_body
                  %v574 = vld [vmem:[%s572] sm:$0xff]
                  %575 = vst [vmem:[%s573] sm:$0xff] %v574
                  %v576 = vld [vmem:[%s572 + $0x10] sm:$0xff]
                  %577 = vst [vmem:[%s573 + $0x8] sm:$0xff] %v576
                  %v578 = vld [vmem:[%s572 + $0x20] sm:$0xff]
                  %579 = vst [vmem:[%s573 + $0x10] sm:$0xff] %v578
                $region166: #{loss_stats_pallas.1} parent=160 // loop_footer
                  %s571 = sadd.s32 1, %s567
                $region167: #{loss_stats_pallas.1} parent=160 // loop_footer_branch
                  %566 = sbr.rel target = $region163
                $region168: #{loss_stats_pallas.1} parent=160 // loop_exit
                  _
              $region161: #{loss_stats_pallas.1} parent=145 // pred_fallthru
                _
              // Predicated region
              $region169: #{loss_stats_pallas.1} parent=145 // pred_check
                _
              $region170: #{loss_stats_pallas.1} parent=145 // pred_check_branch
                %581 = sbr.rel target = $region172
              $region171: #{loss_stats_pallas.1} parent=145 // pred_region
                _
              $region172: #{loss_stats_pallas.1} parent=145 // pred_fallthru
                _
            $region146: #{loss_stats_pallas.1} parent=141 // pred_fallthru
              _
            // Predicated region
            $region147: #{loss_stats_pallas.1} parent=141 // pred_check
              _
            $region148: #{loss_stats_pallas.1} parent=141 // pred_check_branch
              %547 = sbr.rel target = $region150
            $region149: #{loss_stats_pallas.1} parent=141 // pred_region
              %s549 = ssub.s32 256, 1
              loop: start=0, step=1, limit=1
              $region151: #{loss_stats_pallas.1} parent=149 // loop_pre_header
                _
              $region152: #{loss_stats_pallas.1} parent=149 // loop_header
                %s551 = sphi 0, %s555
                %p552 = scmp.ge.s32.totalorder %s551, 1
                %s556 = sphi %s541, %s541
                %s557 = sphi %s538, %s538
              $region153: #{loss_stats_pallas.1} parent=149 // loop_header_branch
                %554 = sbr.rel (%p552) target = $region157
              $region154: #{loss_stats_pallas.1} parent=149 // loop_body
                %v558 = vld [vmem:[%s556] sm:%s549]
                %559 = vst [vmem:[%s557] sm:%s549] %v558
                %v560 = vld [vmem:[%s556 + $0x10] sm:%s549]
                %561 = vst [vmem:[%s557 + $0x8] sm:%s549] %v560
                %v562 = vld [vmem:[%s556 + $0x20] sm:%s549]
                %563 = vst [vmem:[%s557 + $0x10] sm:%s549] %v562
              $region155: #{loss_stats_pallas.1} parent=149 // loop_footer
                %s555 = sadd.s32 1, %s551
              $region156: #{loss_stats_pallas.1} parent=149 // loop_footer_branch
                %550 = sbr.rel target = $region152
              $region157: #{loss_stats_pallas.1} parent=149 // loop_exit
                _
            $region150: #{loss_stats_pallas.1} parent=141 // pred_fallthru
              _
          $region142: #{loss_stats_pallas.1} parent=137 // pred_fallthru
            _
          %582 = vnop
        $region138: #{loss_stats_pallas.1} parent=19 // pred_fallthru
          _
        // Predicated region
        $region173: #{loss_stats_pallas.1} parent=19 // pred_check
          %p583 = pneg %p180
        $region174: #{loss_stats_pallas.1} parent=19 // pred_check_branch
          %585 = sbr.rel (%p583) target = $region176
        $region175: #{loss_stats_pallas.1} parent=19 // pred_region
          %s586 = sand.u32 %s170, 1
          %s587 = sand.u32 %s170, 1
          %s588 = smul.addr %s587, 24
          %s589 = scalar_lea.vmem [#allocation7], %s588
          %s590 = sadd.s32 %s23, %s24
          %s591 = ssub.s32 %s590, 1
          %p592 = scmp.gt.s32.totalorder %s591, 0
          %s593 = scalar_select %p592, %s591, 0
          %s594 = smul.addr %s593, 8
          %s595 = scalar_lea.vmem %s4, %s594
          // Predicated region
          $region177: #{loss_stats_pallas.1} parent=175 // pred_check
            _
          $region178: #{loss_stats_pallas.1} parent=175 // pred_check_branch
            %597 = sbr.rel (0) target = $region180
          $region179: #{loss_stats_pallas.1} parent=175 // pred_region
            // Predicated region
            $region181: #{loss_stats_pallas.1} parent=179 // pred_check
              _
            $region182: #{loss_stats_pallas.1} parent=179 // pred_check_branch
              %599 = sbr.rel (0) target = $region184
            $region183: #{loss_stats_pallas.1} parent=179 // pred_region
              // Predicated region
              $region196: #{loss_stats_pallas.1} parent=183 // pred_check
                _
              $region197: #{loss_stats_pallas.1} parent=183 // pred_check_branch
                %619 = sbr.rel (0) target = $region199
              $region198: #{loss_stats_pallas.1} parent=183 // pred_region
                loop: start=0, step=1, limit=1
                $region200: #{loss_stats_pallas.1} parent=198 // loop_pre_header
                  _
                $region201: #{loss_stats_pallas.1} parent=198 // loop_header
                  %s621 = sphi 0, %s625
                  %p622 = scmp.ge.s32.totalorder %s621, 1
                  %s626 = sphi %s595, %s595
                  %s627 = sphi %s589, %s589
                $region202: #{loss_stats_pallas.1} parent=198 // loop_header_branch
                  %624 = sbr.rel (%p622) target = $region206
                $region203: #{loss_stats_pallas.1} parent=198 // loop_body
                  %v628 = vld [vmem:[%s626] sm:$0xff]
                  %629 = vst [vmem:[%s627] sm:$0xff] %v628
                  %v630 = vld [vmem:[%s626 + $0x10] sm:$0xff]
                  %631 = vst [vmem:[%s627 + $0x8] sm:$0xff] %v630
                  %v632 = vld [vmem:[%s626 + $0x20] sm:$0xff]
                  %633 = vst [vmem:[%s627 + $0x10] sm:$0xff] %v632
                $region204: #{loss_stats_pallas.1} parent=198 // loop_footer
                  %s625 = sadd.s32 1, %s621
                $region205: #{loss_stats_pallas.1} parent=198 // loop_footer_branch
                  %620 = sbr.rel target = $region201
                $region206: #{loss_stats_pallas.1} parent=198 // loop_exit
                  _
              $region199: #{loss_stats_pallas.1} parent=183 // pred_fallthru
                _
              // Predicated region
              $region207: #{loss_stats_pallas.1} parent=183 // pred_check
                _
              $region208: #{loss_stats_pallas.1} parent=183 // pred_check_branch
                %635 = sbr.rel target = $region210
              $region209: #{loss_stats_pallas.1} parent=183 // pred_region
                _
              $region210: #{loss_stats_pallas.1} parent=183 // pred_fallthru
                _
            $region184: #{loss_stats_pallas.1} parent=179 // pred_fallthru
              _
            // Predicated region
            $region185: #{loss_stats_pallas.1} parent=179 // pred_check
              _
            $region186: #{loss_stats_pallas.1} parent=179 // pred_check_branch
              %601 = sbr.rel target = $region188
            $region187: #{loss_stats_pallas.1} parent=179 // pred_region
              %s603 = ssub.s32 256, 1
              loop: start=0, step=1, limit=1
              $region189: #{loss_stats_pallas.1} parent=187 // loop_pre_header
                _
              $region190: #{loss_stats_pallas.1} parent=187 // loop_header
                %s605 = sphi 0, %s609
                %p606 = scmp.ge.s32.totalorder %s605, 1
                %s610 = sphi %s595, %s595
                %s611 = sphi %s589, %s589
              $region191: #{loss_stats_pallas.1} parent=187 // loop_header_branch
                %608 = sbr.rel (%p606) target = $region195
              $region192: #{loss_stats_pallas.1} parent=187 // loop_body
                %v612 = vld [vmem:[%s610] sm:%s603]
                %613 = vst [vmem:[%s611] sm:%s603] %v612
                %v614 = vld [vmem:[%s610 + $0x10] sm:%s603]
                %615 = vst [vmem:[%s611 + $0x8] sm:%s603] %v614
                %v616 = vld [vmem:[%s610 + $0x20] sm:%s603]
                %617 = vst [vmem:[%s611 + $0x10] sm:%s603] %v616
              $region193: #{loss_stats_pallas.1} parent=187 // loop_footer
                %s609 = sadd.s32 1, %s605
              $region194: #{loss_stats_pallas.1} parent=187 // loop_footer_branch
                %604 = sbr.rel target = $region190
              $region195: #{loss_stats_pallas.1} parent=187 // loop_exit
                _
            $region188: #{loss_stats_pallas.1} parent=179 // pred_fallthru
              _
          $region180: #{loss_stats_pallas.1} parent=175 // pred_fallthru
            _
          %636 = vnop
        $region176: #{loss_stats_pallas.1} parent=19 // pred_fallthru
          _
        // Predicated region
        $region211: #{loss_stats_pallas.1} parent=19 // pred_check
          %p637 = pneg %p214
        $region212: #{loss_stats_pallas.1} parent=19 // pred_check_branch
          %639 = sbr.rel (%p637) target = $region214
        $region213: #{loss_stats_pallas.1} parent=19 // pred_region
          %s640 = sand.u32 %s204, 1
          %s641 = sand.u32 %s204, 1
          %s642 = smul.addr %s641, 24
          %s643 = scalar_lea.vmem [#allocation8], %s642
          %s644 = sadd.s32 %s23, %s24
          %s645 = sadd.s32 %s644, 1
          %p646 = scmp.lt.s32.totalorder %s645, 1
          %s647 = scalar_select %p646, %s645, 1
          %s648 = smul.addr %s647, 8
          %s649 = scalar_lea.vmem %s5, %s648
          // Predicated region
          $region215: #{loss_stats_pallas.1} parent=213 // pred_check
            _
          $region216: #{loss_stats_pallas.1} parent=213 // pred_check_branch
            %651 = sbr.rel (0) target = $region218
          $region217: #{loss_stats_pallas.1} parent=213 // pred_region
            // Predicated region
            $region219: #{loss_stats_pallas.1} parent=217 // pred_check
              _
            $region220: #{loss_stats_pallas.1} parent=217 // pred_check_branch
              %653 = sbr.rel (0) target = $region222
            $region221: #{loss_stats_pallas.1} parent=217 // pred_region
              // Predicated region
              $region234: #{loss_stats_pallas.1} parent=221 // pred_check
                _
              $region235: #{loss_stats_pallas.1} parent=221 // pred_check_branch
                %673 = sbr.rel (0) target = $region237
              $region236: #{loss_stats_pallas.1} parent=221 // pred_region
                loop: start=0, step=1, limit=1
                $region238: #{loss_stats_pallas.1} parent=236 // loop_pre_header
                  _
                $region239: #{loss_stats_pallas.1} parent=236 // loop_header
                  %s675 = sphi 0, %s679
                  %p676 = scmp.ge.s32.totalorder %s675, 1
                  %s680 = sphi %s649, %s649
                  %s681 = sphi %s643, %s643
                $region240: #{loss_stats_pallas.1} parent=236 // loop_header_branch
                  %678 = sbr.rel (%p676) target = $region244
                $region241: #{loss_stats_pallas.1} parent=236 // loop_body
                  %v682 = vld [vmem:[%s680] sm:$0xff]
                  %683 = vst [vmem:[%s681] sm:$0xff] %v682
                  %v684 = vld [vmem:[%s680 + $0x10] sm:$0xff]
                  %685 = vst [vmem:[%s681 + $0x8] sm:$0xff] %v684
                  %v686 = vld [vmem:[%s680 + $0x20] sm:$0xff]
                  %687 = vst [vmem:[%s681 + $0x10] sm:$0xff] %v686
                $region242: #{loss_stats_pallas.1} parent=236 // loop_footer
                  %s679 = sadd.s32 1, %s675
                $region243: #{loss_stats_pallas.1} parent=236 // loop_footer_branch
                  %674 = sbr.rel target = $region239
                $region244: #{loss_stats_pallas.1} parent=236 // loop_exit
                  _
              $region237: #{loss_stats_pallas.1} parent=221 // pred_fallthru
                _
              // Predicated region
              $region245: #{loss_stats_pallas.1} parent=221 // pred_check
                _
              $region246: #{loss_stats_pallas.1} parent=221 // pred_check_branch
                %689 = sbr.rel target = $region248
              $region247: #{loss_stats_pallas.1} parent=221 // pred_region
                _
              $region248: #{loss_stats_pallas.1} parent=221 // pred_fallthru
                _
            $region222: #{loss_stats_pallas.1} parent=217 // pred_fallthru
              _
            // Predicated region
            $region223: #{loss_stats_pallas.1} parent=217 // pred_check
              _
            $region224: #{loss_stats_pallas.1} parent=217 // pred_check_branch
              %655 = sbr.rel target = $region226
            $region225: #{loss_stats_pallas.1} parent=217 // pred_region
              %s657 = ssub.s32 256, 1
              loop: start=0, step=1, limit=1
              $region227: #{loss_stats_pallas.1} parent=225 // loop_pre_header
                _
              $region228: #{loss_stats_pallas.1} parent=225 // loop_header
                %s659 = sphi 0, %s663
                %p660 = scmp.ge.s32.totalorder %s659, 1
                %s664 = sphi %s649, %s649
                %s665 = sphi %s643, %s643
              $region229: #{loss_stats_pallas.1} parent=225 // loop_header_branch
                %662 = sbr.rel (%p660) target = $region233
              $region230: #{loss_stats_pallas.1} parent=225 // loop_body
                %v666 = vld [vmem:[%s664] sm:%s657]
                %667 = vst [vmem:[%s665] sm:%s657] %v666
                %v668 = vld [vmem:[%s664 + $0x10] sm:%s657]
                %669 = vst [vmem:[%s665 + $0x8] sm:%s657] %v668
                %v670 = vld [vmem:[%s664 + $0x20] sm:%s657]
                %671 = vst [vmem:[%s665 + $0x10] sm:%s657] %v670
              $region231: #{loss_stats_pallas.1} parent=225 // loop_footer
                %s663 = sadd.s32 1, %s659
              $region232: #{loss_stats_pallas.1} parent=225 // loop_footer_branch
                %658 = sbr.rel target = $region228
              $region233: #{loss_stats_pallas.1} parent=225 // loop_exit
                _
            $region226: #{loss_stats_pallas.1} parent=217 // pred_fallthru
              _
          $region218: #{loss_stats_pallas.1} parent=213 // pred_fallthru
            _
          %690 = vnop
        $region214: #{loss_stats_pallas.1} parent=19 // pred_fallthru
          _
        // Predicated region
        $region249: #{loss_stats_pallas.1} parent=19 // pred_check
          %p691 = pneg %p242
        $region250: #{loss_stats_pallas.1} parent=19 // pred_check_branch
          %693 = sbr.rel (%p691) target = $region252
        $region251: #{loss_stats_pallas.1} parent=19 // pred_region
          %s694 = sand.u32 %s232, 1
          %s695 = sand.u32 %s232, 1
          %s696 = smul.addr %s695, 24
          %s697 = scalar_lea.vmem [#allocation9], %s696
          %s698 = sadd.s32 %s23, %s24
          %s699 = smul.addr %s698, 8
          %s700 = scalar_lea.vmem %s6, %s699
          // Predicated region
          $region253: #{loss_stats_pallas.1} parent=251 // pred_check
            _
          $region254: #{loss_stats_pallas.1} parent=251 // pred_check_branch
            %702 = sbr.rel (0) target = $region256
          $region255: #{loss_stats_pallas.1} parent=251 // pred_region
            // Predicated region
            $region257: #{loss_stats_pallas.1} parent=255 // pred_check
              _
            $region258: #{loss_stats_pallas.1} parent=255 // pred_check_branch
              %704 = sbr.rel (0) target = $region260
            $region259: #{loss_stats_pallas.1} parent=255 // pred_region
              // Predicated region
              $region272: #{loss_stats_pallas.1} parent=259 // pred_check
                _
              $region273: #{loss_stats_pallas.1} parent=259 // pred_check_branch
                %724 = sbr.rel (0) target = $region275
              $region274: #{loss_stats_pallas.1} parent=259 // pred_region
                loop: start=0, step=1, limit=1
                $region276: #{loss_stats_pallas.1} parent=274 // loop_pre_header
                  _
                $region277: #{loss_stats_pallas.1} parent=274 // loop_header
                  %s726 = sphi 0, %s730
                  %p727 = scmp.ge.s32.totalorder %s726, 1
                  %s731 = sphi %s700, %s700
                  %s732 = sphi %s697, %s697
                $region278: #{loss_stats_pallas.1} parent=274 // loop_header_branch
                  %729 = sbr.rel (%p727) target = $region282
                $region279: #{loss_stats_pallas.1} parent=274 // loop_body
                  %v733 = vld [vmem:[%s731] sm:$0xff]
                  %734 = vst [vmem:[%s732] sm:$0xff] %v733
                  %v735 = vld [vmem:[%s731 + $0x10] sm:$0xff]
                  %736 = vst [vmem:[%s732 + $0x8] sm:$0xff] %v735
                  %v737 = vld [vmem:[%s731 + $0x20] sm:$0xff]
                  %738 = vst [vmem:[%s732 + $0x10] sm:$0xff] %v737
                $region280: #{loss_stats_pallas.1} parent=274 // loop_footer
                  %s730 = sadd.s32 1, %s726
                $region281: #{loss_stats_pallas.1} parent=274 // loop_footer_branch
                  %725 = sbr.rel target = $region277
                $region282: #{loss_stats_pallas.1} parent=274 // loop_exit
                  _
              $region275: #{loss_stats_pallas.1} parent=259 // pred_fallthru
                _
              // Predicated region
              $region283: #{loss_stats_pallas.1} parent=259 // pred_check
                _
              $region284: #{loss_stats_pallas.1} parent=259 // pred_check_branch
                %740 = sbr.rel target = $region286
              $region285: #{loss_stats_pallas.1} parent=259 // pred_region
                _
              $region286: #{loss_stats_pallas.1} parent=259 // pred_fallthru
                _
            $region260: #{loss_stats_pallas.1} parent=255 // pred_fallthru
              _
            // Predicated region
            $region261: #{loss_stats_pallas.1} parent=255 // pred_check
              _
            $region262: #{loss_stats_pallas.1} parent=255 // pred_check_branch
              %706 = sbr.rel target = $region264
            $region263: #{loss_stats_pallas.1} parent=255 // pred_region
              %s708 = ssub.s32 256, 1
              loop: start=0, step=1, limit=1
              $region265: #{loss_stats_pallas.1} parent=263 // loop_pre_header
                _
              $region266: #{loss_stats_pallas.1} parent=263 // loop_header
                %s710 = sphi 0, %s714
                %p711 = scmp.ge.s32.totalorder %s710, 1
                %s715 = sphi %s700, %s700
                %s716 = sphi %s697, %s697
              $region267: #{loss_stats_pallas.1} parent=263 // loop_header_branch
                %713 = sbr.rel (%p711) target = $region271
              $region268: #{loss_stats_pallas.1} parent=263 // loop_body
                %v717 = vld [vmem:[%s715] sm:%s708]
                %718 = vst [vmem:[%s716] sm:%s708] %v717
                %v719 = vld [vmem:[%s715 + $0x10] sm:%s708]
                %720 = vst [vmem:[%s716 + $0x8] sm:%s708] %v719
                %v721 = vld [vmem:[%s715 + $0x20] sm:%s708]
                %722 = vst [vmem:[%s716 + $0x10] sm:%s708] %v721
              $region269: #{loss_stats_pallas.1} parent=263 // loop_footer
                %s714 = sadd.s32 1, %s710
              $region270: #{loss_stats_pallas.1} parent=263 // loop_footer_branch
                %709 = sbr.rel target = $region266
              $region271: #{loss_stats_pallas.1} parent=263 // loop_exit
                _
            $region264: #{loss_stats_pallas.1} parent=255 // pred_fallthru
              _
          $region256: #{loss_stats_pallas.1} parent=251 // pred_fallthru
            _
          %741 = vnop
        $region252: #{loss_stats_pallas.1} parent=19 // pred_fallthru
          _
        // Predicated region
        $region287: #{loss_stats_pallas.1} parent=19 // pred_check
          %p742 = pneg %p270
        $region288: #{loss_stats_pallas.1} parent=19 // pred_check_branch
          %744 = sbr.rel (%p742) target = $region290
        $region289: #{loss_stats_pallas.1} parent=19 // pred_region
          %s745 = sand.u32 %s260, 1
          %s746 = sand.u32 %s260, 1
          %s747 = smul.addr %s746, 24
          %s748 = scalar_lea.vmem [#allocation10], %s747
          %s749 = sadd.s32 %s23, %s24
          %s750 = smul.addr %s749, 8
          %s751 = scalar_lea.vmem %s7, %s750
          // Predicated region
          $region291: #{loss_stats_pallas.1} parent=289 // pred_check
            _
          $region292: #{loss_stats_pallas.1} parent=289 // pred_check_branch
            %753 = sbr.rel (0) target = $region294
          $region293: #{loss_stats_pallas.1} parent=289 // pred_region
            // Predicated region
            $region295: #{loss_stats_pallas.1} parent=293 // pred_check
              _
            $region296: #{loss_stats_pallas.1} parent=293 // pred_check_branch
              %755 = sbr.rel (0) target = $region298
            $region297: #{loss_stats_pallas.1} parent=293 // pred_region
              // Predicated region
              $region310: #{loss_stats_pallas.1} parent=297 // pred_check
                _
              $region311: #{loss_stats_pallas.1} parent=297 // pred_check_branch
                %775 = sbr.rel (0) target = $region313
              $region312: #{loss_stats_pallas.1} parent=297 // pred_region
                loop: start=0, step=1, limit=1
                $region314: #{loss_stats_pallas.1} parent=312 // loop_pre_header
                  _
                $region315: #{loss_stats_pallas.1} parent=312 // loop_header
                  %s777 = sphi 0, %s781
                  %p778 = scmp.ge.s32.totalorder %s777, 1
                  %s782 = sphi %s751, %s751
                  %s783 = sphi %s748, %s748
                $region316: #{loss_stats_pallas.1} parent=312 // loop_header_branch
                  %780 = sbr.rel (%p778) target = $region320
                $region317: #{loss_stats_pallas.1} parent=312 // loop_body
                  %v784 = vld [vmem:[%s782] sm:$0xff]
                  %785 = vst [vmem:[%s783] sm:$0xff] %v784
                  %v786 = vld [vmem:[%s782 + $0x10] sm:$0xff]
                  %787 = vst [vmem:[%s783 + $0x8] sm:$0xff] %v786
                  %v788 = vld [vmem:[%s782 + $0x20] sm:$0xff]
                  %789 = vst [vmem:[%s783 + $0x10] sm:$0xff] %v788
                $region318: #{loss_stats_pallas.1} parent=312 // loop_footer
                  %s781 = sadd.s32 1, %s777
                $region319: #{loss_stats_pallas.1} parent=312 // loop_footer_branch
                  %776 = sbr.rel target = $region315
                $region320: #{loss_stats_pallas.1} parent=312 // loop_exit
                  _
              $region313: #{loss_stats_pallas.1} parent=297 // pred_fallthru
                _
              // Predicated region
              $region321: #{loss_stats_pallas.1} parent=297 // pred_check
                _
              $region322: #{loss_stats_pallas.1} parent=297 // pred_check_branch
                %791 = sbr.rel target = $region324
              $region323: #{loss_stats_pallas.1} parent=297 // pred_region
                _
              $region324: #{loss_stats_pallas.1} parent=297 // pred_fallthru
                _
            $region298: #{loss_stats_pallas.1} parent=293 // pred_fallthru
              _
            // Predicated region
            $region299: #{loss_stats_pallas.1} parent=293 // pred_check
              _
            $region300: #{loss_stats_pallas.1} parent=293 // pred_check_branch
              %757 = sbr.rel target = $region302
            $region301: #{loss_stats_pallas.1} parent=293 // pred_region
              %s759 = ssub.s32 256, 1
              loop: start=0, step=1, limit=1
              $region303: #{loss_stats_pallas.1} parent=301 // loop_pre_header
                _
              $region304: #{loss_stats_pallas.1} parent=301 // loop_header
                %s761 = sphi 0, %s765
                %p762 = scmp.ge.s32.totalorder %s761, 1
                %s766 = sphi %s751, %s751
                %s767 = sphi %s748, %s748
              $region305: #{loss_stats_pallas.1} parent=301 // loop_header_branch
                %764 = sbr.rel (%p762) target = $region309
              $region306: #{loss_stats_pallas.1} parent=301 // loop_body
                %v768 = vld [vmem:[%s766] sm:%s759]
                %769 = vst [vmem:[%s767] sm:%s759] %v768
                %v770 = vld [vmem:[%s766 + $0x10] sm:%s759]
                %771 = vst [vmem:[%s767 + $0x8] sm:%s759] %v770
                %v772 = vld [vmem:[%s766 + $0x20] sm:%s759]
                %773 = vst [vmem:[%s767 + $0x10] sm:%s759] %v772
              $region307: #{loss_stats_pallas.1} parent=301 // loop_footer
                %s765 = sadd.s32 1, %s761
              $region308: #{loss_stats_pallas.1} parent=301 // loop_footer_branch
                %760 = sbr.rel target = $region304
              $region309: #{loss_stats_pallas.1} parent=301 // loop_exit
                _
            $region302: #{loss_stats_pallas.1} parent=293 // pred_fallthru
              _
          $region294: #{loss_stats_pallas.1} parent=289 // pred_fallthru
            _
          %792 = vnop
        $region290: #{loss_stats_pallas.1} parent=19 // pred_fallthru
          _
        // Predicated region
        $region325: #{loss_stats_pallas.1} parent=19 // pred_check
          %p793 = pneg %p298
        $region326: #{loss_stats_pallas.1} parent=19 // pred_check_branch
          %795 = sbr.rel (%p793) target = $region328
        $region327: #{loss_stats_pallas.1} parent=19 // pred_region
          %s796 = sadd.s32 %s23, %s24
          %p797 = scmp.lt.s32.totalorder %s796, 1
          %s798 = scalar_select %p797, %s796, 1
          %s799 = smul.addr %s798, 8
          %s800 = scalar_lea.vmem %s8, %s799
          %s801 = sadd.s32 %s23, %s24
        $region328: #{loss_stats_pallas.1} parent=19 // pred_fallthru
          _
      $region20: #{loss_stats_pallas.1} parent=5 // pred_fallthru
        _
      %p802 = scmp.le.s32.totalorder 1, %s16
      %p803 = scmp.lt.s32.totalorder %s16, 3
      %p804 = pnand %p802, %p803
      %p805 = pneg %p804
      // Predicated region
      $region329: #{loss_stats_pallas.1} parent=5 // pred_check
        _
      $region330: #{loss_stats_pallas.1} parent=5 // pred_check_branch
        %807 = sbr.rel (%p804) target = $region332
      $region331: #{loss_stats_pallas.1} parent=5 // pred_region
        %s808 = ssub.s32 %s16, 1
        %s809 = sand.u32 %s43, 1
        %s810 = sand.u32 %s43, 1
        %s811 = smul.addr %s810, 24
        %s812 = scalar_lea.vmem [#allocation3], %s811
        // Predicated region
        $region333: #{loss_stats_pallas.1} parent=331 // pred_check
          %p813 = pneg %p56
        $region334: #{loss_stats_pallas.1} parent=331 // pred_check_branch
          %815 = sbr.rel (%p813) target = $region336
        $region335: #{loss_stats_pallas.1} parent=331 // pred_region
          _
        $region336: #{loss_stats_pallas.1} parent=331 // pred_fallthru
          _
        %s816 = sand.u32 %s77, 1
        %s817 = sand.u32 %s77, 1
        %s818 = smul.addr %s817, 24
        %s819 = scalar_lea.vmem [#allocation4], %s818
        // Predicated region
        $region337: #{loss_stats_pallas.1} parent=331 // pred_check
          %p820 = pneg %p90
        $region338: #{loss_stats_pallas.1} parent=331 // pred_check_branch
          %822 = sbr.rel (%p820) target = $region340
        $region339: #{loss_stats_pallas.1} parent=331 // pred_region
          _
        $region340: #{loss_stats_pallas.1} parent=331 // pred_fallthru
          _
        %s823 = sand.u32 %s111, 1
        %s824 = sand.u32 %s111, 1
        %s825 = smul.addr %s824, 24
        %s826 = scalar_lea.vmem [#allocation5], %s825
        // Predicated region
        $region341: #{loss_stats_pallas.1} parent=331 // pred_check
          %p827 = pneg %p124
        $region342: #{loss_stats_pallas.1} parent=331 // pred_check_branch
          %829 = sbr.rel (%p827) target = $region344
        $region343: #{loss_stats_pallas.1} parent=331 // pred_region
          _
        $region344: #{loss_stats_pallas.1} parent=331 // pred_fallthru
          _
        %s830 = sand.u32 %s139, 1
        %s831 = sand.u32 %s139, 1
        %s832 = smul.addr %s831, 24
        %s833 = scalar_lea.vmem [#allocation6], %s832
        // Predicated region
        $region345: #{loss_stats_pallas.1} parent=331 // pred_check
          %p834 = pneg %p152
        $region346: #{loss_stats_pallas.1} parent=331 // pred_check_branch
          %836 = sbr.rel (%p834) target = $region348
        $region347: #{loss_stats_pallas.1} parent=331 // pred_region
          _
        $region348: #{loss_stats_pallas.1} parent=331 // pred_fallthru
          _
        %s837 = sand.u32 %s173, 1
        %s838 = sand.u32 %s173, 1
        %s839 = smul.addr %s838, 24
        %s840 = scalar_lea.vmem [#allocation7], %s839
        // Predicated region
        $region349: #{loss_stats_pallas.1} parent=331 // pred_check
          %p841 = pneg %p186
        $region350: #{loss_stats_pallas.1} parent=331 // pred_check_branch
          %843 = sbr.rel (%p841) target = $region352
        $region351: #{loss_stats_pallas.1} parent=331 // pred_region
          _
        $region352: #{loss_stats_pallas.1} parent=331 // pred_fallthru
          _
        %s844 = sand.u32 %s207, 1
        %s845 = sand.u32 %s207, 1
        %s846 = smul.addr %s845, 24
        %s847 = scalar_lea.vmem [#allocation8], %s846
        // Predicated region
        $region353: #{loss_stats_pallas.1} parent=331 // pred_check
          %p848 = pneg %p220
        $region354: #{loss_stats_pallas.1} parent=331 // pred_check_branch
          %850 = sbr.rel (%p848) target = $region356
        $region355: #{loss_stats_pallas.1} parent=331 // pred_region
          _
        $region356: #{loss_stats_pallas.1} parent=331 // pred_fallthru
          _
        %s851 = sand.u32 %s235, 1
        %s852 = sand.u32 %s235, 1
        %s853 = smul.addr %s852, 24
        %s854 = scalar_lea.vmem [#allocation9], %s853
        // Predicated region
        $region357: #{loss_stats_pallas.1} parent=331 // pred_check
          %p855 = pneg %p248
        $region358: #{loss_stats_pallas.1} parent=331 // pred_check_branch
          %857 = sbr.rel (%p855) target = $region360
        $region359: #{loss_stats_pallas.1} parent=331 // pred_region
          _
        $region360: #{loss_stats_pallas.1} parent=331 // pred_fallthru
          _
        %s858 = sand.u32 %s263, 1
        %s859 = sand.u32 %s263, 1
        %s860 = smul.addr %s859, 24
        %s861 = scalar_lea.vmem [#allocation10], %s860
        // Predicated region
        $region361: #{loss_stats_pallas.1} parent=331 // pred_check
          %p862 = pneg %p276
        $region362: #{loss_stats_pallas.1} parent=331 // pred_check_branch
          %864 = sbr.rel (%p862) target = $region364
        $region363: #{loss_stats_pallas.1} parent=331 // pred_region
          _
        $region364: #{loss_stats_pallas.1} parent=331 // pred_fallthru
          _
        %s865 = sand.u32 %s43, 1
        %s866 = sand.u32 %s43, 1
        %s867 = smul.addr %s866, 24
        %s868 = scalar_lea.vmem [#allocation3], %s867
        %p869 = pneg %p56
        %p870 = pneg %p53
        %s871 = sand.u32 %s77, 1
        %s872 = sand.u32 %s77, 1
        %s873 = smul.addr %s872, 24
        %s874 = scalar_lea.vmem [#allocation4], %s873
        %p875 = pneg %p90
        %p876 = pneg %p87
        %s877 = sand.u32 %s111, 1
        %s878 = sand.u32 %s111, 1
        %s879 = smul.addr %s878, 24
        %s880 = scalar_lea.vmem [#allocation5], %s879
        %p881 = pneg %p124
        %p882 = pneg %p121
        %s883 = sand.u32 %s139, 1
        %s884 = sand.u32 %s139, 1
        %s885 = smul.addr %s884, 24
        %s886 = scalar_lea.vmem [#allocation6], %s885
        %p887 = pneg %p152
        %p888 = pneg %p149
        %s889 = sand.u32 %s173, 1
        %s890 = sand.u32 %s173, 1
        %s891 = smul.addr %s890, 24
        %s892 = scalar_lea.vmem [#allocation7], %s891
        %p893 = pneg %p186
        %p894 = pneg %p183
        %s895 = sand.u32 %s207, 1
        %s896 = sand.u32 %s207, 1
        %s897 = smul.addr %s896, 24
        %s898 = scalar_lea.vmem [#allocation8], %s897
        %p899 = pneg %p220
        %p900 = pneg %p217
        %s901 = sand.u32 %s235, 1
        %s902 = sand.u32 %s235, 1
        %s903 = smul.addr %s902, 24
        %s904 = scalar_lea.vmem [#allocation9], %s903
        %p905 = pneg %p248
        %p906 = pneg %p245
        %s907 = sand.u32 %s263, 1
        %s908 = sand.u32 %s263, 1
        %s909 = smul.addr %s908, 24
        %s910 = scalar_lea.vmem [#allocation10], %s909
        %p911 = pneg %p276
        %p912 = pneg %p273
        %s913 = sadd.s32 %s25, %s26
        %p914 = scmp.lt.s32.totalorder %s913, 1
        %s915 = scalar_select %p914, %s913, 1
        %s916 = smul.addr %s915, 8
        %s917 = scalar_lea.vmem %s8, %s916
        %p918 = pneg %p304
        %p919 = pneg %p301
        %p920 = pneg %p325
        %p921 = pneg %p322
        %p922 = pneg %p351
        %p923 = pneg %p348
        %p924 = scmp.lt.s32.totalorder %s25, 1
        %s925 = scalar_select %p924, %s25, 1
        %s926 = scalar_lea.vmem %s10, %s925
        %s927 = sadd.s32 %s25, %s26
        %s928 = sadd.s32 %s25, %s26
        %s929 = ssub.s32 %s928, 1
        %p930 = scmp.gt.s32.totalorder %s929, 0
        %s931 = scalar_select %p930, %s929, 0
        %s932 = sadd.s32 %s25, %s26
        %s933 = sadd.s32 %s932, 1
        %p934 = scmp.lt.s32.totalorder %s933, 1
        %s935 = scalar_select %p934, %s933, 1
        %s936 = sadd.s32 %s25, %s26
        %s937 = sadd.s32 %s25, %s26
        %s938 = ssub.s32 %s937, 1
        %p939 = scmp.gt.s32.totalorder %s938, 0
        %s940 = scalar_select %p939, %s938, 0
        %s941 = sadd.s32 %s25, %s26
        %s942 = sadd.s32 %s941, 1
        %p943 = scmp.lt.s32.totalorder %s942, 1
        %s944 = scalar_select %p943, %s942, 1
        %s945 = sadd.s32 %s25, %s26
        %s946 = sadd.s32 %s25, %s26
        %s947 = sadd.s32 %s25, %s26
        %p948 = scmp.lt.s32.totalorder %s947, 1
        %s949 = scalar_select %p948, %s947, 1
        %s950 = smul.addr %s949, 8
        %s951 = scalar_lea.vmem %s8, %s950
        %s952 = sadd.s32 %s25, %s26
        %p953 = scmp.lt.s32.totalorder %s25, 1
        %s954 = scalar_select %p953, %s25, 1
        %s955 = scalar_lea.vmem %s10, %s954
        %s956 = sadd.s32 %s25, %s26
        %p957 = scmp.eq.s32.totalorder %s26, 0
        // Predicated region
        $region365: #{loss_stats_pallas.1} parent=331 // pred_check
          %p958 = pneg %p957
        $region366: #{loss_stats_pallas.1} parent=331 // pred_check_branch
          %960 = sbr.rel (%p958) target = $region368
        $region367: #{loss_stats_pallas.1} parent=331 // pred_region
          %vm961 = vcmask 57344
          %962 = vst.msk [vmem:[#allocation2] sm:$0x1] %vm961, 0.0
        $region368: #{loss_stats_pallas.1} parent=331 // pred_fallthru
          _
        %v963 = vld [vmem:[%s812] sm:$0xff]
        %v964 = vld [vmem:[%s812 + $0x8] sm:$0xff]
        %v965 = vld [vmem:[%s812 + $0x10] sm:$0xff]
        %v966 = vld [vmem:[%s833] sm:$0xff]
        %v967 = vld [vmem:[%s833 + $0x8] sm:$0xff]
        %v968 = vld [vmem:[%s833 + $0x10] sm:$0xff]
        %p969 = scmp.gt.s32.totalorder %s956, 0
        %s970 = scalar_select %p969, 1, 0
        %s971 = scvt.s32.f32 %s970
        %p972 = scmp.lt.s32.totalorder %s956, 1
        %s973 = scalar_select %p972, 1, 0
        %s974 = scvt.s32.f32 %s973
        %v975 = vld [vmem:[%s819] sm:$0xff]
        %v976 = vld [vmem:[%s819 + $0x8] sm:$0xff]
        %v977 = vld [vmem:[%s819 + $0x10] sm:$0xff]
        %v978 = vstv %s971
        %v979 = vmul.f32 %v975, %v978
        %v980 = vmul.f32 %v976, %v978
        %v981 = vmul.f32 %v977, %v978
        %v982 = vld [vmem:[%s840] sm:$0xff]
        %v983 = vld [vmem:[%s840 + $0x8] sm:$0xff]
        %v984 = vld [vmem:[%s840 + $0x10] sm:$0xff]
        %v985 = vmul.f32 %v982, %v978
        %v986 = vmul.f32 %v983, %v978
        %v987 = vmul.f32 %v984, %v978
        %v988 = vld [vmem:[%s826] sm:$0xff]
        %v989 = vld [vmem:[%s826 + $0x8] sm:$0xff]
        %v990 = vld [vmem:[%s826 + $0x10] sm:$0xff]
        %v991 = vstv %s974
        %v992 = vmul.f32 %v988, %v991
        %v993 = vmul.f32 %v989, %v991
        %v994 = vmul.f32 %v990, %v991
        %v995 = vld [vmem:[%s847] sm:$0xff]
        %v996 = vld [vmem:[%s847 + $0x8] sm:$0xff]
        %v997 = vld [vmem:[%s847 + $0x10] sm:$0xff]
        %v998 = vmul.f32 %v995, %v991
        %v999 = vmul.f32 %v996, %v991
        %v1000 = vmul.f32 %v997, %v991
        %v1001 = vld [vmem:[%s9] sm:$0xff]
        %vm1002 = vcmask 195584
        %v1004 = vsel %vm1002, %v1001, 0
        %1006 = vmatprep.subr.mxu0 0.0
        %1007 = vmatpush1.msra.mxu0 0.0
        %1008 = vmatprep.subr.mxu0 0.0
        %1009 = vmatpush1.msra.mxu0 0.0
        %1010 = vmatprep.subr.mxu0 0.0
        %1011 = vmatpush1.msra.mxu0 0.0
        %1012 = vmatprep.subr.mxu0 0.0
        %1013 = vmatpush1.msra.mxu0 0.0
        %1014 = vmatprep.subr.mxu0 0.0
        %1015 = vmatpush1.msra.mxu0 0.0
        %1016 = vmatprep.subr.mxu0 0.0
        %1017 = vmatpush1.msra.mxu0 0.0
        %1018 = vmatprep.subr.mxu0 0.0
        %1019 = vmatpush1.msra.mxu0 0.0
        %1020 = vmatprep.subr.mxu0 0.0
        %1021 = vmatpush1.msra.mxu0 0.0
        %1022 = vmatprep.subr.mxu0 0.0
        %1023 = vmatpush1.msra.mxu0 0.0
        %1024 = vmatprep.subr.mxu0 0.0
        %1025 = vmatpush1.msra.mxu0 0.0
        %1026 = vmatprep.subr.mxu0 0.0
        %1027 = vmatpush1.msra.mxu0 0.0
        %1028 = vmatprep.subr.mxu0 0.0
        %1029 = vmatpush1.msra.mxu0 0.0
        %1030 = vmatprep.subr.mxu0 0.0
        %1031 = vmatpush1.msra.mxu0 0.0
        %1032 = vmatprep.subr.mxu0 0.0
        %1033 = vmatpush1.msra.mxu0 %v992
        %1034 = vmatprep.subr.mxu0 0.0
        %1035 = vmatpush1.msra.mxu0 %v963
        %1036 = vmatprep.subr.mxu0 0.0
        %1037 = vmatpush1.msra.mxu0 %v979
        %1038 = vmatprep.subr.mxu0 0.0
        %1039 = vmatpush2.msra.mxu0 0.0
        %1040 = vmatprep.subr.mxu0 0.0
        %1041 = vmatpush2.msra.mxu0 0.0
        %1042 = vmatprep.subr.mxu0 0.0
        %1043 = vmatpush2.msra.mxu0 0.0
        %1044 = vmatprep.subr.mxu0 0.0
        %1045 = vmatpush2.msra.mxu0 0.0
        %1046 = vmatprep.subr.mxu0 0.0
        %1047 = vmatpush2.msra.mxu0 0.0
        %1048 = vmatprep.subr.mxu0 0.0
        %1049 = vmatpush2.msra.mxu0 0.0
        %1050 = vmatprep.subr.mxu0 0.0
        %1051 = vmatpush2.msra.mxu0 0.0
        %1052 = vmatprep.subr.mxu0 0.0
        %1053 = vmatpush2.msra.mxu0 0.0
        %1054 = vmatprep.subr.mxu0 0.0
        %1055 = vmatpush2.msra.mxu0 0.0
        %1056 = vmatprep.subr.mxu0 0.0
        %1057 = vmatpush2.msra.mxu0 0.0
        %1058 = vmatprep.subr.mxu0 0.0
        %1059 = vmatpush2.msra.mxu0 0.0
        %1060 = vmatprep.subr.mxu0 0.0
        %1061 = vmatpush2.msra.mxu0 0.0
        %1062 = vmatprep.subr.mxu0 0.0
        %1063 = vmatpush2.msra.mxu0 0.0
        %1064 = vmatprep.subr.mxu0 0.0
        %1065 = vmatpush2.msra.mxu0 0.0
        %1066 = vmatprep.subr.mxu0 0.0
        %1067 = vmatpush2.msra.mxu0 0.0
        %1068 = vmatprep.subr.mxu0 0.0
        %1069 = vmatpush2.msra.mxu0 0.0
        %1070 = vmatprep.mubr.f32.mxu0 0.0
        %1071 = vmatmul.mubr.f32.gmra.mxu0 %v1004
        %v1072 = vpop.f32.mrf.mxu0
        %v1073 = vadd.f32 0.0, %v1072
        %v1074 = vpop.f32.mrf.mxu0
        %1075 = vdwg.mxu0
        %1076 = vmatprep.subr.mxu0 0.0
        %1077 = vmatpush1.msra.mxu0 0.0
        %1078 = vmatprep.subr.mxu0 0.0
        %1079 = vmatpush1.msra.mxu0 0.0
        %1080 = vmatprep.subr.mxu0 0.0
        %1081 = vmatpush1.msra.mxu0 0.0
        %1082 = vmatprep.subr.mxu0 0.0
        %1083 = vmatpush1.msra.mxu0 0.0
        %1084 = vmatprep.subr.mxu0 0.0
        %1085 = vmatpush1.msra.mxu0 0.0
        %1086 = vmatprep.subr.mxu0 0.0
        %1087 = vmatpush1.msra.mxu0 0.0
        %1088 = vmatprep.subr.mxu0 0.0
        %1089 = vmatpush1.msra.mxu0 0.0
        %1090 = vmatprep.subr.mxu0 0.0
        %1091 = vmatpush1.msra.mxu0 0.0
        %1092 = vmatprep.subr.mxu0 0.0
        %1093 = vmatpush1.msra.mxu0 0.0
        %1094 = vmatprep.subr.mxu0 0.0
        %1095 = vmatpush1.msra.mxu0 0.0
        %1096 = vmatprep.subr.mxu0 0.0
        %1097 = vmatpush1.msra.mxu0 0.0
        %1098 = vmatprep.subr.mxu0 0.0
        %1099 = vmatpush1.msra.mxu0 0.0
        %1100 = vmatprep.subr.mxu0 0.0
        %1101 = vmatpush1.msra.mxu0 0.0
        %1102 = vmatprep.subr.mxu0 0.0
        %1103 = vmatpush1.msra.mxu0 %v993
        %1104 = vmatprep.subr.mxu0 0.0
        %1105 = vmatpush1.msra.mxu0 %v964
        %1106 = vmatprep.subr.mxu0 0.0
        %1107 = vmatpush1.msra.mxu0 %v980
        %1108 = vmatprep.subr.mxu0 0.0
        %1109 = vmatpush2.msra.mxu0 0.0
        %1110 = vmatprep.subr.mxu0 0.0
        %1111 = vmatpush2.msra.mxu0 0.0
        %1112 = vmatprep.subr.mxu0 0.0
        %1113 = vmatpush2.msra.mxu0 0.0
        %1114 = vmatprep.subr.mxu0 0.0
        %1115 = vmatpush2.msra.mxu0 0.0
        %1116 = vmatprep.subr.mxu0 0.0
        %1117 = vmatpush2.msra.mxu0 0.0
        %1118 = vmatprep.subr.mxu0 0.0
        %1119 = vmatpush2.msra.mxu0 0.0
        %1120 = vmatprep.subr.mxu0 0.0
        %1121 = vmatpush2.msra.mxu0 0.0
        %1122 = vmatprep.subr.mxu0 0.0
        %1123 = vmatpush2.msra.mxu0 0.0
        %1124 = vmatprep.subr.mxu0 0.0
        %1125 = vmatpush2.msra.mxu0 0.0
        %1126 = vmatprep.subr.mxu0 0.0
        %1127 = vmatpush2.msra.mxu0 0.0
        %1128 = vmatprep.subr.mxu0 0.0
        %1129 = vmatpush2.msra.mxu0 0.0
        %1130 = vmatprep.subr.mxu0 0.0
        %1131 = vmatpush2.msra.mxu0 0.0
        %1132 = vmatprep.subr.mxu0 0.0
        %1133 = vmatpush2.msra.mxu0 0.0
        %1134 = vmatprep.subr.mxu0 0.0
        %1135 = vmatpush2.msra.mxu0 0.0
        %1136 = vmatprep.subr.mxu0 0.0
        %1137 = vmatpush2.msra.mxu0 0.0
        %1138 = vmatprep.subr.mxu0 0.0
        %1139 = vmatpush2.msra.mxu0 0.0
        %1140 = vmatprep.mubr.f32.mxu0 0.0
        %1141 = vmatmul.mubr.f32.gmra.mxu0 %v1004
        %v1142 = vpop.f32.mrf.mxu0
        %v1143 = vadd.f32 0.0, %v1142
        %v1144 = vpop.f32.mrf.mxu0
        %1145 = vdwg.mxu0
        %1146 = vmatprep.subr.mxu0 0.0
        %1147 = vmatpush1.msra.mxu0 0.0
        %1148 = vmatprep.subr.mxu0 0.0
        %1149 = vmatpush1.msra.mxu0 0.0
        %1150 = vmatprep.subr.mxu0 0.0
        %1151 = vmatpush1.msra.mxu0 0.0
        %1152 = vmatprep.subr.mxu0 0.0
        %1153 = vmatpush1.msra.mxu0 0.0
        %1154 = vmatprep.subr.mxu0 0.0
        %1155 = vmatpush1.msra.mxu0 0.0
        %1156 = vmatprep.subr.mxu0 0.0
        %1157 = vmatpush1.msra.mxu0 0.0
        %1158 = vmatprep.subr.mxu0 0.0
        %1159 = vmatpush1.msra.mxu0 0.0
        %1160 = vmatprep.subr.mxu0 0.0
        %1161 = vmatpush1.msra.mxu0 0.0
        %1162 = vmatprep.subr.mxu0 0.0
        %1163 = vmatpush1.msra.mxu0 0.0
        %1164 = vmatprep.subr.mxu0 0.0
        %1165 = vmatpush1.msra.mxu0 0.0
        %1166 = vmatprep.subr.mxu0 0.0
        %1167 = vmatpush1.msra.mxu0 0.0
        %1168 = vmatprep.subr.mxu0 0.0
        %1169 = vmatpush1.msra.mxu0 0.0
        %1170 = vmatprep.subr.mxu0 0.0
        %1171 = vmatpush1.msra.mxu0 0.0
        %1172 = vmatprep.subr.mxu0 0.0
        %1173 = vmatpush1.msra.mxu0 %v994
        %1174 = vmatprep.subr.mxu0 0.0
        %1175 = vmatpush1.msra.mxu0 %v965
        %1176 = vmatprep.subr.mxu0 0.0
        %1177 = vmatpush1.msra.mxu0 %v981
        %1178 = vmatprep.subr.mxu0 0.0
        %1179 = vmatpush2.msra.mxu0 0.0
        %1180 = vmatprep.subr.mxu0 0.0
        %1181 = vmatpush2.msra.mxu0 0.0
        %1182 = vmatprep.subr.mxu0 0.0
        %1183 = vmatpush2.msra.mxu0 0.0
        %1184 = vmatprep.subr.mxu0 0.0
        %1185 = vmatpush2.msra.mxu0 0.0
        %1186 = vmatprep.subr.mxu0 0.0
        %1187 = vmatpush2.msra.mxu0 0.0
        %1188 = vmatprep.subr.mxu0 0.0
        %1189 = vmatpush2.msra.mxu0 0.0
        %1190 = vmatprep.subr.mxu0 0.0
        %1191 = vmatpush2.msra.mxu0 0.0
        %1192 = vmatprep.subr.mxu0 0.0
        %1193 = vmatpush2.msra.mxu0 0.0
        %1194 = vmatprep.subr.mxu0 0.0
        %1195 = vmatpush2.msra.mxu0 0.0
        %1196 = vmatprep.subr.mxu0 0.0
        %1197 = vmatpush2.msra.mxu0 0.0
        %1198 = vmatprep.subr.mxu0 0.0
        %1199 = vmatpush2.msra.mxu0 0.0
        %1200 = vmatprep.subr.mxu0 0.0
        %1201 = vmatpush2.msra.mxu0 0.0
        %1202 = vmatprep.subr.mxu0 0.0
        %1203 = vmatpush2.msra.mxu0 0.0
        %1204 = vmatprep.subr.mxu0 0.0
        %1205 = vmatpush2.msra.mxu0 0.0
        %1206 = vmatprep.subr.mxu0 0.0
        %1207 = vmatpush2.msra.mxu0 0.0
        %1208 = vmatprep.subr.mxu0 0.0
        %1209 = vmatpush2.msra.mxu0 0.0
        %1210 = vmatprep.mubr.f32.mxu0 0.0
        %1211 = vmatmul.mubr.f32.gmra.mxu0 %v1004
        %v1212 = vpop.f32.mrf.mxu0
        %v1213 = vadd.f32 0.0, %v1212
        %v1214 = vpop.f32.mrf.mxu0
        %1215 = vdwg.mxu0
        %v1216 = vmul.f32 %v1073, 0.26601171
        %v1217 = vmul.f32 %v1143, 0.26601171
        %v1218 = vmul.f32 %v1213, 0.26601171
        %1222 = vrot.lane.b32.xlu0 %v1073, 127
        %v1223 = vpop.permute.xlu0 %1222
        %1224 = vrot.lane.b32.xlu0 %v1143, 127
        %v1225 = vpop.permute.xlu0 %1224
        %1226 = vrot.lane.b32.xlu0 %v1213, 127
        %v1227 = vpop.permute.xlu0 %1226
        %vm1231 = vcmask 121856
        %v1232 = vsel %vm1231, %v1223, 0.0
        %v1233 = vsel %vm1231, %v1225, 0.0
        %v1234 = vsel %vm1231, %v1227, 0.0
        %1235 = vrot.lane.b32.xlu0 %v1073, 1
        %v1236 = vpop.permute.xlu0 %1235
        %1237 = vrot.lane.b32.xlu0 %v1143, 1
        %v1238 = vpop.permute.xlu0 %1237
        %1239 = vrot.lane.b32.xlu0 %v1213, 1
        %v1240 = vpop.permute.xlu0 %1239
        %vm1244 = vcmask 7168
        %v1245 = vsel %vm1244, 0.0, %v1236
        %v1246 = vsel %vm1244, 0.0, %v1238
        %v1247 = vsel %vm1244, 0.0, %v1240
        %v1248 = vadd.f32 %v1232, %v1245
        %v1249 = vadd.f32 %v1233, %v1246
        %v1250 = vadd.f32 %v1234, %v1247
        %v1251 = vmul.f32 %v1248, 0.21300554
        %v1252 = vmul.f32 %v1249, 0.21300554
        %v1253 = vmul.f32 %v1250, 0.21300554
        %v1254 = vadd.f32 %v1216, %v1251
        %v1255 = vadd.f32 %v1217, %v1252
        %v1256 = vadd.f32 %v1218, %v1253
        %1257 = vrot.lane.b32.xlu0 %v1073, 126
        %v1258 = vpop.permute.xlu0 %1257
        %1259 = vrot.lane.b32.xlu0 %v1143, 126
        %v1260 = vpop.permute.xlu0 %1259
        %1261 = vrot.lane.b32.xlu0 %v1213, 126
        %v1262 = vpop.permute.xlu0 %1261
        %vm1266 = vcmask 113664
        %v1267 = vsel %vm1266, %v1258, 0.0
        %v1268 = vsel %vm1266, %v1260, 0.0
        %v1269 = vsel %vm1266, %v1262, 0.0
        %1270 = vrot.lane.b32.xlu0 %v1073, 2
        %v1271 = vpop.permute.xlu0 %1270
        %1272 = vrot.lane.b32.xlu0 %v1143, 2
        %v1273 = vpop.permute.xlu0 %1272
        %1274 = vrot.lane.b32.xlu0 %v1213, 2
        %v1275 = vpop.permute.xlu0 %1274
        %vm1279 = vcmask 15360
        %v1280 = vsel %vm1279, 0.0, %v1271
        %v1281 = vsel %vm1279, 0.0, %v1273
        %v1282 = vsel %vm1279, 0.0, %v1275
        %v1283 = vadd.f32 %v1267, %v1280
        %v1284 = vadd.f32 %v1268, %v1281
        %v1285 = vadd.f32 %v1269, %v1282
        %v1286 = vmul.f32 %v1283, 0.10936069
        %v1287 = vmul.f32 %v1284, 0.10936069
        %v1288 = vmul.f32 %v1285, 0.10936069
        %v1289 = vadd.f32 %v1254, %v1286
        %v1290 = vadd.f32 %v1255, %v1287
        %v1291 = vadd.f32 %v1256, %v1288
        %1292 = vrot.lane.b32.xlu0 %v1073, 125
        %v1293 = vpop.permute.xlu0 %1292
        %1294 = vrot.lane.b32.xlu0 %v1143, 125
        %v1295 = vpop.permute.xlu0 %1294
        %1296 = vrot.lane.b32.xlu0 %v1213, 125
        %v1297 = vpop.permute.xlu0 %1296
        %vm1301 = vcmask 105472
        %v1302 = vsel %vm1301, %v1293, 0.0
        %v1303 = vsel %vm1301, %v1295, 0.0
        %v1304 = vsel %vm1301, %v1297, 0.0
        %1305 = vrot.lane.b32.xlu0 %v1073, 3
        %v1306 = vpop.permute.xlu0 %1305
        %1307 = vrot.lane.b32.xlu0 %v1143, 3
        %v1308 = vpop.permute.xlu0 %1307
        %1309 = vrot.lane.b32.xlu0 %v1213, 3
        %v1310 = vpop.permute.xlu0 %1309
        %vm1314 = vcmask 23552
        %v1315 = vsel %vm1314, 0.0, %v1306
        %v1316 = vsel %vm1314, 0.0, %v1308
        %v1317 = vsel %vm1314, 0.0, %v1310
        %v1318 = vadd.f32 %v1302, %v1315
        %v1319 = vadd.f32 %v1303, %v1316
        %v1320 = vadd.f32 %v1304, %v1317
        %v1321 = vmul.f32 %v1318, 0.036000773
        %v1322 = vmul.f32 %v1319, 0.036000773
        %v1323 = vmul.f32 %v1320, 0.036000773
        %v1324 = vadd.f32 %v1289, %v1321
        %v1325 = vadd.f32 %v1290, %v1322
        %v1326 = vadd.f32 %v1291, %v1323
        %1327 = vrot.lane.b32.xlu0 %v1073, 124
        %v1328 = vpop.permute.xlu0 %1327
        %1329 = vrot.lane.b32.xlu0 %v1143, 124
        %v1330 = vpop.permute.xlu0 %1329
        %1331 = vrot.lane.b32.xlu0 %v1213, 124
        %v1332 = vpop.permute.xlu0 %1331
        %vm1336 = vcmask 97280
        %v1337 = vsel %vm1336, %v1328, 0.0
        %v1338 = vsel %vm1336, %v1330, 0.0
        %v1339 = vsel %vm1336, %v1332, 0.0
        %1340 = vrot.lane.b32.xlu0 %v1073, 4
        %v1341 = vpop.permute.xlu0 %1340
        %1342 = vrot.lane.b32.xlu0 %v1143, 4
        %v1343 = vpop.permute.xlu0 %1342
        %1344 = vrot.lane.b32.xlu0 %v1213, 4
        %v1345 = vpop.permute.xlu0 %1344
        %vm1349 = vcmask 31744
        %v1350 = vsel %vm1349, 0.0, %v1341
        %v1351 = vsel %vm1349, 0.0, %v1343
        %v1352 = vsel %vm1349, 0.0, %v1345
        %v1353 = vadd.f32 %v1337, %v1350
        %v1354 = vadd.f32 %v1338, %v1351
        %v1355 = vadd.f32 %v1339, %v1352
        %v1356 = vmul.f32 %v1353, 0.007598758
        %v1357 = vmul.f32 %v1354, 0.007598758
        %v1358 = vmul.f32 %v1355, 0.007598758
        %v1359 = vadd.f32 %v1324, %v1356
        %v1360 = vadd.f32 %v1325, %v1357
        %v1361 = vadd.f32 %v1326, %v1358
        %1362 = vrot.lane.b32.xlu0 %v1073, 123
        %v1363 = vpop.permute.xlu0 %1362
        %1364 = vrot.lane.b32.xlu0 %v1143, 123
        %v1365 = vpop.permute.xlu0 %1364
        %1366 = vrot.lane.b32.xlu0 %v1213, 123
        %v1367 = vpop.permute.xlu0 %1366
        %vm1371 = vcmask 89088
        %v1372 = vsel %vm1371, %v1363, 0.0
        %v1373 = vsel %vm1371, %v1365, 0.0
        %v1374 = vsel %vm1371, %v1367, 0.0
        %1375 = vrot.lane.b32.xlu0 %v1073, 5
        %v1376 = vpop.permute.xlu0 %1375
        %1377 = vrot.lane.b32.xlu0 %v1143, 5
        %v1378 = vpop.permute.xlu0 %1377
        %1379 = vrot.lane.b32.xlu0 %v1213, 5
        %v1380 = vpop.permute.xlu0 %1379
        %vm1384 = vcmask 39936
        %v1385 = vsel %vm1384, 0.0, %v1376
        %v1386 = vsel %vm1384, 0.0, %v1378
        %v1387 = vsel %vm1384, 0.0, %v1380
        %v1388 = vadd.f32 %v1372, %v1385
        %v1389 = vadd.f32 %v1373, %v1386
        %v1390 = vadd.f32 %v1374, %v1387
        %v1391 = vmul.f32 %v1388, 0.0010283801
        %v1392 = vmul.f32 %v1389, 0.0010283801
        %v1393 = vmul.f32 %v1390, 0.0010283801
        %v1394 = vadd.f32 %v1359, %v1391
        %v1395 = vadd.f32 %v1360, %v1392
        %v1396 = vadd.f32 %v1361, %v1393
        %1397 = vmatprep.subr.mxu0 0.0
        %1398 = vmatpush1.msra.mxu0 0.0
        %1399 = vmatprep.subr.mxu0 0.0
        %1400 = vmatpush1.msra.mxu0 0.0
        %1401 = vmatprep.subr.mxu0 0.0
        %1402 = vmatpush1.msra.mxu0 0.0
        %1403 = vmatprep.subr.mxu0 0.0
        %1404 = vmatpush1.msra.mxu0 0.0
        %1405 = vmatprep.subr.mxu0 0.0
        %1406 = vmatpush1.msra.mxu0 0.0
        %1407 = vmatprep.subr.mxu0 0.0
        %1408 = vmatpush1.msra.mxu0 0.0
        %1409 = vmatprep.subr.mxu0 0.0
        %1410 = vmatpush1.msra.mxu0 0.0
        %1411 = vmatprep.subr.mxu0 0.0
        %1412 = vmatpush1.msra.mxu0 0.0
        %1413 = vmatprep.subr.mxu0 0.0
        %1414 = vmatpush1.msra.mxu0 0.0
        %1415 = vmatprep.subr.mxu0 0.0
        %1416 = vmatpush1.msra.mxu0 0.0
        %1417 = vmatprep.subr.mxu0 0.0
        %1418 = vmatpush1.msra.mxu0 0.0
        %1419 = vmatprep.subr.mxu0 0.0
        %1420 = vmatpush1.msra.mxu0 0.0
        %1421 = vmatprep.subr.mxu0 0.0
        %1422 = vmatpush1.msra.mxu0 0.0
        %1423 = vmatprep.subr.mxu0 0.0
        %1424 = vmatpush1.msra.mxu0 %v998
        %1425 = vmatprep.subr.mxu0 0.0
        %1426 = vmatpush1.msra.mxu0 %v966
        %1427 = vmatprep.subr.mxu0 0.0
        %1428 = vmatpush1.msra.mxu0 %v985
        %1429 = vmatprep.subr.mxu0 0.0
        %1430 = vmatpush2.msra.mxu0 0.0
        %1431 = vmatprep.subr.mxu0 0.0
        %1432 = vmatpush2.msra.mxu0 0.0
        %1433 = vmatprep.subr.mxu0 0.0
        %1434 = vmatpush2.msra.mxu0 0.0
        %1435 = vmatprep.subr.mxu0 0.0
        %1436 = vmatpush2.msra.mxu0 0.0
        %1437 = vmatprep.subr.mxu0 0.0
        %1438 = vmatpush2.msra.mxu0 0.0
        %1439 = vmatprep.subr.mxu0 0.0
        %1440 = vmatpush2.msra.mxu0 0.0
        %1441 = vmatprep.subr.mxu0 0.0
        %1442 = vmatpush2.msra.mxu0 0.0
        %1443 = vmatprep.subr.mxu0 0.0
        %1444 = vmatpush2.msra.mxu0 0.0
        %1445 = vmatprep.subr.mxu0 0.0
        %1446 = vmatpush2.msra.mxu0 0.0
        %1447 = vmatprep.subr.mxu0 0.0
        %1448 = vmatpush2.msra.mxu0 0.0
        %1449 = vmatprep.subr.mxu0 0.0
        %1450 = vmatpush2.msra.mxu0 0.0
        %1451 = vmatprep.subr.mxu0 0.0
        %1452 = vmatpush2.msra.mxu0 0.0
        %1453 = vmatprep.subr.mxu0 0.0
        %1454 = vmatpush2.msra.mxu0 0.0
        %1455 = vmatprep.subr.mxu0 0.0
        %1456 = vmatpush2.msra.mxu0 0.0
        %1457 = vmatprep.subr.mxu0 0.0
        %1458 = vmatpush2.msra.mxu0 0.0
        %1459 = vmatprep.subr.mxu0 0.0
        %1460 = vmatpush2.msra.mxu0 0.0
        %1461 = vmatprep.mubr.f32.mxu0 0.0
        %1462 = vmatmul.mubr.f32.gmra.mxu0 %v1004
        %v1463 = vpop.f32.mrf.mxu0
        %v1464 = vadd.f32 0.0, %v1463
        %v1465 = vpop.f32.mrf.mxu0
        %1466 = vdwg.mxu0
        %1467 = vmatprep.subr.mxu0 0.0
        %1468 = vmatpush1.msra.mxu0 0.0
        %1469 = vmatprep.subr.mxu0 0.0
        %1470 = vmatpush1.msra.mxu0 0.0
        %1471 = vmatprep.subr.mxu0 0.0
        %1472 = vmatpush1.msra.mxu0 0.0
        %1473 = vmatprep.subr.mxu0 0.0
        %1474 = vmatpush1.msra.mxu0 0.0
        %1475 = vmatprep.subr.mxu0 0.0
        %1476 = vmatpush1.msra.mxu0 0.0
        %1477 = vmatprep.subr.mxu0 0.0
        %1478 = vmatpush1.msra.mxu0 0.0
        %1479 = vmatprep.subr.mxu0 0.0
        %1480 = vmatpush1.msra.mxu0 0.0
        %1481 = vmatprep.subr.mxu0 0.0
        %1482 = vmatpush1.msra.mxu0 0.0
        %1483 = vmatprep.subr.mxu0 0.0
        %1484 = vmatpush1.msra.mxu0 0.0
        %1485 = vmatprep.subr.mxu0 0.0
        %1486 = vmatpush1.msra.mxu0 0.0
        %1487 = vmatprep.subr.mxu0 0.0
        %1488 = vmatpush1.msra.mxu0 0.0
        %1489 = vmatprep.subr.mxu0 0.0
        %1490 = vmatpush1.msra.mxu0 0.0
        %1491 = vmatprep.subr.mxu0 0.0
        %1492 = vmatpush1.msra.mxu0 0.0
        %1493 = vmatprep.subr.mxu0 0.0
        %1494 = vmatpush1.msra.mxu0 %v999
        %1495 = vmatprep.subr.mxu0 0.0
        %1496 = vmatpush1.msra.mxu0 %v967
        %1497 = vmatprep.subr.mxu0 0.0
        %1498 = vmatpush1.msra.mxu0 %v986
        %1499 = vmatprep.subr.mxu0 0.0
        %1500 = vmatpush2.msra.mxu0 0.0
        %1501 = vmatprep.subr.mxu0 0.0
        %1502 = vmatpush2.msra.mxu0 0.0
        %1503 = vmatprep.subr.mxu0 0.0
        %1504 = vmatpush2.msra.mxu0 0.0
        %1505 = vmatprep.subr.mxu0 0.0
        %1506 = vmatpush2.msra.mxu0 0.0
        %1507 = vmatprep.subr.mxu0 0.0
        %1508 = vmatpush2.msra.mxu0 0.0
        %1509 = vmatprep.subr.mxu0 0.0
        %1510 = vmatpush2.msra.mxu0 0.0
        %1511 = vmatprep.subr.mxu0 0.0
        %1512 = vmatpush2.msra.mxu0 0.0
        %1513 = vmatprep.subr.mxu0 0.0
        %1514 = vmatpush2.msra.mxu0 0.0
        %1515 = vmatprep.subr.mxu0 0.0
        %1516 = vmatpush2.msra.mxu0 0.0
        %1517 = vmatprep.subr.mxu0 0.0
        %1518 = vmatpush2.msra.mxu0 0.0
        %1519 = vmatprep.subr.mxu0 0.0
        %1520 = vmatpush2.msra.mxu0 0.0
        %1521 = vmatprep.subr.mxu0 0.0
        %1522 = vmatpush2.msra.mxu0 0.0
        %1523 = vmatprep.subr.mxu0 0.0
        %1524 = vmatpush2.msra.mxu0 0.0
        %1525 = vmatprep.subr.mxu0 0.0
        %1526 = vmatpush2.msra.mxu0 0.0
        %1527 = vmatprep.subr.mxu0 0.0
        %1528 = vmatpush2.msra.mxu0 0.0
        %1529 = vmatprep.subr.mxu0 0.0
        %1530 = vmatpush2.msra.mxu0 0.0
        %1531 = vmatprep.mubr.f32.mxu0 0.0
        %1532 = vmatmul.mubr.f32.gmra.mxu0 %v1004
        %v1533 = vpop.f32.mrf.mxu0
        %v1534 = vadd.f32 0.0, %v1533
        %v1535 = vpop.f32.mrf.mxu0
        %1536 = vdwg.mxu0
        %1537 = vmatprep.subr.mxu0 0.0
        %1538 = vmatpush1.msra.mxu0 0.0
        %1539 = vmatprep.subr.mxu0 0.0
        %1540 = vmatpush1.msra.mxu0 0.0
        %1541 = vmatprep.subr.mxu0 0.0
        %1542 = vmatpush1.msra.mxu0 0.0
        %1543 = vmatprep.subr.mxu0 0.0
        %1544 = vmatpush1.msra.mxu0 0.0
        %1545 = vmatprep.subr.mxu0 0.0
        %1546 = vmatpush1.msra.mxu0 0.0
        %1547 = vmatprep.subr.mxu0 0.0
        %1548 = vmatpush1.msra.mxu0 0.0
        %1549 = vmatprep.subr.mxu0 0.0
        %1550 = vmatpush1.msra.mxu0 0.0
        %1551 = vmatprep.subr.mxu0 0.0
        %1552 = vmatpush1.msra.mxu0 0.0
        %1553 = vmatprep.subr.mxu0 0.0
        %1554 = vmatpush1.msra.mxu0 0.0
        %1555 = vmatprep.subr.mxu0 0.0
        %1556 = vmatpush1.msra.mxu0 0.0
        %1557 = vmatprep.subr.mxu0 0.0
        %1558 = vmatpush1.msra.mxu0 0.0
        %1559 = vmatprep.subr.mxu0 0.0
        %1560 = vmatpush1.msra.mxu0 0.0
        %1561 = vmatprep.subr.mxu0 0.0
        %1562 = vmatpush1.msra.mxu0 0.0
        %1563 = vmatprep.subr.mxu0 0.0
        %1564 = vmatpush1.msra.mxu0 %v1000
        %1565 = vmatprep.subr.mxu0 0.0
        %1566 = vmatpush1.msra.mxu0 %v968
        %1567 = vmatprep.subr.mxu0 0.0
        %1568 = vmatpush1.msra.mxu0 %v987
        %1569 = vmatprep.subr.mxu0 0.0
        %1570 = vmatpush2.msra.mxu0 0.0
        %1571 = vmatprep.subr.mxu0 0.0
        %1572 = vmatpush2.msra.mxu0 0.0
        %1573 = vmatprep.subr.mxu0 0.0
        %1574 = vmatpush2.msra.mxu0 0.0
        %1575 = vmatprep.subr.mxu0 0.0
        %1576 = vmatpush2.msra.mxu0 0.0
        %1577 = vmatprep.subr.mxu0 0.0
        %1578 = vmatpush2.msra.mxu0 0.0
        %1579 = vmatprep.subr.mxu0 0.0
        %1580 = vmatpush2.msra.mxu0 0.0
        %1581 = vmatprep.subr.mxu0 0.0
        %1582 = vmatpush2.msra.mxu0 0.0
        %1583 = vmatprep.subr.mxu0 0.0
        %1584 = vmatpush2.msra.mxu0 0.0
        %1585 = vmatprep.subr.mxu0 0.0
        %1586 = vmatpush2.msra.mxu0 0.0
        %1587 = vmatprep.subr.mxu0 0.0
        %1588 = vmatpush2.msra.mxu0 0.0
        %1589 = vmatprep.subr.mxu0 0.0
        %1590 = vmatpush2.msra.mxu0 0.0
        %1591 = vmatprep.subr.mxu0 0.0
        %1592 = vmatpush2.msra.mxu0 0.0
        %1593 = vmatprep.subr.mxu0 0.0
        %1594 = vmatpush2.msra.mxu0 0.0
        %1595 = vmatprep.subr.mxu0 0.0
        %1596 = vmatpush2.msra.mxu0 0.0
        %1597 = vmatprep.subr.mxu0 0.0
        %1598 = vmatpush2.msra.mxu0 0.0
        %1599 = vmatprep.subr.mxu0 0.0
        %1600 = vmatpush2.msra.mxu0 0.0
        %1601 = vmatprep.mubr.f32.mxu0 0.0
        %1602 = vmatmul.mubr.f32.gmra.mxu0 %v1004
        %v1603 = vpop.f32.mrf.mxu0
        %v1604 = vadd.f32 0.0, %v1603
        %v1605 = vpop.f32.mrf.mxu0
        %1606 = vdwg.mxu0
        %v1607 = vmul.f32 %v1464, 0.26601171
        %v1608 = vmul.f32 %v1534, 0.26601171
        %v1609 = vmul.f32 %v1604, 0.26601171
        %1613 = vrot.lane.b32.xlu0 %v1464, 127
        %v1614 = vpop.permute.xlu0 %1613
        %1615 = vrot.lane.b32.xlu0 %v1534, 127
        %v1616 = vpop.permute.xlu0 %1615
        %1617 = vrot.lane.b32.xlu0 %v1604, 127
        %v1618 = vpop.permute.xlu0 %1617
        %v1622 = vsel %vm1231, %v1614, 0.0
        %v1623 = vsel %vm1231, %v1616, 0.0
        %v1624 = vsel %vm1231, %v1618, 0.0
        %1625 = vrot.lane.b32.xlu0 %v1464, 1
        %v1626 = vpop.permute.xlu0 %1625
        %1627 = vrot.lane.b32.xlu0 %v1534, 1
        %v1628 = vpop.permute.xlu0 %1627
        %1629 = vrot.lane.b32.xlu0 %v1604, 1
        %v1630 = vpop.permute.xlu0 %1629
        %v1634 = vsel %vm1244, 0.0, %v1626
        %v1635 = vsel %vm1244, 0.0, %v1628
        %v1636 = vsel %vm1244, 0.0, %v1630
        %v1637 = vadd.f32 %v1622, %v1634
        %v1638 = vadd.f32 %v1623, %v1635
        %v1639 = vadd.f32 %v1624, %v1636
        %v1640 = vmul.f32 %v1637, 0.21300554
        %v1641 = vmul.f32 %v1638, 0.21300554
        %v1642 = vmul.f32 %v1639, 0.21300554
        %v1643 = vadd.f32 %v1607, %v1640
        %v1644 = vadd.f32 %v1608, %v1641
        %v1645 = vadd.f32 %v1609, %v1642
        %1646 = vrot.lane.b32.xlu0 %v1464, 126
        %v1647 = vpop.permute.xlu0 %1646
        %1648 = vrot.lane.b32.xlu0 %v1534, 126
        %v1649 = vpop.permute.xlu0 %1648
        %1650 = vrot.lane.b32.xlu0 %v1604, 126
        %v1651 = vpop.permute.xlu0 %1650
        %v1655 = vsel %vm1266, %v1647, 0.0
        %v1656 = vsel %vm1266, %v1649, 0.0
        %v1657 = vsel %vm1266, %v1651, 0.0
        %1658 = vrot.lane.b32.xlu0 %v1464, 2
        %v1659 = vpop.permute.xlu0 %1658
        %1660 = vrot.lane.b32.xlu0 %v1534, 2
        %v1661 = vpop.permute.xlu0 %1660
        %1662 = vrot.lane.b32.xlu0 %v1604, 2
        %v1663 = vpop.permute.xlu0 %1662
        %v1667 = vsel %vm1279, 0.0, %v1659
        %v1668 = vsel %vm1279, 0.0, %v1661
        %v1669 = vsel %vm1279, 0.0, %v1663
        %v1670 = vadd.f32 %v1655, %v1667
        %v1671 = vadd.f32 %v1656, %v1668
        %v1672 = vadd.f32 %v1657, %v1669
        %v1673 = vmul.f32 %v1670, 0.10936069
        %v1674 = vmul.f32 %v1671, 0.10936069
        %v1675 = vmul.f32 %v1672, 0.10936069
        %v1676 = vadd.f32 %v1643, %v1673
        %v1677 = vadd.f32 %v1644, %v1674
        %v1678 = vadd.f32 %v1645, %v1675
        %1679 = vrot.lane.b32.xlu0 %v1464, 125
        %v1680 = vpop.permute.xlu0 %1679
        %1681 = vrot.lane.b32.xlu0 %v1534, 125
        %v1682 = vpop.permute.xlu0 %1681
        %1683 = vrot.lane.b32.xlu0 %v1604, 125
        %v1684 = vpop.permute.xlu0 %1683
        %v1688 = vsel %vm1301, %v1680, 0.0
        %v1689 = vsel %vm1301, %v1682, 0.0
        %v1690 = vsel %vm1301, %v1684, 0.0
        %1691 = vrot.lane.b32.xlu0 %v1464, 3
        %v1692 = vpop.permute.xlu0 %1691
        %1693 = vrot.lane.b32.xlu0 %v1534, 3
        %v1694 = vpop.permute.xlu0 %1693
        %1695 = vrot.lane.b32.xlu0 %v1604, 3
        %v1696 = vpop.permute.xlu0 %1695
        %v1700 = vsel %vm1314, 0.0, %v1692
        %v1701 = vsel %vm1314, 0.0, %v1694
        %v1702 = vsel %vm1314, 0.0, %v1696
        %v1703 = vadd.f32 %v1688, %v1700
        %v1704 = vadd.f32 %v1689, %v1701
        %v1705 = vadd.f32 %v1690, %v1702
        %v1706 = vmul.f32 %v1703, 0.036000773
        %v1707 = vmul.f32 %v1704, 0.036000773
        %v1708 = vmul.f32 %v1705, 0.036000773
        %v1709 = vadd.f32 %v1676, %v1706
        %v1710 = vadd.f32 %v1677, %v1707
        %v1711 = vadd.f32 %v1678, %v1708
        %1712 = vrot.lane.b32.xlu0 %v1464, 124
        %v1713 = vpop.permute.xlu0 %1712
        %1714 = vrot.lane.b32.xlu0 %v1534, 124
        %v1715 = vpop.permute.xlu0 %1714
        %1716 = vrot.lane.b32.xlu0 %v1604, 124
        %v1717 = vpop.permute.xlu0 %1716
        %v1721 = vsel %vm1336, %v1713, 0.0
        %v1722 = vsel %vm1336, %v1715, 0.0
        %v1723 = vsel %vm1336, %v1717, 0.0
        %1724 = vrot.lane.b32.xlu0 %v1464, 4
        %v1725 = vpop.permute.xlu0 %1724
        %1726 = vrot.lane.b32.xlu0 %v1534, 4
        %v1727 = vpop.permute.xlu0 %1726
        %1728 = vrot.lane.b32.xlu0 %v1604, 4
        %v1729 = vpop.permute.xlu0 %1728
        %v1733 = vsel %vm1349, 0.0, %v1725
        %v1734 = vsel %vm1349, 0.0, %v1727
        %v1735 = vsel %vm1349, 0.0, %v1729
        %v1736 = vadd.f32 %v1721, %v1733
        %v1737 = vadd.f32 %v1722, %v1734
        %v1738 = vadd.f32 %v1723, %v1735
        %v1739 = vmul.f32 %v1736, 0.007598758
        %v1740 = vmul.f32 %v1737, 0.007598758
        %v1741 = vmul.f32 %v1738, 0.007598758
        %v1742 = vadd.f32 %v1709, %v1739
        %v1743 = vadd.f32 %v1710, %v1740
        %v1744 = vadd.f32 %v1711, %v1741
        %1745 = vrot.lane.b32.xlu0 %v1464, 123
        %v1746 = vpop.permute.xlu0 %1745
        %1747 = vrot.lane.b32.xlu0 %v1534, 123
        %v1748 = vpop.permute.xlu0 %1747
        %1749 = vrot.lane.b32.xlu0 %v1604, 123
        %v1750 = vpop.permute.xlu0 %1749
        %v1754 = vsel %vm1371, %v1746, 0.0
        %v1755 = vsel %vm1371, %v1748, 0.0
        %v1756 = vsel %vm1371, %v1750, 0.0
        %1757 = vrot.lane.b32.xlu0 %v1464, 5
        %v1758 = vpop.permute.xlu0 %1757
        %1759 = vrot.lane.b32.xlu0 %v1534, 5
        %v1760 = vpop.permute.xlu0 %1759
        %1761 = vrot.lane.b32.xlu0 %v1604, 5
        %v1762 = vpop.permute.xlu0 %1761
        %v1766 = vsel %vm1384, 0.0, %v1758
        %v1767 = vsel %vm1384, 0.0, %v1760
        %v1768 = vsel %vm1384, 0.0, %v1762
        %v1769 = vadd.f32 %v1754, %v1766
        %v1770 = vadd.f32 %v1755, %v1767
        %v1771 = vadd.f32 %v1756, %v1768
        %v1772 = vmul.f32 %v1769, 0.0010283801
        %v1773 = vmul.f32 %v1770, 0.0010283801
        %v1774 = vmul.f32 %v1771, 0.0010283801
        %v1775 = vadd.f32 %v1742, %v1772
        %v1776 = vadd.f32 %v1743, %v1773
        %v1777 = vadd.f32 %v1744, %v1774
        %v1778 = vmul.f32 %v979, %v979
        %v1779 = vmul.f32 %v963, %v963
        %v1780 = vmul.f32 %v992, %v992
        %v1781 = vmul.f32 %v980, %v980
        %v1782 = vmul.f32 %v964, %v964
        %v1783 = vmul.f32 %v993, %v993
        %v1784 = vmul.f32 %v981, %v981
        %v1785 = vmul.f32 %v965, %v965
        %v1786 = vmul.f32 %v994, %v994
        %1787 = vmatprep.subr.mxu0 0.0
        %1788 = vmatpush1.msra.mxu0 0.0
        %1789 = vmatprep.subr.mxu0 0.0
        %1790 = vmatpush1.msra.mxu0 0.0
        %1791 = vmatprep.subr.mxu0 0.0
        %1792 = vmatpush1.msra.mxu0 0.0
        %1793 = vmatprep.subr.mxu0 0.0
        %1794 = vmatpush1.msra.mxu0 0.0
        %1795 = vmatprep.subr.mxu0 0.0
        %1796 = vmatpush1.msra.mxu0 0.0
        %1797 = vmatprep.subr.mxu0 0.0
        %1798 = vmatpush1.msra.mxu0 0.0
        %1799 = vmatprep.subr.mxu0 0.0
        %1800 = vmatpush1.msra.mxu0 0.0
        %1801 = vmatprep.subr.mxu0 0.0
        %1802 = vmatpush1.msra.mxu0 0.0
        %1803 = vmatprep.subr.mxu0 0.0
        %1804 = vmatpush1.msra.mxu0 0.0
        %1805 = vmatprep.subr.mxu0 0.0
        %1806 = vmatpush1.msra.mxu0 0.0
        %1807 = vmatprep.subr.mxu0 0.0
        %1808 = vmatpush1.msra.mxu0 0.0
        %1809 = vmatprep.subr.mxu0 0.0
        %1810 = vmatpush1.msra.mxu0 0.0
        %1811 = vmatprep.subr.mxu0 0.0
        %1812 = vmatpush1.msra.mxu0 0.0
        %1813 = vmatprep.subr.mxu0 0.0
        %1814 = vmatpush1.msra.mxu0 %v1780
        %1815 = vmatprep.subr.mxu0 0.0
        %1816 = vmatpush1.msra.mxu0 %v1779
        %1817 = vmatprep.subr.mxu0 0.0
        %1818 = vmatpush1.msra.mxu0 %v1778
        %1819 = vmatprep.subr.mxu0 0.0
        %1820 = vmatpush2.msra.mxu0 0.0
        %1821 = vmatprep.subr.mxu0 0.0
        %1822 = vmatpush2.msra.mxu0 0.0
        %1823 = vmatprep.subr.mxu0 0.0
        %1824 = vmatpush2.msra.mxu0 0.0
        %1825 = vmatprep.subr.mxu0 0.0
        %1826 = vmatpush2.msra.mxu0 0.0
        %1827 = vmatprep.subr.mxu0 0.0
        %1828 = vmatpush2.msra.mxu0 0.0
        %1829 = vmatprep.subr.mxu0 0.0
        %1830 = vmatpush2.msra.mxu0 0.0
        %1831 = vmatprep.subr.mxu0 0.0
        %1832 = vmatpush2.msra.mxu0 0.0
        %1833 = vmatprep.subr.mxu0 0.0
        %1834 = vmatpush2.msra.mxu0 0.0
        %1835 = vmatprep.subr.mxu0 0.0
        %1836 = vmatpush2.msra.mxu0 0.0
        %1837 = vmatprep.subr.mxu0 0.0
        %1838 = vmatpush2.msra.mxu0 0.0
        %1839 = vmatprep.subr.mxu0 0.0
        %1840 = vmatpush2.msra.mxu0 0.0
        %1841 = vmatprep.subr.mxu0 0.0
        %1842 = vmatpush2.msra.mxu0 0.0
        %1843 = vmatprep.subr.mxu0 0.0
        %1844 = vmatpush2.msra.mxu0 0.0
        %1845 = vmatprep.subr.mxu0 0.0
        %1846 = vmatpush2.msra.mxu0 0.0
        %1847 = vmatprep.subr.mxu0 0.0
        %1848 = vmatpush2.msra.mxu0 0.0
        %1849 = vmatprep.subr.mxu0 0.0
        %1850 = vmatpush2.msra.mxu0 0.0
        %1851 = vmatprep.mubr.f32.mxu0 0.0
        %1852 = vmatmul.mubr.f32.gmra.mxu0 %v1004
        %v1853 = vpop.f32.mrf.mxu0
        %v1854 = vadd.f32 0.0, %v1853
        %v1855 = vpop.f32.mrf.mxu0
        %1856 = vdwg.mxu0
        %1857 = vmatprep.subr.mxu0 0.0
        %1858 = vmatpush1.msra.mxu0 0.0
        %1859 = vmatprep.subr.mxu0 0.0
        %1860 = vmatpush1.msra.mxu0 0.0
        %1861 = vmatprep.subr.mxu0 0.0
        %1862 = vmatpush1.msra.mxu0 0.0
        %1863 = vmatprep.subr.mxu0 0.0
        %1864 = vmatpush1.msra.mxu0 0.0
        %1865 = vmatprep.subr.mxu0 0.0
        %1866 = vmatpush1.msra.mxu0 0.0
        %1867 = vmatprep.subr.mxu0 0.0
        %1868 = vmatpush1.msra.mxu0 0.0
        %1869 = vmatprep.subr.mxu0 0.0
        %1870 = vmatpush1.msra.mxu0 0.0
        %1871 = vmatprep.subr.mxu0 0.0
        %1872 = vmatpush1.msra.mxu0 0.0
        %1873 = vmatprep.subr.mxu0 0.0
        %1874 = vmatpush1.msra.mxu0 0.0
        %1875 = vmatprep.subr.mxu0 0.0
        %1876 = vmatpush1.msra.mxu0 0.0
        %1877 = vmatprep.subr.mxu0 0.0
        %1878 = vmatpush1.msra.mxu0 0.0
        %1879 = vmatprep.subr.mxu0 0.0
        %1880 = vmatpush1.msra.mxu0 0.0
        %1881 = vmatprep.subr.mxu0 0.0
        %1882 = vmatpush1.msra.mxu0 0.0
        %1883 = vmatprep.subr.mxu0 0.0
        %1884 = vmatpush1.msra.mxu0 %v1783
        %1885 = vmatprep.subr.mxu0 0.0
        %1886 = vmatpush1.msra.mxu0 %v1782
        %1887 = vmatprep.subr.mxu0 0.0
        %1888 = vmatpush1.msra.mxu0 %v1781
        %1889 = vmatprep.subr.mxu0 0.0
        %1890 = vmatpush2.msra.mxu0 0.0
        %1891 = vmatprep.subr.mxu0 0.0
        %1892 = vmatpush2.msra.mxu0 0.0
        %1893 = vmatprep.subr.mxu0 0.0
        %1894 = vmatpush2.msra.mxu0 0.0
        %1895 = vmatprep.subr.mxu0 0.0
        %1896 = vmatpush2.msra.mxu0 0.0
        %1897 = vmatprep.subr.mxu0 0.0
        %1898 = vmatpush2.msra.mxu0 0.0
        %1899 = vmatprep.subr.mxu0 0.0
        %1900 = vmatpush2.msra.mxu0 0.0
        %1901 = vmatprep.subr.mxu0 0.0
        %1902 = vmatpush2.msra.mxu0 0.0
        %1903 = vmatprep.subr.mxu0 0.0
        %1904 = vmatpush2.msra.mxu0 0.0
        %1905 = vmatprep.subr.mxu0 0.0
        %1906 = vmatpush2.msra.mxu0 0.0
        %1907 = vmatprep.subr.mxu0 0.0
        %1908 = vmatpush2.msra.mxu0 0.0
        %1909 = vmatprep.subr.mxu0 0.0
        %1910 = vmatpush2.msra.mxu0 0.0
        %1911 = vmatprep.subr.mxu0 0.0
        %1912 = vmatpush2.msra.mxu0 0.0
        %1913 = vmatprep.subr.mxu0 0.0
        %1914 = vmatpush2.msra.mxu0 0.0
        %1915 = vmatprep.subr.mxu0 0.0
        %1916 = vmatpush2.msra.mxu0 0.0
        %1917 = vmatprep.subr.mxu0 0.0
        %1918 = vmatpush2.msra.mxu0 0.0
        %1919 = vmatprep.subr.mxu0 0.0
        %1920 = vmatpush2.msra.mxu0 0.0
        %1921 = vmatprep.mubr.f32.mxu0 0.0
        %1922 = vmatmul.mubr.f32.gmra.mxu0 %v1004
        %v1923 = vpop.f32.mrf.mxu0
        %v1924 = vadd.f32 0.0, %v1923
        %v1925 = vpop.f32.mrf.mxu0
        %1926 = vdwg.mxu0
        %1927 = vmatprep.subr.mxu0 0.0
        %1928 = vmatpush1.msra.mxu0 0.0
        %1929 = vmatprep.subr.mxu0 0.0
        %1930 = vmatpush1.msra.mxu0 0.0
        %1931 = vmatprep.subr.mxu0 0.0
        %1932 = vmatpush1.msra.mxu0 0.0
        %1933 = vmatprep.subr.mxu0 0.0
        %1934 = vmatpush1.msra.mxu0 0.0
        %1935 = vmatprep.subr.mxu0 0.0
        %1936 = vmatpush1.msra.mxu0 0.0
        %1937 = vmatprep.subr.mxu0 0.0
        %1938 = vmatpush1.msra.mxu0 0.0
        %1939 = vmatprep.subr.mxu0 0.0
        %1940 = vmatpush1.msra.mxu0 0.0
        %1941 = vmatprep.subr.mxu0 0.0
        %1942 = vmatpush1.msra.mxu0 0.0
        %1943 = vmatprep.subr.mxu0 0.0
        %1944 = vmatpush1.msra.mxu0 0.0
        %1945 = vmatprep.subr.mxu0 0.0
        %1946 = vmatpush1.msra.mxu0 0.0
        %1947 = vmatprep.subr.mxu0 0.0
        %1948 = vmatpush1.msra.mxu0 0.0
        %1949 = vmatprep.subr.mxu0 0.0
        %1950 = vmatpush1.msra.mxu0 0.0
        %1951 = vmatprep.subr.mxu0 0.0
        %1952 = vmatpush1.msra.mxu0 0.0
        %1953 = vmatprep.subr.mxu0 0.0
        %1954 = vmatpush1.msra.mxu0 %v1786
        %1955 = vmatprep.subr.mxu0 0.0
        %1956 = vmatpush1.msra.mxu0 %v1785
        %1957 = vmatprep.subr.mxu0 0.0
        %1958 = vmatpush1.msra.mxu0 %v1784
        %1959 = vmatprep.subr.mxu0 0.0
        %1960 = vmatpush2.msra.mxu0 0.0
        %1961 = vmatprep.subr.mxu0 0.0
        %1962 = vmatpush2.msra.mxu0 0.0
        %1963 = vmatprep.subr.mxu0 0.0
        %1964 = vmatpush2.msra.mxu0 0.0
        %1965 = vmatprep.subr.mxu0 0.0
        %1966 = vmatpush2.msra.mxu0 0.0
        %1967 = vmatprep.subr.mxu0 0.0
        %1968 = vmatpush2.msra.mxu0 0.0
        %1969 = vmatprep.subr.mxu0 0.0
        %1970 = vmatpush2.msra.mxu0 0.0
        %1971 = vmatprep.subr.mxu0 0.0
        %1972 = vmatpush2.msra.mxu0 0.0
        %1973 = vmatprep.subr.mxu0 0.0
        %1974 = vmatpush2.msra.mxu0 0.0
        %1975 = vmatprep.subr.mxu0 0.0
        %1976 = vmatpush2.msra.mxu0 0.0
        %1977 = vmatprep.subr.mxu0 0.0
        %1978 = vmatpush2.msra.mxu0 0.0
        %1979 = vmatprep.subr.mxu0 0.0
        %1980 = vmatpush2.msra.mxu0 0.0
        %1981 = vmatprep.subr.mxu0 0.0
        %1982 = vmatpush2.msra.mxu0 0.0
        %1983 = vmatprep.subr.mxu0 0.0
        %1984 = vmatpush2.msra.mxu0 0.0
        %1985 = vmatprep.subr.mxu0 0.0
        %1986 = vmatpush2.msra.mxu0 0.0
        %1987 = vmatprep.subr.mxu0 0.0
        %1988 = vmatpush2.msra.mxu0 0.0
        %1989 = vmatprep.subr.mxu0 0.0
        %1990 = vmatpush2.msra.mxu0 0.0
        %1991 = vmatprep.mubr.f32.mxu0 0.0
        %1992 = vmatmul.mubr.f32.gmra.mxu0 %v1004
        %v1993 = vpop.f32.mrf.mxu0
        %v1994 = vadd.f32 0.0, %v1993
        %v1995 = vpop.f32.mrf.mxu0
        %1996 = vdwg.mxu0
        %v1997 = vmul.f32 %v1854, 0.26601171
        %v1998 = vmul.f32 %v1924, 0.26601171
        %v1999 = vmul.f32 %v1994, 0.26601171
        %2003 = vrot.lane.b32.xlu0 %v1854, 127
        %v2004 = vpop.permute.xlu0 %2003
        %2005 = vrot.lane.b32.xlu0 %v1924, 127
        %v2006 = vpop.permute.xlu0 %2005
        %2007 = vrot.lane.b32.xlu0 %v1994, 127
        %v2008 = vpop.permute.xlu0 %2007
        %v2012 = vsel %vm1231, %v2004, 0.0
        %v2013 = vsel %vm1231, %v2006, 0.0
        %v2014 = vsel %vm1231, %v2008, 0.0
        %2015 = vrot.lane.b32.xlu0 %v1854, 1
        %v2016 = vpop.permute.xlu0 %2015
        %2017 = vrot.lane.b32.xlu0 %v1924, 1
        %v2018 = vpop.permute.xlu0 %2017
        %2019 = vrot.lane.b32.xlu0 %v1994, 1
        %v2020 = vpop.permute.xlu0 %2019
        %v2024 = vsel %vm1244, 0.0, %v2016
        %v2025 = vsel %vm1244, 0.0, %v2018
        %v2026 = vsel %vm1244, 0.0, %v2020
        %v2027 = vadd.f32 %v2012, %v2024
        %v2028 = vadd.f32 %v2013, %v2025
        %v2029 = vadd.f32 %v2014, %v2026
        %v2030 = vmul.f32 %v2027, 0.21300554
        %v2031 = vmul.f32 %v2028, 0.21300554
        %v2032 = vmul.f32 %v2029, 0.21300554
        %v2033 = vadd.f32 %v1997, %v2030
        %v2034 = vadd.f32 %v1998, %v2031
        %v2035 = vadd.f32 %v1999, %v2032
        %2036 = vrot.lane.b32.xlu0 %v1854, 126
        %v2037 = vpop.permute.xlu0 %2036
        %2038 = vrot.lane.b32.xlu0 %v1924, 126
        %v2039 = vpop.permute.xlu0 %2038
        %2040 = vrot.lane.b32.xlu0 %v1994, 126
        %v2041 = vpop.permute.xlu0 %2040
        %v2045 = vsel %vm1266, %v2037, 0.0
        %v2046 = vsel %vm1266, %v2039, 0.0
        %v2047 = vsel %vm1266, %v2041, 0.0
        %2048 = vrot.lane.b32.xlu0 %v1854, 2
        %v2049 = vpop.permute.xlu0 %2048
        %2050 = vrot.lane.b32.xlu0 %v1924, 2
        %v2051 = vpop.permute.xlu0 %2050
        %2052 = vrot.lane.b32.xlu0 %v1994, 2
        %v2053 = vpop.permute.xlu0 %2052
        %v2057 = vsel %vm1279, 0.0, %v2049
        %v2058 = vsel %vm1279, 0.0, %v2051
        %v2059 = vsel %vm1279, 0.0, %v2053
        %v2060 = vadd.f32 %v2045, %v2057
        %v2061 = vadd.f32 %v2046, %v2058
        %v2062 = vadd.f32 %v2047, %v2059
        %v2063 = vmul.f32 %v2060, 0.10936069
        %v2064 = vmul.f32 %v2061, 0.10936069
        %v2065 = vmul.f32 %v2062, 0.10936069
        %v2066 = vadd.f32 %v2033, %v2063
        %v2067 = vadd.f32 %v2034, %v2064
        %v2068 = vadd.f32 %v2035, %v2065
        %2069 = vrot.lane.b32.xlu0 %v1854, 125
        %v2070 = vpop.permute.xlu0 %2069
        %2071 = vrot.lane.b32.xlu0 %v1924, 125
        %v2072 = vpop.permute.xlu0 %2071
        %2073 = vrot.lane.b32.xlu0 %v1994, 125
        %v2074 = vpop.permute.xlu0 %2073
        %v2078 = vsel %vm1301, %v2070, 0.0
        %v2079 = vsel %vm1301, %v2072, 0.0
        %v2080 = vsel %vm1301, %v2074, 0.0
        %2081 = vrot.lane.b32.xlu0 %v1854, 3
        %v2082 = vpop.permute.xlu0 %2081
        %2083 = vrot.lane.b32.xlu0 %v1924, 3
        %v2084 = vpop.permute.xlu0 %2083
        %2085 = vrot.lane.b32.xlu0 %v1994, 3
        %v2086 = vpop.permute.xlu0 %2085
        %v2090 = vsel %vm1314, 0.0, %v2082
        %v2091 = vsel %vm1314, 0.0, %v2084
        %v2092 = vsel %vm1314, 0.0, %v2086
        %v2093 = vadd.f32 %v2078, %v2090
        %v2094 = vadd.f32 %v2079, %v2091
        %v2095 = vadd.f32 %v2080, %v2092
        %v2096 = vmul.f32 %v2093, 0.036000773
        %v2097 = vmul.f32 %v2094, 0.036000773
        %v2098 = vmul.f32 %v2095, 0.036000773
        %v2099 = vadd.f32 %v2066, %v2096
        %v2100 = vadd.f32 %v2067, %v2097
        %v2101 = vadd.f32 %v2068, %v2098
        %2102 = vrot.lane.b32.xlu0 %v1854, 124
        %v2103 = vpop.permute.xlu0 %2102
        %2104 = vrot.lane.b32.xlu0 %v1924, 124
        %v2105 = vpop.permute.xlu0 %2104
        %2106 = vrot.lane.b32.xlu0 %v1994, 124
        %v2107 = vpop.permute.xlu0 %2106
        %v2111 = vsel %vm1336, %v2103, 0.0
        %v2112 = vsel %vm1336, %v2105, 0.0
        %v2113 = vsel %vm1336, %v2107, 0.0
        %2114 = vrot.lane.b32.xlu0 %v1854, 4
        %v2115 = vpop.permute.xlu0 %2114
        %2116 = vrot.lane.b32.xlu0 %v1924, 4
        %v2117 = vpop.permute.xlu0 %2116
        %2118 = vrot.lane.b32.xlu0 %v1994, 4
        %v2119 = vpop.permute.xlu0 %2118
        %v2123 = vsel %vm1349, 0.0, %v2115
        %v2124 = vsel %vm1349, 0.0, %v2117
        %v2125 = vsel %vm1349, 0.0, %v2119
        %v2126 = vadd.f32 %v2111, %v2123
        %v2127 = vadd.f32 %v2112, %v2124
        %v2128 = vadd.f32 %v2113, %v2125
        %v2129 = vmul.f32 %v2126, 0.007598758
        %v2130 = vmul.f32 %v2127, 0.007598758
        %v2131 = vmul.f32 %v2128, 0.007598758
        %v2132 = vadd.f32 %v2099, %v2129
        %v2133 = vadd.f32 %v2100, %v2130
        %v2134 = vadd.f32 %v2101, %v2131
        %2135 = vrot.lane.b32.xlu0 %v1854, 123
        %v2136 = vpop.permute.xlu0 %2135
        %2137 = vrot.lane.b32.xlu0 %v1924, 123
        %v2138 = vpop.permute.xlu0 %2137
        %2139 = vrot.lane.b32.xlu0 %v1994, 123
        %v2140 = vpop.permute.xlu0 %2139
        %v2144 = vsel %vm1371, %v2136, 0.0
        %v2145 = vsel %vm1371, %v2138, 0.0
        %v2146 = vsel %vm1371, %v2140, 0.0
        %2147 = vrot.lane.b32.xlu0 %v1854, 5
        %v2148 = vpop.permute.xlu0 %2147
        %2149 = vrot.lane.b32.xlu0 %v1924, 5
        %v2150 = vpop.permute.xlu0 %2149
        %2151 = vrot.lane.b32.xlu0 %v1994, 5
        %v2152 = vpop.permute.xlu0 %2151
        %v2156 = vsel %vm1384, 0.0, %v2148
        %v2157 = vsel %vm1384, 0.0, %v2150
        %v2158 = vsel %vm1384, 0.0, %v2152
        %v2159 = vadd.f32 %v2144, %v2156
        %v2160 = vadd.f32 %v2145, %v2157
        %v2161 = vadd.f32 %v2146, %v2158
        %v2162 = vmul.f32 %v2159, 0.0010283801
        %v2163 = vmul.f32 %v2160, 0.0010283801
        %v2164 = vmul.f32 %v2161, 0.0010283801
        %v2165 = vadd.f32 %v2132, %v2162
        %v2166 = vadd.f32 %v2133, %v2163
        %v2167 = vadd.f32 %v2134, %v2164
        %v2168 = vmul.f32 %v985, %v985
        %v2169 = vmul.f32 %v966, %v966
        %v2170 = vmul.f32 %v998, %v998
        %v2171 = vmul.f32 %v986, %v986
        %v2172 = vmul.f32 %v967, %v967
        %v2173 = vmul.f32 %v999, %v999
        %v2174 = vmul.f32 %v987, %v987
        %v2175 = vmul.f32 %v968, %v968
        %v2176 = vmul.f32 %v1000, %v1000
        %2177 = vmatprep.subr.mxu0 0.0
        %2178 = vmatpush1.msra.mxu0 0.0
        %2179 = vmatprep.subr.mxu0 0.0
        %2180 = vmatpush1.msra.mxu0 0.0
        %2181 = vmatprep.subr.mxu0 0.0
        %2182 = vmatpush1.msra.mxu0 0.0
        %2183 = vmatprep.subr.mxu0 0.0
        %2184 = vmatpush1.msra.mxu0 0.0
        %2185 = vmatprep.subr.mxu0 0.0
        %2186 = vmatpush1.msra.mxu0 0.0
        %2187 = vmatprep.subr.mxu0 0.0
        %2188 = vmatpush1.msra.mxu0 0.0
        %2189 = vmatprep.subr.mxu0 0.0
        %2190 = vmatpush1.msra.mxu0 0.0
        %2191 = vmatprep.subr.mxu0 0.0
        %2192 = vmatpush1.msra.mxu0 0.0
        %2193 = vmatprep.subr.mxu0 0.0
        %2194 = vmatpush1.msra.mxu0 0.0
        %2195 = vmatprep.subr.mxu0 0.0
        %2196 = vmatpush1.msra.mxu0 0.0
        %2197 = vmatprep.subr.mxu0 0.0
        %2198 = vmatpush1.msra.mxu0 0.0
        %2199 = vmatprep.subr.mxu0 0.0
        %2200 = vmatpush1.msra.mxu0 0.0
        %2201 = vmatprep.subr.mxu0 0.0
        %2202 = vmatpush1.msra.mxu0 0.0
        %2203 = vmatprep.subr.mxu0 0.0
        %2204 = vmatpush1.msra.mxu0 %v2170
        %2205 = vmatprep.subr.mxu0 0.0
        %2206 = vmatpush1.msra.mxu0 %v2169
        %2207 = vmatprep.subr.mxu0 0.0
        %2208 = vmatpush1.msra.mxu0 %v2168
        %2209 = vmatprep.subr.mxu0 0.0
        %2210 = vmatpush2.msra.mxu0 0.0
        %2211 = vmatprep.subr.mxu0 0.0
        %2212 = vmatpush2.msra.mxu0 0.0
        %2213 = vmatprep.subr.mxu0 0.0
        %2214 = vmatpush2.msra.mxu0 0.0
        %2215 = vmatprep.subr.mxu0 0.0
        %2216 = vmatpush2.msra.mxu0 0.0
        %2217 = vmatprep.subr.mxu0 0.0
        %2218 = vmatpush2.msra.mxu0 0.0
        %2219 = vmatprep.subr.mxu0 0.0
        %2220 = vmatpush2.msra.mxu0 0.0
        %2221 = vmatprep.subr.mxu0 0.0
        %2222 = vmatpush2.msra.mxu0 0.0
        %2223 = vmatprep.subr.mxu0 0.0
        %2224 = vmatpush2.msra.mxu0 0.0
        %2225 = vmatprep.subr.mxu0 0.0
        %2226 = vmatpush2.msra.mxu0 0.0
        %2227 = vmatprep.subr.mxu0 0.0
        %2228 = vmatpush2.msra.mxu0 0.0
        %2229 = vmatprep.subr.mxu0 0.0
        %2230 = vmatpush2.msra.mxu0 0.0
        %2231 = vmatprep.subr.mxu0 0.0
        %2232 = vmatpush2.msra.mxu0 0.0
        %2233 = vmatprep.subr.mxu0 0.0
        %2234 = vmatpush2.msra.mxu0 0.0
        %2235 = vmatprep.subr.mxu0 0.0
        %2236 = vmatpush2.msra.mxu0 0.0
        %2237 = vmatprep.subr.mxu0 0.0
        %2238 = vmatpush2.msra.mxu0 0.0
        %2239 = vmatprep.subr.mxu0 0.0
        %2240 = vmatpush2.msra.mxu0 0.0
        %2241 = vmatprep.mubr.f32.mxu0 0.0
        %2242 = vmatmul.mubr.f32.gmra.mxu0 %v1004
        %v2243 = vpop.f32.mrf.mxu0
        %v2244 = vadd.f32 0.0, %v2243
        %v2245 = vpop.f32.mrf.mxu0
        %2246 = vdwg.mxu0
        %2247 = vmatprep.subr.mxu0 0.0
        %2248 = vmatpush1.msra.mxu0 0.0
        %2249 = vmatprep.subr.mxu0 0.0
        %2250 = vmatpush1.msra.mxu0 0.0
        %2251 = vmatprep.subr.mxu0 0.0
        %2252 = vmatpush1.msra.mxu0 0.0
        %2253 = vmatprep.subr.mxu0 0.0
        %2254 = vmatpush1.msra.mxu0 0.0
        %2255 = vmatprep.subr.mxu0 0.0
        %2256 = vmatpush1.msra.mxu0 0.0
        %2257 = vmatprep.subr.mxu0 0.0
        %2258 = vmatpush1.msra.mxu0 0.0
        %2259 = vmatprep.subr.mxu0 0.0
        %2260 = vmatpush1.msra.mxu0 0.0
        %2261 = vmatprep.subr.mxu0 0.0
        %2262 = vmatpush1.msra.mxu0 0.0
        %2263 = vmatprep.subr.mxu0 0.0
        %2264 = vmatpush1.msra.mxu0 0.0
        %2265 = vmatprep.subr.mxu0 0.0
        %2266 = vmatpush1.msra.mxu0 0.0
        %2267 = vmatprep.subr.mxu0 0.0
        %2268 = vmatpush1.msra.mxu0 0.0
        %2269 = vmatprep.subr.mxu0 0.0
        %2270 = vmatpush1.msra.mxu0 0.0
        %2271 = vmatprep.subr.mxu0 0.0
        %2272 = vmatpush1.msra.mxu0 0.0
        %2273 = vmatprep.subr.mxu0 0.0
        %2274 = vmatpush1.msra.mxu0 %v2173
        %2275 = vmatprep.subr.mxu0 0.0
        %2276 = vmatpush1.msra.mxu0 %v2172
        %2277 = vmatprep.subr.mxu0 0.0
        %2278 = vmatpush1.msra.mxu0 %v2171
        %2279 = vmatprep.subr.mxu0 0.0
        %2280 = vmatpush2.msra.mxu0 0.0
        %2281 = vmatprep.subr.mxu0 0.0
        %2282 = vmatpush2.msra.mxu0 0.0
        %2283 = vmatprep.subr.mxu0 0.0
        %2284 = vmatpush2.msra.mxu0 0.0
        %2285 = vmatprep.subr.mxu0 0.0
        %2286 = vmatpush2.msra.mxu0 0.0
        %2287 = vmatprep.subr.mxu0 0.0
        %2288 = vmatpush2.msra.mxu0 0.0
        %2289 = vmatprep.subr.mxu0 0.0
        %2290 = vmatpush2.msra.mxu0 0.0
        %2291 = vmatprep.subr.mxu0 0.0
        %2292 = vmatpush2.msra.mxu0 0.0
        %2293 = vmatprep.subr.mxu0 0.0
        %2294 = vmatpush2.msra.mxu0 0.0
        %2295 = vmatprep.subr.mxu0 0.0
        %2296 = vmatpush2.msra.mxu0 0.0
        %2297 = vmatprep.subr.mxu0 0.0
        %2298 = vmatpush2.msra.mxu0 0.0
        %2299 = vmatprep.subr.mxu0 0.0
        %2300 = vmatpush2.msra.mxu0 0.0
        %2301 = vmatprep.subr.mxu0 0.0
        %2302 = vmatpush2.msra.mxu0 0.0
        %2303 = vmatprep.subr.mxu0 0.0
        %2304 = vmatpush2.msra.mxu0 0.0
        %2305 = vmatprep.subr.mxu0 0.0
        %2306 = vmatpush2.msra.mxu0 0.0
        %2307 = vmatprep.subr.mxu0 0.0
        %2308 = vmatpush2.msra.mxu0 0.0
        %2309 = vmatprep.subr.mxu0 0.0
        %2310 = vmatpush2.msra.mxu0 0.0
        %2311 = vmatprep.mubr.f32.mxu0 0.0
        %2312 = vmatmul.mubr.f32.gmra.mxu0 %v1004
        %v2313 = vpop.f32.mrf.mxu0
        %v2314 = vadd.f32 0.0, %v2313
        %v2315 = vpop.f32.mrf.mxu0
        %2316 = vdwg.mxu0
        %2317 = vmatprep.subr.mxu0 0.0
        %2318 = vmatpush1.msra.mxu0 0.0
        %2319 = vmatprep.subr.mxu0 0.0
        %2320 = vmatpush1.msra.mxu0 0.0
        %2321 = vmatprep.subr.mxu0 0.0
        %2322 = vmatpush1.msra.mxu0 0.0
        %2323 = vmatprep.subr.mxu0 0.0
        %2324 = vmatpush1.msra.mxu0 0.0
        %2325 = vmatprep.subr.mxu0 0.0
        %2326 = vmatpush1.msra.mxu0 0.0
        %2327 = vmatprep.subr.mxu0 0.0
        %2328 = vmatpush1.msra.mxu0 0.0
        %2329 = vmatprep.subr.mxu0 0.0
        %2330 = vmatpush1.msra.mxu0 0.0
        %2331 = vmatprep.subr.mxu0 0.0
        %2332 = vmatpush1.msra.mxu0 0.0
        %2333 = vmatprep.subr.mxu0 0.0
        %2334 = vmatpush1.msra.mxu0 0.0
        %2335 = vmatprep.subr.mxu0 0.0
        %2336 = vmatpush1.msra.mxu0 0.0
        %2337 = vmatprep.subr.mxu0 0.0
        %2338 = vmatpush1.msra.mxu0 0.0
        %2339 = vmatprep.subr.mxu0 0.0
        %2340 = vmatpush1.msra.mxu0 0.0
        %2341 = vmatprep.subr.mxu0 0.0
        %2342 = vmatpush1.msra.mxu0 0.0
        %2343 = vmatprep.subr.mxu0 0.0
        %2344 = vmatpush1.msra.mxu0 %v2176
        %2345 = vmatprep.subr.mxu0 0.0
        %2346 = vmatpush1.msra.mxu0 %v2175
        %2347 = vmatprep.subr.mxu0 0.0
        %2348 = vmatpush1.msra.mxu0 %v2174
        %2349 = vmatprep.subr.mxu0 0.0
        %2350 = vmatpush2.msra.mxu0 0.0
        %2351 = vmatprep.subr.mxu0 0.0
        %2352 = vmatpush2.msra.mxu0 0.0
        %2353 = vmatprep.subr.mxu0 0.0
        %2354 = vmatpush2.msra.mxu0 0.0
        %2355 = vmatprep.subr.mxu0 0.0
        %2356 = vmatpush2.msra.mxu0 0.0
        %2357 = vmatprep.subr.mxu0 0.0
        %2358 = vmatpush2.msra.mxu0 0.0
        %2359 = vmatprep.subr.mxu0 0.0
        %2360 = vmatpush2.msra.mxu0 0.0
        %2361 = vmatprep.subr.mxu0 0.0
        %2362 = vmatpush2.msra.mxu0 0.0
        %2363 = vmatprep.subr.mxu0 0.0
        %2364 = vmatpush2.msra.mxu0 0.0
        %2365 = vmatprep.subr.mxu0 0.0
        %2366 = vmatpush2.msra.mxu0 0.0
        %2367 = vmatprep.subr.mxu0 0.0
        %2368 = vmatpush2.msra.mxu0 0.0
        %2369 = vmatprep.subr.mxu0 0.0
        %2370 = vmatpush2.msra.mxu0 0.0
        %2371 = vmatprep.subr.mxu0 0.0
        %2372 = vmatpush2.msra.mxu0 0.0
        %2373 = vmatprep.subr.mxu0 0.0
        %2374 = vmatpush2.msra.mxu0 0.0
        %2375 = vmatprep.subr.mxu0 0.0
        %2376 = vmatpush2.msra.mxu0 0.0
        %2377 = vmatprep.subr.mxu0 0.0
        %2378 = vmatpush2.msra.mxu0 0.0
        %2379 = vmatprep.subr.mxu0 0.0
        %2380 = vmatpush2.msra.mxu0 0.0
        %2381 = vmatprep.mubr.f32.mxu0 0.0
        %2382 = vmatmul.mubr.f32.gmra.mxu0 %v1004
        %v2383 = vpop.f32.mrf.mxu0
        %v2384 = vadd.f32 0.0, %v2383
        %v2385 = vpop.f32.mrf.mxu0
        %2386 = vdwg.mxu0
        %v2387 = vmul.f32 %v2244, 0.26601171
        %v2388 = vmul.f32 %v2314, 0.26601171
        %v2389 = vmul.f32 %v2384, 0.26601171
        %2393 = vrot.lane.b32.xlu0 %v2244, 127
        %v2394 = vpop.permute.xlu0 %2393
        %2395 = vrot.lane.b32.xlu0 %v2314, 127
        %v2396 = vpop.permute.xlu0 %2395
        %2397 = vrot.lane.b32.xlu0 %v2384, 127
        %v2398 = vpop.permute.xlu0 %2397
        %v2402 = vsel %vm1231, %v2394, 0.0
        %v2403 = vsel %vm1231, %v2396, 0.0
        %v2404 = vsel %vm1231, %v2398, 0.0
        %2405 = vrot.lane.b32.xlu0 %v2244, 1
        %v2406 = vpop.permute.xlu0 %2405
        %2407 = vrot.lane.b32.xlu0 %v2314, 1
        %v2408 = vpop.permute.xlu0 %2407
        %2409 = vrot.lane.b32.xlu0 %v2384, 1
        %v2410 = vpop.permute.xlu0 %2409
        %v2414 = vsel %vm1244, 0.0, %v2406
        %v2415 = vsel %vm1244, 0.0, %v2408
        %v2416 = vsel %vm1244, 0.0, %v2410
        %v2417 = vadd.f32 %v2402, %v2414
        %v2418 = vadd.f32 %v2403, %v2415
        %v2419 = vadd.f32 %v2404, %v2416
        %v2420 = vmul.f32 %v2417, 0.21300554
        %v2421 = vmul.f32 %v2418, 0.21300554
        %v2422 = vmul.f32 %v2419, 0.21300554
        %v2423 = vadd.f32 %v2387, %v2420
        %v2424 = vadd.f32 %v2388, %v2421
        %v2425 = vadd.f32 %v2389, %v2422
        %2426 = vrot.lane.b32.xlu0 %v2244, 126
        %v2427 = vpop.permute.xlu0 %2426
        %2428 = vrot.lane.b32.xlu0 %v2314, 126
        %v2429 = vpop.permute.xlu0 %2428
        %2430 = vrot.lane.b32.xlu0 %v2384, 126
        %v2431 = vpop.permute.xlu0 %2430
        %v2435 = vsel %vm1266, %v2427, 0.0
        %v2436 = vsel %vm1266, %v2429, 0.0
        %v2437 = vsel %vm1266, %v2431, 0.0
        %2438 = vrot.lane.b32.xlu0 %v2244, 2
        %v2439 = vpop.permute.xlu0 %2438
        %2440 = vrot.lane.b32.xlu0 %v2314, 2
        %v2441 = vpop.permute.xlu0 %2440
        %2442 = vrot.lane.b32.xlu0 %v2384, 2
        %v2443 = vpop.permute.xlu0 %2442
        %v2447 = vsel %vm1279, 0.0, %v2439
        %v2448 = vsel %vm1279, 0.0, %v2441
        %v2449 = vsel %vm1279, 0.0, %v2443
        %v2450 = vadd.f32 %v2435, %v2447
        %v2451 = vadd.f32 %v2436, %v2448
        %v2452 = vadd.f32 %v2437, %v2449
        %v2453 = vmul.f32 %v2450, 0.10936069
        %v2454 = vmul.f32 %v2451, 0.10936069
        %v2455 = vmul.f32 %v2452, 0.10936069
        %v2456 = vadd.f32 %v2423, %v2453
        %v2457 = vadd.f32 %v2424, %v2454
        %v2458 = vadd.f32 %v2425, %v2455
        %2459 = vrot.lane.b32.xlu0 %v2244, 125
        %v2460 = vpop.permute.xlu0 %2459
        %2461 = vrot.lane.b32.xlu0 %v2314, 125
        %v2462 = vpop.permute.xlu0 %2461
        %2463 = vrot.lane.b32.xlu0 %v2384, 125
        %v2464 = vpop.permute.xlu0 %2463
        %v2468 = vsel %vm1301, %v2460, 0.0
        %v2469 = vsel %vm1301, %v2462, 0.0
        %v2470 = vsel %vm1301, %v2464, 0.0
        %2471 = vrot.lane.b32.xlu0 %v2244, 3
        %v2472 = vpop.permute.xlu0 %2471
        %2473 = vrot.lane.b32.xlu0 %v2314, 3
        %v2474 = vpop.permute.xlu0 %2473
        %2475 = vrot.lane.b32.xlu0 %v2384, 3
        %v2476 = vpop.permute.xlu0 %2475
        %v2480 = vsel %vm1314, 0.0, %v2472
        %v2481 = vsel %vm1314, 0.0, %v2474
        %v2482 = vsel %vm1314, 0.0, %v2476
        %v2483 = vadd.f32 %v2468, %v2480
        %v2484 = vadd.f32 %v2469, %v2481
        %v2485 = vadd.f32 %v2470, %v2482
        %v2486 = vmul.f32 %v2483, 0.036000773
        %v2487 = vmul.f32 %v2484, 0.036000773
        %v2488 = vmul.f32 %v2485, 0.036000773
        %v2489 = vadd.f32 %v2456, %v2486
        %v2490 = vadd.f32 %v2457, %v2487
        %v2491 = vadd.f32 %v2458, %v2488
        %2492 = vrot.lane.b32.xlu0 %v2244, 124
        %v2493 = vpop.permute.xlu0 %2492
        %2494 = vrot.lane.b32.xlu0 %v2314, 124
        %v2495 = vpop.permute.xlu0 %2494
        %2496 = vrot.lane.b32.xlu0 %v2384, 124
        %v2497 = vpop.permute.xlu0 %2496
        %v2501 = vsel %vm1336, %v2493, 0.0
        %v2502 = vsel %vm1336, %v2495, 0.0
        %v2503 = vsel %vm1336, %v2497, 0.0
        %2504 = vrot.lane.b32.xlu0 %v2244, 4
        %v2505 = vpop.permute.xlu0 %2504
        %2506 = vrot.lane.b32.xlu0 %v2314, 4
        %v2507 = vpop.permute.xlu0 %2506
        %2508 = vrot.lane.b32.xlu0 %v2384, 4
        %v2509 = vpop.permute.xlu0 %2508
        %v2513 = vsel %vm1349, 0.0, %v2505
        %v2514 = vsel %vm1349, 0.0, %v2507
        %v2515 = vsel %vm1349, 0.0, %v2509
        %v2516 = vadd.f32 %v2501, %v2513
        %v2517 = vadd.f32 %v2502, %v2514
        %v2518 = vadd.f32 %v2503, %v2515
        %v2519 = vmul.f32 %v2516, 0.007598758
        %v2520 = vmul.f32 %v2517, 0.007598758
        %v2521 = vmul.f32 %v2518, 0.007598758
        %v2522 = vadd.f32 %v2489, %v2519
        %v2523 = vadd.f32 %v2490, %v2520
        %v2524 = vadd.f32 %v2491, %v2521
        %2525 = vrot.lane.b32.xlu0 %v2244, 123
        %v2526 = vpop.permute.xlu0 %2525
        %2527 = vrot.lane.b32.xlu0 %v2314, 123
        %v2528 = vpop.permute.xlu0 %2527
        %2529 = vrot.lane.b32.xlu0 %v2384, 123
        %v2530 = vpop.permute.xlu0 %2529
        %v2534 = vsel %vm1371, %v2526, 0.0
        %v2535 = vsel %vm1371, %v2528, 0.0
        %v2536 = vsel %vm1371, %v2530, 0.0
        %2537 = vrot.lane.b32.xlu0 %v2244, 5
        %v2538 = vpop.permute.xlu0 %2537
        %2539 = vrot.lane.b32.xlu0 %v2314, 5
        %v2540 = vpop.permute.xlu0 %2539
        %2541 = vrot.lane.b32.xlu0 %v2384, 5
        %v2542 = vpop.permute.xlu0 %2541
        %v2546 = vsel %vm1384, 0.0, %v2538
        %v2547 = vsel %vm1384, 0.0, %v2540
        %v2548 = vsel %vm1384, 0.0, %v2542
        %v2549 = vadd.f32 %v2534, %v2546
        %v2550 = vadd.f32 %v2535, %v2547
        %v2551 = vadd.f32 %v2536, %v2548
        %v2552 = vmul.f32 %v2549, 0.0010283801
        %v2553 = vmul.f32 %v2550, 0.0010283801
        %v2554 = vmul.f32 %v2551, 0.0010283801
        %v2555 = vadd.f32 %v2522, %v2552
        %v2556 = vadd.f32 %v2523, %v2553
        %v2557 = vadd.f32 %v2524, %v2554
        %v2558 = vmul.f32 %v979, %v985
        %v2559 = vmul.f32 %v963, %v966
        %v2560 = vmul.f32 %v992, %v998
        %v2561 = vmul.f32 %v980, %v986
        %v2562 = vmul.f32 %v964, %v967
        %v2563 = vmul.f32 %v993, %v999
        %v2564 = vmul.f32 %v981, %v987
        %v2565 = vmul.f32 %v965, %v968
        %v2566 = vmul.f32 %v994, %v1000
        %2567 = vmatprep.subr.mxu0 0.0
        %2568 = vmatpush1.msra.mxu0 0.0
        %2569 = vmatprep.subr.mxu0 0.0
        %2570 = vmatpush1.msra.mxu0 0.0
        %2571 = vmatprep.subr.mxu0 0.0
        %2572 = vmatpush1.msra.mxu0 0.0
        %2573 = vmatprep.subr.mxu0 0.0
        %2574 = vmatpush1.msra.mxu0 0.0
        %2575 = vmatprep.subr.mxu0 0.0
        %2576 = vmatpush1.msra.mxu0 0.0
        %2577 = vmatprep.subr.mxu0 0.0
        %2578 = vmatpush1.msra.mxu0 0.0
        %2579 = vmatprep.subr.mxu0 0.0
        %2580 = vmatpush1.msra.mxu0 0.0
        %2581 = vmatprep.subr.mxu0 0.0
        %2582 = vmatpush1.msra.mxu0 0.0
        %2583 = vmatprep.subr.mxu0 0.0
        %2584 = vmatpush1.msra.mxu0 0.0
        %2585 = vmatprep.subr.mxu0 0.0
        %2586 = vmatpush1.msra.mxu0 0.0
        %2587 = vmatprep.subr.mxu0 0.0
        %2588 = vmatpush1.msra.mxu0 0.0
        %2589 = vmatprep.subr.mxu0 0.0
        %2590 = vmatpush1.msra.mxu0 0.0
        %2591 = vmatprep.subr.mxu0 0.0
        %2592 = vmatpush1.msra.mxu0 0.0
        %2593 = vmatprep.subr.mxu0 0.0
        %2594 = vmatpush1.msra.mxu0 %v2560
        %2595 = vmatprep.subr.mxu0 0.0
        %2596 = vmatpush1.msra.mxu0 %v2559
        %2597 = vmatprep.subr.mxu0 0.0
        %2598 = vmatpush1.msra.mxu0 %v2558
        %2599 = vmatprep.subr.mxu0 0.0
        %2600 = vmatpush2.msra.mxu0 0.0
        %2601 = vmatprep.subr.mxu0 0.0
        %2602 = vmatpush2.msra.mxu0 0.0
        %2603 = vmatprep.subr.mxu0 0.0
        %2604 = vmatpush2.msra.mxu0 0.0
        %2605 = vmatprep.subr.mxu0 0.0
        %2606 = vmatpush2.msra.mxu0 0.0
        %2607 = vmatprep.subr.mxu0 0.0
        %2608 = vmatpush2.msra.mxu0 0.0
        %2609 = vmatprep.subr.mxu0 0.0
        %2610 = vmatpush2.msra.mxu0 0.0
        %2611 = vmatprep.subr.mxu0 0.0
        %2612 = vmatpush2.msra.mxu0 0.0
        %2613 = vmatprep.subr.mxu0 0.0
        %2614 = vmatpush2.msra.mxu0 0.0
        %2615 = vmatprep.subr.mxu0 0.0
        %2616 = vmatpush2.msra.mxu0 0.0
        %2617 = vmatprep.subr.mxu0 0.0
        %2618 = vmatpush2.msra.mxu0 0.0
        %2619 = vmatprep.subr.mxu0 0.0
        %2620 = vmatpush2.msra.mxu0 0.0
        %2621 = vmatprep.subr.mxu0 0.0
        %2622 = vmatpush2.msra.mxu0 0.0
        %2623 = vmatprep.subr.mxu0 0.0
        %2624 = vmatpush2.msra.mxu0 0.0
        %2625 = vmatprep.subr.mxu0 0.0
        %2626 = vmatpush2.msra.mxu0 0.0
        %2627 = vmatprep.subr.mxu0 0.0
        %2628 = vmatpush2.msra.mxu0 0.0
        %2629 = vmatprep.subr.mxu0 0.0
        %2630 = vmatpush2.msra.mxu0 0.0
        %2631 = vmatprep.mubr.f32.mxu0 0.0
        %2632 = vmatmul.mubr.f32.gmra.mxu0 %v1004
        %v2633 = vpop.f32.mrf.mxu0
        %v2634 = vadd.f32 0.0, %v2633
        %v2635 = vpop.f32.mrf.mxu0
        %2636 = vdwg.mxu0
        %2637 = vmatprep.subr.mxu0 0.0
        %2638 = vmatpush1.msra.mxu0 0.0
        %2639 = vmatprep.subr.mxu0 0.0
        %2640 = vmatpush1.msra.mxu0 0.0
        %2641 = vmatprep.subr.mxu0 0.0
        %2642 = vmatpush1.msra.mxu0 0.0
        %2643 = vmatprep.subr.mxu0 0.0
        %2644 = vmatpush1.msra.mxu0 0.0
        %2645 = vmatprep.subr.mxu0 0.0
        %2646 = vmatpush1.msra.mxu0 0.0
        %2647 = vmatprep.subr.mxu0 0.0
        %2648 = vmatpush1.msra.mxu0 0.0
        %2649 = vmatprep.subr.mxu0 0.0
        %2650 = vmatpush1.msra.mxu0 0.0
        %2651 = vmatprep.subr.mxu0 0.0
        %2652 = vmatpush1.msra.mxu0 0.0
        %2653 = vmatprep.subr.mxu0 0.0
        %2654 = vmatpush1.msra.mxu0 0.0
        %2655 = vmatprep.subr.mxu0 0.0
        %2656 = vmatpush1.msra.mxu0 0.0
        %2657 = vmatprep.subr.mxu0 0.0
        %2658 = vmatpush1.msra.mxu0 0.0
        %2659 = vmatprep.subr.mxu0 0.0
        %2660 = vmatpush1.msra.mxu0 0.0
        %2661 = vmatprep.subr.mxu0 0.0
        %2662 = vmatpush1.msra.mxu0 0.0
        %2663 = vmatprep.subr.mxu0 0.0
        %2664 = vmatpush1.msra.mxu0 %v2563
        %2665 = vmatprep.subr.mxu0 0.0
        %2666 = vmatpush1.msra.mxu0 %v2562
        %2667 = vmatprep.subr.mxu0 0.0
        %2668 = vmatpush1.msra.mxu0 %v2561
        %2669 = vmatprep.subr.mxu0 0.0
        %2670 = vmatpush2.msra.mxu0 0.0
        %2671 = vmatprep.subr.mxu0 0.0
        %2672 = vmatpush2.msra.mxu0 0.0
        %2673 = vmatprep.subr.mxu0 0.0
        %2674 = vmatpush2.msra.mxu0 0.0
        %2675 = vmatprep.subr.mxu0 0.0
        %2676 = vmatpush2.msra.mxu0 0.0
        %2677 = vmatprep.subr.mxu0 0.0
        %2678 = vmatpush2.msra.mxu0 0.0
        %2679 = vmatprep.subr.mxu0 0.0
        %2680 = vmatpush2.msra.mxu0 0.0
        %2681 = vmatprep.subr.mxu0 0.0
        %2682 = vmatpush2.msra.mxu0 0.0
        %2683 = vmatprep.subr.mxu0 0.0
        %2684 = vmatpush2.msra.mxu0 0.0
        %2685 = vmatprep.subr.mxu0 0.0
        %2686 = vmatpush2.msra.mxu0 0.0
        %2687 = vmatprep.subr.mxu0 0.0
        %2688 = vmatpush2.msra.mxu0 0.0
        %2689 = vmatprep.subr.mxu0 0.0
        %2690 = vmatpush2.msra.mxu0 0.0
        %2691 = vmatprep.subr.mxu0 0.0
        %2692 = vmatpush2.msra.mxu0 0.0
        %2693 = vmatprep.subr.mxu0 0.0
        %2694 = vmatpush2.msra.mxu0 0.0
        %2695 = vmatprep.subr.mxu0 0.0
        %2696 = vmatpush2.msra.mxu0 0.0
        %2697 = vmatprep.subr.mxu0 0.0
        %2698 = vmatpush2.msra.mxu0 0.0
        %2699 = vmatprep.subr.mxu0 0.0
        %2700 = vmatpush2.msra.mxu0 0.0
        %2701 = vmatprep.mubr.f32.mxu0 0.0
        %2702 = vmatmul.mubr.f32.gmra.mxu0 %v1004
        %v2703 = vpop.f32.mrf.mxu0
        %v2704 = vadd.f32 0.0, %v2703
        %v2705 = vpop.f32.mrf.mxu0
        %2706 = vdwg.mxu0
        %2707 = vmatprep.subr.mxu0 0.0
        %2708 = vmatpush1.msra.mxu0 0.0
        %2709 = vmatprep.subr.mxu0 0.0
        %2710 = vmatpush1.msra.mxu0 0.0
        %2711 = vmatprep.subr.mxu0 0.0
        %2712 = vmatpush1.msra.mxu0 0.0
        %2713 = vmatprep.subr.mxu0 0.0
        %2714 = vmatpush1.msra.mxu0 0.0
        %2715 = vmatprep.subr.mxu0 0.0
        %2716 = vmatpush1.msra.mxu0 0.0
        %2717 = vmatprep.subr.mxu0 0.0
        %2718 = vmatpush1.msra.mxu0 0.0
        %2719 = vmatprep.subr.mxu0 0.0
        %2720 = vmatpush1.msra.mxu0 0.0
        %2721 = vmatprep.subr.mxu0 0.0
        %2722 = vmatpush1.msra.mxu0 0.0
        %2723 = vmatprep.subr.mxu0 0.0
        %2724 = vmatpush1.msra.mxu0 0.0
        %2725 = vmatprep.subr.mxu0 0.0
        %2726 = vmatpush1.msra.mxu0 0.0
        %2727 = vmatprep.subr.mxu0 0.0
        %2728 = vmatpush1.msra.mxu0 0.0
        %2729 = vmatprep.subr.mxu0 0.0
        %2730 = vmatpush1.msra.mxu0 0.0
        %2731 = vmatprep.subr.mxu0 0.0
        %2732 = vmatpush1.msra.mxu0 0.0
        %2733 = vmatprep.subr.mxu0 0.0
        %2734 = vmatpush1.msra.mxu0 %v2566
        %2735 = vmatprep.subr.mxu0 0.0
        %2736 = vmatpush1.msra.mxu0 %v2565
        %2737 = vmatprep.subr.mxu0 0.0
        %2738 = vmatpush1.msra.mxu0 %v2564
        %2739 = vmatprep.subr.mxu0 0.0
        %2740 = vmatpush2.msra.mxu0 0.0
        %2741 = vmatprep.subr.mxu0 0.0
        %2742 = vmatpush2.msra.mxu0 0.0
        %2743 = vmatprep.subr.mxu0 0.0
        %2744 = vmatpush2.msra.mxu0 0.0
        %2745 = vmatprep.subr.mxu0 0.0
        %2746 = vmatpush2.msra.mxu0 0.0
        %2747 = vmatprep.subr.mxu0 0.0
        %2748 = vmatpush2.msra.mxu0 0.0
        %2749 = vmatprep.subr.mxu0 0.0
        %2750 = vmatpush2.msra.mxu0 0.0
        %2751 = vmatprep.subr.mxu0 0.0
        %2752 = vmatpush2.msra.mxu0 0.0
        %2753 = vmatprep.subr.mxu0 0.0
        %2754 = vmatpush2.msra.mxu0 0.0
        %2755 = vmatprep.subr.mxu0 0.0
        %2756 = vmatpush2.msra.mxu0 0.0
        %2757 = vmatprep.subr.mxu0 0.0
        %2758 = vmatpush2.msra.mxu0 0.0
        %2759 = vmatprep.subr.mxu0 0.0
        %2760 = vmatpush2.msra.mxu0 0.0
        %2761 = vmatprep.subr.mxu0 0.0
        %2762 = vmatpush2.msra.mxu0 0.0
        %2763 = vmatprep.subr.mxu0 0.0
        %2764 = vmatpush2.msra.mxu0 0.0
        %2765 = vmatprep.subr.mxu0 0.0
        %2766 = vmatpush2.msra.mxu0 0.0
        %2767 = vmatprep.subr.mxu0 0.0
        %2768 = vmatpush2.msra.mxu0 0.0
        %2769 = vmatprep.subr.mxu0 0.0
        %2770 = vmatpush2.msra.mxu0 0.0
        %2771 = vmatprep.mubr.f32.mxu0 0.0
        %2772 = vmatmul.mubr.f32.gmra.mxu0 %v1004
        %v2773 = vpop.f32.mrf.mxu0
        %v2774 = vadd.f32 0.0, %v2773
        %v2775 = vpop.f32.mrf.mxu0
        %2776 = vdwg.mxu0
        %v2777 = vmul.f32 %v2634, 0.26601171
        %v2778 = vmul.f32 %v2704, 0.26601171
        %v2779 = vmul.f32 %v2774, 0.26601171
        %2783 = vrot.lane.b32.xlu0 %v2634, 127
        %v2784 = vpop.permute.xlu0 %2783
        %2785 = vrot.lane.b32.xlu0 %v2704, 127
        %v2786 = vpop.permute.xlu0 %2785
        %2787 = vrot.lane.b32.xlu0 %v2774, 127
        %v2788 = vpop.permute.xlu0 %2787
        %v2792 = vsel %vm1231, %v2784, 0.0
        %v2793 = vsel %vm1231, %v2786, 0.0
        %v2794 = vsel %vm1231, %v2788, 0.0
        %2795 = vrot.lane.b32.xlu0 %v2634, 1
        %v2796 = vpop.permute.xlu0 %2795
        %2797 = vrot.lane.b32.xlu0 %v2704, 1
        %v2798 = vpop.permute.xlu0 %2797
        %2799 = vrot.lane.b32.xlu0 %v2774, 1
        %v2800 = vpop.permute.xlu0 %2799
        %v2804 = vsel %vm1244, 0.0, %v2796
        %v2805 = vsel %vm1244, 0.0, %v2798
        %v2806 = vsel %vm1244, 0.0, %v2800
        %v2807 = vadd.f32 %v2792, %v2804
        %v2808 = vadd.f32 %v2793, %v2805
        %v2809 = vadd.f32 %v2794, %v2806
        %v2810 = vmul.f32 %v2807, 0.21300554
        %v2811 = vmul.f32 %v2808, 0.21300554
        %v2812 = vmul.f32 %v2809, 0.21300554
        %v2813 = vadd.f32 %v2777, %v2810
        %v2814 = vadd.f32 %v2778, %v2811
        %v2815 = vadd.f32 %v2779, %v2812
        %2816 = vrot.lane.b32.xlu0 %v2634, 126
        %v2817 = vpop.permute.xlu0 %2816
        %2818 = vrot.lane.b32.xlu0 %v2704, 126
        %v2819 = vpop.permute.xlu0 %2818
        %2820 = vrot.lane.b32.xlu0 %v2774, 126
        %v2821 = vpop.permute.xlu0 %2820
        %v2825 = vsel %vm1266, %v2817, 0.0
        %v2826 = vsel %vm1266, %v2819, 0.0
        %v2827 = vsel %vm1266, %v2821, 0.0
        %2828 = vrot.lane.b32.xlu0 %v2634, 2
        %v2829 = vpop.permute.xlu0 %2828
        %2830 = vrot.lane.b32.xlu0 %v2704, 2
        %v2831 = vpop.permute.xlu0 %2830
        %2832 = vrot.lane.b32.xlu0 %v2774, 2
        %v2833 = vpop.permute.xlu0 %2832
        %v2837 = vsel %vm1279, 0.0, %v2829
        %v2838 = vsel %vm1279, 0.0, %v2831
        %v2839 = vsel %vm1279, 0.0, %v2833
        %v2840 = vadd.f32 %v2825, %v2837
        %v2841 = vadd.f32 %v2826, %v2838
        %v2842 = vadd.f32 %v2827, %v2839
        %v2843 = vmul.f32 %v2840, 0.10936069
        %v2844 = vmul.f32 %v2841, 0.10936069
        %v2845 = vmul.f32 %v2842, 0.10936069
        %v2846 = vadd.f32 %v2813, %v2843
        %v2847 = vadd.f32 %v2814, %v2844
        %v2848 = vadd.f32 %v2815, %v2845
        %2849 = vrot.lane.b32.xlu0 %v2634, 125
        %v2850 = vpop.permute.xlu0 %2849
        %2851 = vrot.lane.b32.xlu0 %v2704, 125
        %v2852 = vpop.permute.xlu0 %2851
        %2853 = vrot.lane.b32.xlu0 %v2774, 125
        %v2854 = vpop.permute.xlu0 %2853
        %v2858 = vsel %vm1301, %v2850, 0.0
        %v2859 = vsel %vm1301, %v2852, 0.0
        %v2860 = vsel %vm1301, %v2854, 0.0
        %2861 = vrot.lane.b32.xlu0 %v2634, 3
        %v2862 = vpop.permute.xlu0 %2861
        %2863 = vrot.lane.b32.xlu0 %v2704, 3
        %v2864 = vpop.permute.xlu0 %2863
        %2865 = vrot.lane.b32.xlu0 %v2774, 3
        %v2866 = vpop.permute.xlu0 %2865
        %v2870 = vsel %vm1314, 0.0, %v2862
        %v2871 = vsel %vm1314, 0.0, %v2864
        %v2872 = vsel %vm1314, 0.0, %v2866
        %v2873 = vadd.f32 %v2858, %v2870
        %v2874 = vadd.f32 %v2859, %v2871
        %v2875 = vadd.f32 %v2860, %v2872
        %v2876 = vmul.f32 %v2873, 0.036000773
        %v2877 = vmul.f32 %v2874, 0.036000773
        %v2878 = vmul.f32 %v2875, 0.036000773
        %v2879 = vadd.f32 %v2846, %v2876
        %v2880 = vadd.f32 %v2847, %v2877
        %v2881 = vadd.f32 %v2848, %v2878
        %2882 = vrot.lane.b32.xlu0 %v2634, 124
        %v2883 = vpop.permute.xlu0 %2882
        %2884 = vrot.lane.b32.xlu0 %v2704, 124
        %v2885 = vpop.permute.xlu0 %2884
        %2886 = vrot.lane.b32.xlu0 %v2774, 124
        %v2887 = vpop.permute.xlu0 %2886
        %v2891 = vsel %vm1336, %v2883, 0.0
        %v2892 = vsel %vm1336, %v2885, 0.0
        %v2893 = vsel %vm1336, %v2887, 0.0
        %2894 = vrot.lane.b32.xlu0 %v2634, 4
        %v2895 = vpop.permute.xlu0 %2894
        %2896 = vrot.lane.b32.xlu0 %v2704, 4
        %v2897 = vpop.permute.xlu0 %2896
        %2898 = vrot.lane.b32.xlu0 %v2774, 4
        %v2899 = vpop.permute.xlu0 %2898
        %v2903 = vsel %vm1349, 0.0, %v2895
        %v2904 = vsel %vm1349, 0.0, %v2897
        %v2905 = vsel %vm1349, 0.0, %v2899
        %v2906 = vadd.f32 %v2891, %v2903
        %v2907 = vadd.f32 %v2892, %v2904
        %v2908 = vadd.f32 %v2893, %v2905
        %v2909 = vmul.f32 %v2906, 0.007598758
        %v2910 = vmul.f32 %v2907, 0.007598758
        %v2911 = vmul.f32 %v2908, 0.007598758
        %v2912 = vadd.f32 %v2879, %v2909
        %v2913 = vadd.f32 %v2880, %v2910
        %v2914 = vadd.f32 %v2881, %v2911
        %2915 = vrot.lane.b32.xlu0 %v2634, 123
        %v2916 = vpop.permute.xlu0 %2915
        %2917 = vrot.lane.b32.xlu0 %v2704, 123
        %v2918 = vpop.permute.xlu0 %2917
        %2919 = vrot.lane.b32.xlu0 %v2774, 123
        %v2920 = vpop.permute.xlu0 %2919
        %v2924 = vsel %vm1371, %v2916, 0.0
        %v2925 = vsel %vm1371, %v2918, 0.0
        %v2926 = vsel %vm1371, %v2920, 0.0
        %2927 = vrot.lane.b32.xlu0 %v2634, 5
        %v2928 = vpop.permute.xlu0 %2927
        %2929 = vrot.lane.b32.xlu0 %v2704, 5
        %v2930 = vpop.permute.xlu0 %2929
        %2931 = vrot.lane.b32.xlu0 %v2774, 5
        %v2932 = vpop.permute.xlu0 %2931
        %v2936 = vsel %vm1384, 0.0, %v2928
        %v2937 = vsel %vm1384, 0.0, %v2930
        %v2938 = vsel %vm1384, 0.0, %v2932
        %v2939 = vadd.f32 %v2924, %v2936
        %v2940 = vadd.f32 %v2925, %v2937
        %v2941 = vadd.f32 %v2926, %v2938
        %v2942 = vmul.f32 %v2939, 0.0010283801
        %v2943 = vmul.f32 %v2940, 0.0010283801
        %v2944 = vmul.f32 %v2941, 0.0010283801
        %v2945 = vadd.f32 %v2912, %v2942
        %v2946 = vadd.f32 %v2913, %v2943
        %v2947 = vadd.f32 %v2914, %v2944
        %v2948 = vmul.f32 %v1394, %v1394
        %v2949 = vmul.f32 %v1395, %v1395
        %v2950 = vmul.f32 %v1396, %v1396
        %v2951 = vmul.f32 %v1775, %v1775
        %v2952 = vmul.f32 %v1776, %v1776
        %v2953 = vmul.f32 %v1777, %v1777
        %v2954 = vmul.f32 %v1394, %v1775
        %v2955 = vmul.f32 %v1395, %v1776
        %v2956 = vmul.f32 %v1396, %v1777
        %v2957 = vsub.f32 %v2165, %v2948
        %v2958 = vsub.f32 %v2166, %v2949
        %v2959 = vsub.f32 %v2167, %v2950
        %v2960 = vsub.f32 %v2555, %v2951
        %v2961 = vsub.f32 %v2556, %v2952
        %v2962 = vsub.f32 %v2557, %v2953
        %v2963 = vsub.f32 %v2945, %v2954
        %v2964 = vsub.f32 %v2946, %v2955
        %v2965 = vsub.f32 %v2947, %v2956
        %v2966 = vmul.f32 %v2954, 2.0
        %v2967 = vmul.f32 %v2955, 2.0
        %v2968 = vmul.f32 %v2956, 2.0
        %v2969 = vadd.f32 %v2966, 0.0001
        %v2970 = vadd.f32 %v2967, 0.0001
        %v2971 = vadd.f32 %v2968, 0.0001
        %v2972 = vmul.f32 %v2963, 2.0
        %v2973 = vmul.f32 %v2964, 2.0
        %v2974 = vmul.f32 %v2965, 2.0
        %v2975 = vadd.f32 %v2972, 0.0009
        %v2976 = vadd.f32 %v2973, 0.0009
        %v2977 = vadd.f32 %v2974, 0.0009
        %v2978 = vmul.f32 %v2969, %v2975
        %v2979 = vmul.f32 %v2970, %v2976
        %v2980 = vmul.f32 %v2971, %v2977
        %v2981 = vadd.f32 %v2948, %v2951
        %v2982 = vadd.f32 %v2949, %v2952
        %v2983 = vadd.f32 %v2950, %v2953
        %v2984 = vadd.f32 %v2981, 0.0001
        %v2985 = vadd.f32 %v2982, 0.0001
        %v2986 = vadd.f32 %v2983, 0.0001
        %v2987 = vadd.f32 %v2957, %v2960
        %v2988 = vadd.f32 %v2958, %v2961
        %v2989 = vadd.f32 %v2959, %v2962
        %v2990 = vadd.f32 %v2987, 0.0009
        %v2991 = vadd.f32 %v2988, 0.0009
        %v2992 = vadd.f32 %v2989, 0.0009
        %v2993 = vmul.f32 %v2984, %v2990
        %v2994 = vmul.f32 %v2985, %v2991
        %v2995 = vmul.f32 %v2986, %v2992
        %v2996 = vrcp.pop %v2993
        %v2997 = vrcp.pop %v2994
        %v2998 = vrcp.pop %v2995
        %v2999 = vmul.f32 %v2978, %v2996
        %v3000 = vmul.f32 %v2979, %v2997
        %v3001 = vmul.f32 %v2980, %v2998
        %vm3002 = vcmask 130048
        %v3003 = vsel %vm3002, %v2999, 0.0
        %v3004 = vsel %vm3002, %v3000, 0.0
        %v3005 = vadd.f32 %v3003, %v3004
        %v3006 = vsel %vm3002, %v3001, 0.0
        %v3007 = vadd.f32 %v3005, %v3006
        %3008 = vadd.xlane.f32.xlu0 %v3007
        %v3009 = vpop.xlane.xlu0 %3008
        %v3010 = vrot.slane %v3009, 4
        %v3011 = vadd.f32 %v3009, %v3010
        %v3012 = vrot.slane %v3011, 2
        %v3013 = vadd.f32 %v3011, %v3012
        %v3014 = vrot.slane %v3013, 1
        %v3015 = vadd.f32 %v3013, %v3014
        %s3016 = vtos %v3015
        %v3017 = vsub.f32 %v963, %v966
        %v3018 = vsub.f32 %v964, %v967
        %v3019 = vsub.f32 %v965, %v968
        %v3020 = vand.u32 2147483647, %v3017
        %v3021 = vand.u32 2147483647, %v3018
        %v3022 = vand.u32 2147483647, %v3019
        %v3023 = vsel %vm3002, %v3020, 0.0
        %v3024 = vsel %vm3002, %v3021, 0.0
        %v3025 = vadd.f32 %v3023, %v3024
        %v3026 = vsel %vm3002, %v3022, 0.0
        %v3027 = vadd.f32 %v3025, %v3026
        %3028 = vadd.xlane.f32.xlu0 %v3027
        %v3029 = vpop.xlane.xlu0 %3028
        %v3030 = vrot.slane %v3029, 4
        %v3031 = vadd.f32 %v3029, %v3030
        %v3032 = vrot.slane %v3031, 2
        %v3033 = vadd.f32 %v3031, %v3032
        %v3034 = vrot.slane %v3033, 1
        %v3035 = vadd.f32 %v3033, %v3034
        %s3036 = vtos %v3035
        %v3037 = vld [vmem:[%s854] sm:$0xff]
        %v3038 = vld [vmem:[%s854 + $0x8] sm:$0xff]
        %v3039 = vld [vmem:[%s854 + $0x10] sm:$0xff]
        %v3040 = vld [vmem:[%s861] sm:$0xff]
        %v3041 = vld [vmem:[%s861 + $0x8] sm:$0xff]
        %v3042 = vld [vmem:[%s861 + $0x10] sm:$0xff]
        %v3043 = vmul.f32 %v3037, %v3040
        %v3044 = vmul.f32 %v3038, %v3041
        %v3045 = vmul.f32 %v3039, %v3042
        %v3046 = vsel %vm3002, %v3043, 0.0
        %v3047 = vsel %vm3002, %v3044, 0.0
        %v3048 = vadd.f32 %v3046, %v3047
        %v3049 = vsel %vm3002, %v3045, 0.0
        %v3050 = vadd.f32 %v3048, %v3049
        %3051 = vadd.xlane.f32.xlu0 %v3050
        %v3052 = vpop.xlane.xlu0 %3051
        %v3053 = vrot.slane %v3052, 4
        %v3054 = vadd.f32 %v3052, %v3053
        %v3055 = vrot.slane %v3054, 2
        %v3056 = vadd.f32 %v3054, %v3055
        %v3057 = vrot.slane %v3056, 1
        %v3058 = vadd.f32 %v3056, %v3057
        %s3059 = vtos %v3058
        %v3060 = vld [vmem:[%s951] sm:$0xff]
        %v3061 = vsel %vm3002, %v3060, 0.0
        %3062 = vadd.xlane.f32.xlu0 %v3061
        %v3063 = vpop.xlane.xlu0 %3062
        %v3064 = vrot.slane %v3063, 4
        %v3065 = vadd.f32 %v3063, %v3064
        %v3066 = vrot.slane %v3065, 2
        %v3067 = vadd.f32 %v3065, %v3066
        %v3068 = vrot.slane %v3067, 1
        %v3069 = vadd.f32 %v3067, %v3068
        %s3070 = vtos %v3069
        %v3071 = vlaneseq
        %v3072 = vand.u32 %v3071, 127
        %vm3073 = vcmp.eq.s32.totalorder %v3072, 0
        %v3074 = vstv %s3036
        %v3075 = vsel %vm3073, %v3074, 0.0
        %vm3076 = vcmp.eq.s32.totalorder %v3072, 1
        %v3077 = vstv %s3016
        %v3078 = vsel %vm3076, %v3077, 0.0
        %v3079 = vadd.f32 %v3075, %v3078
        %vm3080 = vcmp.eq.s32.totalorder %v3072, 2
        %v3081 = vstv %s3059
        %v3082 = vsel %vm3080, %v3081, 0.0
        %v3083 = vadd.f32 %v3079, %v3082
        %vm3084 = vcmp.eq.s32.totalorder %v3072, 3
        %v3085 = vstv %s3070
        %v3086 = vsel %vm3084, %v3085, 0.0
        %v3087 = vadd.f32 %v3083, %v3086
        %v3088 = vld [vmem:[#allocation2] sm:$0x1]
        %v3089 = vadd.f32 %v3088, %v3087
        %vm3090 = vcmask 57344
        %3091 = vst.msk [vmem:[#allocation2] sm:$0x1] %vm3090, %v3089
        // Predicated region
        $region369: #{loss_stats_pallas.1} parent=331 // pred_check
          %p3092 = pneg %p957
        $region370: #{loss_stats_pallas.1} parent=331 // pred_check_branch
          %3094 = sbr.rel (%p3092) target = $region372
        $region371: #{loss_stats_pallas.1} parent=331 // pred_region
          %v3095 = vld [vmem:[#allocation2] sm:$0x1]
          %3096 = vst.msk [vmem:[%s955] sm:$0x1] %vm3090, %v3095
        $region372: #{loss_stats_pallas.1} parent=331 // pred_fallthru
          _
        %p3097 = scmp.lt.s32.totalorder %s25, 1
        %s3098 = scalar_select %p3097, %s25, 1
        %s3099 = scalar_lea.vmem %s10, %s3098
        // Predicated region
        $region373: #{loss_stats_pallas.1} parent=331 // pred_check
          %p3100 = pneg %p348
        $region374: #{loss_stats_pallas.1} parent=331 // pred_check_branch
          %3102 = sbr.rel (%p3100) target = $region376
        $region375: #{loss_stats_pallas.1} parent=331 // pred_region
          _
        $region376: #{loss_stats_pallas.1} parent=331 // pred_fallthru
          _
      $region332: #{loss_stats_pallas.1} parent=5 // pred_fallthru
        _
      %p3103 = scmp.le.s32.totalorder 2, %s16
      // Predicated region
      $region377: #{loss_stats_pallas.1} parent=5 // pred_check
        %p3104 = pneg %p3103
      $region378: #{loss_stats_pallas.1} parent=5 // pred_check_branch
        %3106 = sbr.rel (%p3104) target = $region380
      $region379: #{loss_stats_pallas.1} parent=5 // pred_region
        %s3107 = ssub.s32 %s16, 2
        // Predicated region
        $region381: #{loss_stats_pallas.1} parent=379 // pred_check
          %p3108 = pneg %p354
        $region382: #{loss_stats_pallas.1} parent=379 // pred_check_branch
          %3110 = sbr.rel (%p3108) target = $region384
        $region383: #{loss_stats_pallas.1} parent=379 // pred_region
          %p3111 = scmp.lt.s32.totalorder %s27, 1
          %s3112 = scalar_select %p3111, %s27, 1
          %s3113 = scalar_lea.vmem %s10, %s3112
        $region384: #{loss_stats_pallas.1} parent=379 // pred_fallthru
          _
      $region380: #{loss_stats_pallas.1} parent=5 // pred_fallthru
        _
    $region6: #{loss_stats_pallas.1} parent=1 // loop_footer
      %s20 = sadd.s32 1, %s16
    $region7: #{loss_stats_pallas.1} parent=1 // loop_footer_branch
      %15 = sbr.rel target = $region3
    $region8: #{loss_stats_pallas.1} parent=1 // loop_exit
      _

</llo_original>
